<compile_context>
chip_gen: v6e
topology: v6e:2x2x1
jax: 0.10.0
libtpu: 0.0.40
codegen_flags: <defaults>
</compile_context>

<pallas_src>
import functools
import math

import jax
import jax.numpy as jnp
from jax.experimental import pallas as pl
from jax.experimental.pallas import tpu as pltpu


LN_EPS = 1e-6  # matches nn.LayerNorm(..., eps=1e-6) in the reference module


# ----------------------------- shared helpers --------------------------------
def _silu(x):
    return x * jax.nn.sigmoid(x)


def _layernorm(x, w, b, eps=LN_EPS):
    mu = jnp.mean(x, axis=-1, keepdims=True)
    var = jnp.mean(jnp.square(x - mu), axis=-1, keepdims=True)
    return (x - mu) * jax.lax.rsqrt(var + eps) * w + b


# ------------------------------ fused kernel ---------------------------------
def refiner_kernel(x_ref, c_ref, mrow_ref, mcol_ref,
                   win_ref, bin_ref,
                   ln1w_ref, ln1b_ref, qkvw_ref, qkvb_ref,
                   projw_ref, projb_ref, ln2w_ref, ln2b_ref,
                   fc1w_ref, fc1b_ref, fc2w_ref, fc2b_ref,
                   adaw_ref, adab_ref,
                   out_ref,
                   x_state, bias_s, q_s, k_s, v_s, attn_s,
                   *, heads):
    # grid = (depth, B); batch is the inner axis so per-depth weight blocks
    # keep a constant index across the inner sweep (fetched once per depth).
    d_idx = pl.program_id(0)
    b_idx = pl.program_id(1)

    L, C = out_ref.shape[1], out_ref.shape[2]
    D = C // heads
    scale = 1.0 / math.sqrt(D)

    # ---- depth == 0 (once per batch): fused input_embedder + bias build ----
    @pl.when(d_idx == 0)
    def _():
        xin = x_ref[0].astype(jnp.bfloat16)                         # (L, Cin)
        x_state[b_idx] = (jnp.dot(xin, win_ref[...],
                                  preferred_element_type=jnp.float32)
                          + bin_ref[...])
        # additive attention bias built on the VPU from the (L,) mask;
        # depth-invariant, so cache it in VMEM scratch for the whole sweep.
        mrow = mrow_ref[0]                                          # (1, L)
        mcol = mcol_ref[0]                                          # (L, 1)
        key_idx = jax.lax.broadcasted_iota(jnp.int32, (1, L), 1)
        # attendable[q, k] = (mask[q] & mask[k]) | (k == 0)   (torch semantics)
        attendable = ((mcol > 0.5) & (mrow > 0.5)) | (key_idx == 0)  # (L, L)
        bias_s[b_idx] = jnp.where(attendable, 0.0, -1e30).astype(jnp.float32)

    x = x_state[b_idx]                                              # (L, C) f32
    bias = bias_s[b_idx]                                            # (L, L) f32
    c = c_ref[0]                                                    # (1, C) f32

    # ---- adaLN_modulation: SiLU -> Linear(C, 2C) -> (gate_msa, gate_mlp) ----
    gates = (jnp.dot(_silu(c).astype(jnp.bfloat16), adaw_ref[0],
                     preferred_element_type=jnp.float32) + adab_ref[0])
    gate_msa = gates[:, :C]
    gate_mlp = gates[:, C:]

    # ---- self-attention branch ----
    nx = _layernorm(x, ln1w_ref[0], ln1b_ref[0]).astype(jnp.bfloat16)
    # q/k/v as three separate C-wide matmuls: only one (L, C) f32 result is
    # live at a time (vs. a full (L, 3C) f32 intermediate).  The per-head
    # scatter below assumes head_dim D is an aligned lane group (D == 128 at
    # real dims); for D < 128 the slices become masked stores (demo only).
    for part, dst in ((0, q_s), (1, k_s), (2, v_s)):
        res = (jnp.dot(nx, qkvw_ref[0, :, part * C:(part + 1) * C],
                       preferred_element_type=jnp.float32)
               + qkvb_ref[0, :, part * C:(part + 1) * C])           # (L, C) f32
        for h in range(heads):
            dst[h] = res[:, h * D:(h + 1) * D].astype(jnp.bfloat16)

    s = (jnp.einsum('hqd,hkd->hqk', q_s[...], k_s[...],
                    preferred_element_type=jnp.float32) * scale
         + bias[None])                                              # (H, L, L)
    m = jnp.max(s, axis=-1, keepdims=True)
    p = jnp.exp(s - m)
    denom = jnp.sum(p, axis=-1, keepdims=True)
    p = (p * pl.reciprocal(denom, approx=True)).astype(jnp.bfloat16)
    o = jnp.einsum('hqk,hkd->hqd', p, v_s[...],
                   preferred_element_type=jnp.float32)              # (H, L, D)
    for h in range(heads):
        attn_s[:, h * D:(h + 1) * D] = o[h].astype(jnp.bfloat16)

    proj = (jnp.dot(attn_s[...], projw_ref[0],
                    preferred_element_type=jnp.float32) + projb_ref[0])
    x = x + proj * gate_msa                                         # apply_gate

    # ---- MLP branch ----
    nx2 = _layernorm(x, ln2w_ref[0], ln2b_ref[0]).astype(jnp.bfloat16)
    h1 = _silu(jnp.dot(nx2, fc1w_ref[0],
                       preferred_element_type=jnp.float32)
               + fc1b_ref[0]).astype(jnp.bfloat16)                  # bf16 ASAP
    mlp = (jnp.dot(h1, fc2w_ref[0],
                   preferred_element_type=jnp.float32) + fc2b_ref[0])
    x = x + mlp * gate_mlp                                          # apply_gate

    x_state[b_idx] = x
    # The output block index follows the inner batch axis, so the block is
    # written back every (d, b) step; always write the live activation so the
    # buffer holds defined data (the last depth's write is the final result).
    out_ref[0] = x


# -------------------------------- wrapper -------------------------------------
_WKEYS = ("ln1w", "ln1b", "qkvw", "qkvb", "projw", "projb",
          "ln2w", "ln2b", "fc1w", "fc1b", "fc2w", "fc2b",
          "adaw", "adab")


def _bytes(shape, dtype, bufs=1):
    return bufs * math.prod(shape) * jnp.dtype(dtype).itemsize


def _vmem_limit_bytes(est):
    """Generation-aware scoped-VMEM limit (leave ~22% headroom for Mosaic)."""
    try:
        cap = int(pltpu.get_tpu_info().vmem_capacity_bytes)
    except Exception:
        cap = 128 * 1024 * 1024
    budget = int(cap * 0.78)          # ~100 MiB on v5e/v6e, ~50 MiB on v7x
    return int(min(budget, max(32 * 1024 * 1024, 2 * est)))


def run_refiner(x, c, mrow, mcol, params, blocks, heads, *, single_buffer=True):
    B, L, Cin = x.shape
    C = params["w_in"].shape[1]
    depth = blocks["qkvw"].shape[0]
    D = C // heads

    def const(arr):
        shp = arr.shape
        if single_buffer:
            # block index constant over the whole grid -> one buffer.
            return pl.BlockSpec(shp, lambda d, b, _n=len(shp): (0,) * _n,
                                pipeline_mode=pl.Buffered(1))
        return pl.BlockSpec(shp, lambda d, b, _n=len(shp): (0,) * _n)

    def per_batch(arr):
        shp = arr.shape
        # varies along the inner batch axis -> default double buffering.
        return pl.BlockSpec((1,) + shp[1:],
                            lambda d, b, _n=len(shp): (b,) + (0,) * (_n - 1))

    def per_depth(arr):
        shp = arr.shape
        # index depends on d only -> constant across the inner batch sweep, so
        # each depth's weights are DMA'd once per depth; double buffering lets
        # depth d+1 weight DMA overlap the last batch of depth d.
        return pl.BlockSpec((1,) + shp[1:],
                            lambda d, b, _n=len(shp): (d,) + (0,) * (_n - 1))

    in_specs = ([per_batch(x), per_batch(c), per_batch(mrow), per_batch(mcol),
                 const(params["w_in"]), const(params["b_in"])]
                + [per_depth(blocks[k]) for k in _WKEYS])
    out_specs = pl.BlockSpec((1, L, C), lambda d, b: (b, 0, 0))
    out_shape = jax.ShapeDtypeStruct((B, L, C), jnp.float32)

    scratch = [pltpu.VMEM((B, L, C), jnp.float32),          # resident activation
               pltpu.VMEM((B, L, L), jnp.float32),          # cached attn bias
               pltpu.VMEM((heads, L, D), jnp.bfloat16),     # q (head-major)
               pltpu.VMEM((heads, L, D), jnp.bfloat16),     # k
               pltpu.VMEM((heads, L, D), jnp.bfloat16),     # v
               pltpu.VMEM((L, C), jnp.bfloat16)]            # attn output

    wbufs = 1 if single_buffer else 2
    est = (2 * (_bytes((1, L, Cin), x.dtype) + _bytes((1, 1, C), jnp.float32)
                + _bytes((1, 1, L), jnp.float32) + _bytes((1, L, 1), jnp.float32))
           + _bytes(params["w_in"].shape, params["w_in"].dtype, bufs=wbufs)
           + _bytes(params["b_in"].shape, params["b_in"].dtype, bufs=wbufs)
           + sum(_bytes((1,) + blocks[k].shape[1:], blocks[k].dtype, bufs=2)
                 for k in _WKEYS)
           + _bytes((1, L, C), jnp.float32, bufs=2)          # output block
           + _bytes((B, L, C), jnp.float32)
           + _bytes((B, L, L), jnp.float32)
           + 3 * _bytes((heads, L, D), jnp.bfloat16)
           + _bytes((L, C), jnp.bfloat16))
    vmem_limit = _vmem_limit_bytes(est)

    return pl.pallas_call(
        functools.partial(refiner_kernel, heads=heads),
        grid=(depth, B),
        in_specs=in_specs,
        out_specs=out_specs,
        out_shape=out_shape,
        scratch_shapes=scratch,
        compiler_params=pltpu.CompilerParams(
            # depth carries the activation (sequential); batch is also kept
            # "arbitrary" because parallel axes must lead the grid.
            # TODO(synk): megacore split over query tiles / batch for v7x.
            dimension_semantics=("arbitrary", "arbitrary"),
            vmem_limit_bytes=vmem_limit),
    )(x, c, mrow, mcol, params["w_in"], params["b_in"],
      *[blocks[k] for k in _WKEYS])


# --------------------------- parameter construction ---------------------------
def init_params(key, in_channels, hidden, depth, mlp_ratio=4.0, freq_dim=256):
    mlp_hidden = int(hidden * mlp_ratio)
    ks = jax.random.split(key, 10)

    def lin(k, w_shape, b_shape, w_dtype=jnp.float32, scale=0.02):
        kw, kb = jax.random.split(k)
        w = (scale * jax.random.normal(kw, w_shape, jnp.float32)).astype(w_dtype)
        b = scale * jax.random.normal(kb, b_shape, jnp.float32)
        return w, b

    p = {}
    # input_embedder: weight bf16 (MXU operand in-kernel), bias f32
    p["w_in"], p["b_in"] = lin(ks[0], (in_channels, hidden), (1, hidden),
                               jnp.bfloat16)
    # tiny 1-row embedders run in plain JAX -> keep f32
    p["t1w"], p["t1b"] = lin(ks[1], (freq_dim, hidden), (hidden,))     # t_embedder.mlp[0]
    p["t2w"], p["t2b"] = lin(ks[2], (hidden, hidden), (hidden,))       # t_embedder.mlp[2]
    p["c1w"], p["c1b"] = lin(ks[3], (in_channels, hidden), (hidden,))  # c_embedder.linear_1
    p["c2w"], p["c2b"] = lin(ks[4], (hidden, hidden), (hidden,))       # c_embedder.linear_2

    blk = {}
    blk["ln1w"] = jnp.ones((depth, 1, hidden), jnp.float32)
    blk["ln1b"] = jnp.zeros((depth, 1, hidden), jnp.float32)
    blk["qkvw"], blk["qkvb"] = lin(ks[5], (depth, hidden, 3 * hidden),
                                   (depth, 1, 3 * hidden), jnp.bfloat16)
    blk["projw"], blk["projb"] = lin(ks[6], (depth, hidden, hidden),
                                     (depth, 1, hidden), jnp.bfloat16)
    blk["ln2w"] = jnp.ones((depth, 1, hidden), jnp.float32)
    blk["ln2b"] = jnp.zeros((depth, 1, hidden), jnp.float32)
    blk["fc1w"], blk["fc1b"] = lin(ks[7], (depth, hidden, mlp_hidden),
                                   (depth, 1, mlp_hidden), jnp.bfloat16)
    blk["fc2w"], blk["fc2b"] = lin(ks[8], (depth, mlp_hidden, hidden),
                                   (depth, 1, hidden), jnp.bfloat16)
    # NOTE: torch zero-inits adaLN_modulation (blocks would be the identity);
    # small random init so the gated branches exercise real compute.
    blk["adaw"], blk["adab"] = lin(ks[9], (depth, hidden, 2 * hidden),
                                   (depth, 1, 2 * hidden), jnp.bfloat16)
    return p, blk


# ------------------------------- full forward ---------------------------------
def single_token_refiner_forward(x, t, mask, params, blocks, heads,
                                 freq_dim=256, *, single_buffer=True):
    B, L, Cin = x.shape

    # sinusoidal timestep features + TimestepEmbedder MLP (M=1 rows -> plain XLA)
    half = freq_dim // 2
    freqs = jnp.exp(-math.log(10000.0) *
                    jnp.arange(half, dtype=jnp.float32) / half)
    args = t.astype(jnp.float32)[:, None] * freqs[None, :]
    t_freq = jnp.concatenate([jnp.cos(args), jnp.sin(args)], axis=-1)   # (B, 256)
    t_emb = (_silu(t_freq @ params["t1w"] + params["t1b"])
             @ params["t2w"] + params["t2b"])                           # (B, C)

    # context-aware representation + TextProjection (M=1 rows -> plain XLA)
    if mask is None:
        mask_f = jnp.ones((B, L), jnp.float32)
        ctx = jnp.mean(x, axis=1)
    else:
        mask_f = mask.astype(jnp.float32)
        # clamp the denominator so an all-zero mask row cannot produce NaN
        denom = jnp.maximum(jnp.sum(mask_f, axis=1, keepdims=True), 1e-6)
        ctx = jnp.sum(x * mask_f[:, :, None], axis=1) / denom
    c_emb = (_silu(ctx @ params["c1w"] + params["c1b"])
             @ params["c2w"] + params["c2b"])                           # (B, C)
    c = (t_emb + c_emb)[:, None, :].astype(jnp.float32)                 # (B, 1, C)

    # (B, L) mask enters the kernel as a row and a column vector; the (L, L)
    # additive bias is built on the VPU in-kernel once per batch (no L^2 HBM
    # traffic, no per-depth recompute).
    mrow = mask_f[:, None, :]                                           # (B, 1, L)
    mcol = mask_f[:, :, None]                                           # (B, L, 1)
    return run_refiner(x, c, mrow, mcol, params, blocks, heads,
                       single_buffer=single_buffer)


# ---------------------------------- demo ---------------------------------------
if __name__ == "__main__":
    B, L, Cin, C, heads, depth = 2, 8, 16, 32, 4, 2
    key = jax.random.PRNGKey(0)
    k_x, k_p = jax.random.split(key)

    x = jax.random.normal(k_x, (B, L, Cin), jnp.float32)
    t = jnp.array([3, 17], dtype=jnp.int32)
    mask = jnp.array([[1] * L, [1] * (L - 2) + [0] * 2], dtype=jnp.int32)

    params, blocks = init_params(k_p, Cin, C, depth)

    try:
        out = jax.block_until_ready(
            single_token_refiner_forward(x, t, mask, params, blocks, heads))
    except Exception:
        # Fallback: if the installed Pallas build rejects single-buffered
        # (pl.Buffered(1)) BlockSpecs, retry with default double-buffering.
        out = jax.block_until_ready(
            single_token_refiner_forward(x, t, mask, params, blocks, heads,
                                         single_buffer=False))

    assert out.shape == (B, L, C), out.shape
    assert bool(jnp.all(jnp.isfinite(out)))
    print("KERNEL_OK")
</pallas_src>

<mosaic_0001>
module attributes {stable_mosaic.version = 11 : i64} {
  func.func @refiner_kernel(%arg0: i32, %arg1: i32, %arg2: memref<1x8x16xf32, #tpu.memory_space<vmem>>, %arg3: memref<1x1x32xf32, #tpu.memory_space<vmem>>, %arg4: memref<1x1x8xf32, #tpu.memory_space<vmem>>, %arg5: memref<1x8x1xf32, #tpu.memory_space<vmem>>, %arg6: memref<16x32xbf16, #tpu.memory_space<vmem>>, %arg7: memref<1x32xf32, #tpu.memory_space<vmem>>, %arg8: memref<1x1x32xf32, #tpu.memory_space<vmem>>, %arg9: memref<1x1x32xf32, #tpu.memory_space<vmem>>, %arg10: memref<1x32x96xbf16, #tpu.memory_space<vmem>>, %arg11: memref<1x1x96xf32, #tpu.memory_space<vmem>>, %arg12: memref<1x32x32xbf16, #tpu.memory_space<vmem>>, %arg13: memref<1x1x32xf32, #tpu.memory_space<vmem>>, %arg14: memref<1x1x32xf32, #tpu.memory_space<vmem>>, %arg15: memref<1x1x32xf32, #tpu.memory_space<vmem>>, %arg16: memref<1x32x128xbf16, #tpu.memory_space<vmem>>, %arg17: memref<1x1x128xf32, #tpu.memory_space<vmem>>, %arg18: memref<1x128x32xbf16, #tpu.memory_space<vmem>>, %arg19: memref<1x1x32xf32, #tpu.memory_space<vmem>>, %arg20: memref<1x32x64xbf16, #tpu.memory_space<vmem>>, %arg21: memref<1x1x64xf32, #tpu.memory_space<vmem>>, %arg22: memref<1x8x32xf32, #tpu.memory_space<vmem>>, %arg23: memref<2x8x32xf32, #tpu.memory_space<vmem>>, %arg24: memref<2x8x8xf32, #tpu.memory_space<vmem>>, %arg25: memref<4x8x8xbf16, #tpu.memory_space<vmem>>, %arg26: memref<4x8x8xbf16, #tpu.memory_space<vmem>>, %arg27: memref<4x8x8xbf16, #tpu.memory_space<vmem>>, %arg28: memref<8x32xbf16, #tpu.memory_space<vmem>>) attributes {dimension_semantics = [#tpu.dimension_semantics<arbitrary>, #tpu.dimension_semantics<arbitrary>], iteration_bounds = array<i64: 2, 2>, scalar_prefetch = 0 : i64, scratch_operands = 6 : i64, tpu.core_type = #tpu.core_type<tc>, window_params = [{transform_indices = @transform_0, window_bounds = array<i64: 1, 8, 16>}, {transform_indices = @transform_1, window_bounds = array<i64: 1, 1, 32>}, {transform_indices = @transform_2, window_bounds = array<i64: 1, 1, 8>}, {transform_indices = @transform_3, window_bounds = array<i64: 1, 8, 1>}, {pipeline_mode = #tpu.pipeline_mode<synchronous>, transform_indices = @transform_4, window_bounds = array<i64: 16, 32>}, {pipeline_mode = #tpu.pipeline_mode<synchronous>, transform_indices = @transform_5, window_bounds = array<i64: 1, 32>}, {transform_indices = @transform_6, window_bounds = array<i64: 1, 1, 32>}, {transform_indices = @transform_7, window_bounds = array<i64: 1, 1, 32>}, {transform_indices = @transform_8, window_bounds = array<i64: 1, 32, 96>}, {transform_indices = @transform_9, window_bounds = array<i64: 1, 1, 96>}, {transform_indices = @transform_10, window_bounds = array<i64: 1, 32, 32>}, {transform_indices = @transform_11, window_bounds = array<i64: 1, 1, 32>}, {transform_indices = @transform_12, window_bounds = array<i64: 1, 1, 32>}, {transform_indices = @transform_13, window_bounds = array<i64: 1, 1, 32>}, {transform_indices = @transform_14, window_bounds = array<i64: 1, 32, 128>}, {transform_indices = @transform_15, window_bounds = array<i64: 1, 1, 128>}, {transform_indices = @transform_16, window_bounds = array<i64: 1, 128, 32>}, {transform_indices = @transform_17, window_bounds = array<i64: 1, 1, 32>}, {transform_indices = @transform_18, window_bounds = array<i64: 1, 32, 64>}, {transform_indices = @transform_19, window_bounds = array<i64: 1, 1, 64>}, {transform_indices = @transform_20, window_bounds = array<i64: 1, 8, 32>}]} {
    %c0_i32 = arith.constant 0 : i32
    %0 = arith.cmpi eq, %arg0, %c0_i32 : i32
    %1 = arith.extui %0 : i1 to i32
    %c0_i32_0 = arith.constant 0 : i32
    %2 = arith.cmpi ne, %1, %c0_i32_0 : i32
    scf.if %2 {
      %c0_136 = arith.constant 0 : index
      %c0_137 = arith.constant 0 : index
      %c0_138 = arith.constant 0 : index
      %240 = vector.load %arg2[%c0_136, %c0_137, %c0_138] : memref<1x8x16xf32, #tpu.memory_space<vmem>>, vector<1x8x16xf32>
      %241 = vector.shape_cast %240 : vector<1x8x16xf32> to vector<8x16xf32>
      %242 = arith.truncf %241 : vector<8x16xf32> to vector<8x16xbf16>
      %c0_139 = arith.constant 0 : index
      %c0_140 = arith.constant 0 : index
      %243 = vector.load %arg6[%c0_139, %c0_140] : memref<16x32xbf16, #tpu.memory_space<vmem>>, vector<16x32xbf16>
      %cst_141 = arith.constant dense<0.000000e+00> : vector<8x32xf32>
      %244 = tpu.matmul %242, %243, %cst_141 {dimension_numbers = #tpu.dot_dimension_numbers<[1], [0], [0], [1], [0, 0, 1, 1], [], []>} : vector<8x16xbf16>, vector<16x32xbf16>, vector<8x32xf32> -> vector<8x32xf32>
      %c0_142 = arith.constant 0 : index
      %c0_143 = arith.constant 0 : index
      %245 = vector.load %arg7[%c0_142, %c0_143] : memref<1x32xf32, #tpu.memory_space<vmem>>, vector<1x32xf32>
      %246 = vector.broadcast %245 : vector<1x32xf32> to vector<8x32xf32>
      %247 = arith.addf %244, %246 : vector<8x32xf32>
      %248 = arith.index_cast %arg1 : i32 to index
      %c0_144 = arith.constant 0 : index
      %c0_145 = arith.constant 0 : index
      %249 = vector.load %arg23[%248, %c0_144, %c0_145] : memref<2x8x32xf32, #tpu.memory_space<vmem>>, vector<1x8x32xf32>
      %250 = vector.shape_cast %249 : vector<1x8x32xf32> to vector<8x32xf32>
      %251 = vector.shape_cast %247 : vector<8x32xf32> to vector<1x8x32xf32>
      tpu.vector_store %arg23[%248, %c0_144, %c0_145], %251 {strides = array<i32>} : memref<2x8x32xf32, #tpu.memory_space<vmem>>, vector<1x8x32xf32>,
      %c0_146 = arith.constant 0 : index
      %c0_147 = arith.constant 0 : index
      %c0_148 = arith.constant 0 : index
      %252 = vector.load %arg4[%c0_146, %c0_147, %c0_148] : memref<1x1x8xf32, #tpu.memory_space<vmem>>, vector<1x1x8xf32>
      %253 = vector.shape_cast %252 : vector<1x1x8xf32> to vector<1x8xf32>
      %c0_149 = arith.constant 0 : index
      %c0_150 = arith.constant 0 : index
      %c0_151 = arith.constant 0 : index
      %254 = vector.load %arg5[%c0_149, %c0_150, %c0_151] : memref<1x8x1xf32, #tpu.memory_space<vmem>>, vector<1x8x1xf32>
      %255 = vector.shape_cast %254 : vector<1x8x1xf32> to vector<8x1xf32>
      %256 = tpu.iota {dimensions = array<i32: 1>} : vector<1x8xi32>
      %cst_152 = arith.constant 5.000000e-01 : f32
      %257 = vector.broadcast %cst_152 : f32 to vector<8x1xf32>
      %258 = arith.cmpf ogt, %255, %257 : vector<8x1xf32>
      %cst_153 = arith.constant 5.000000e-01 : f32
      %259 = vector.broadcast %cst_153 : f32 to vector<1x8xf32>
      %260 = arith.cmpf ogt, %253, %259 : vector<1x8xf32>
      %261 = vector.broadcast %258 : vector<8x1xi1> to vector<8x8xi1>
      %262 = vector.broadcast %260 : vector<1x8xi1> to vector<8x8xi1>
      %263 = arith.andi %261, %262 : vector<8x8xi1>
      %c0_i32_154 = arith.constant 0 : i32
      %264 = vector.broadcast %c0_i32_154 : i32 to vector<1x8xi32>
      %265 = arith.cmpi eq, %256, %264 : vector<1x8xi32>
      %266 = vector.broadcast %265 : vector<1x8xi1> to vector<8x8xi1>
      %267 = arith.ori %263, %266 : vector<8x8xi1>
      %cst_155 = arith.constant 0.000000e+00 : f32
      %cst_156 = arith.constant -1.000000e+30 : f32
      %268 = vector.broadcast %cst_155 : f32 to vector<8x8xf32>
      %269 = vector.broadcast %cst_156 : f32 to vector<8x8xf32>
      %270 = arith.select %267, %268, %269 : vector<8x8xi1>, vector<8x8xf32>
      %271 = arith.index_cast %arg1 : i32 to index
      %c0_157 = arith.constant 0 : index
      %c0_158 = arith.constant 0 : index
      %272 = vector.load %arg24[%271, %c0_157, %c0_158] : memref<2x8x8xf32, #tpu.memory_space<vmem>>, vector<1x8x8xf32>
      %273 = vector.shape_cast %272 : vector<1x8x8xf32> to vector<8x8xf32>
      %274 = vector.shape_cast %270 : vector<8x8xf32> to vector<1x8x8xf32>
      tpu.vector_store %arg24[%271, %c0_157, %c0_158], %274 {strides = array<i32>} : memref<2x8x8xf32, #tpu.memory_space<vmem>>, vector<1x8x8xf32>,
    } else {
    }
    %3 = arith.index_cast %arg1 : i32 to index
    %c0 = arith.constant 0 : index
    %c0_1 = arith.constant 0 : index
    %4 = vector.load %arg23[%3, %c0, %c0_1] : memref<2x8x32xf32, #tpu.memory_space<vmem>>, vector<1x8x32xf32>
    %5 = vector.shape_cast %4 : vector<1x8x32xf32> to vector<8x32xf32>
    %6 = arith.index_cast %arg1 : i32 to index
    %c0_2 = arith.constant 0 : index
    %c0_3 = arith.constant 0 : index
    %7 = vector.load %arg24[%6, %c0_2, %c0_3] : memref<2x8x8xf32, #tpu.memory_space<vmem>>, vector<1x8x8xf32>
    %8 = vector.shape_cast %7 : vector<1x8x8xf32> to vector<8x8xf32>
    %c0_4 = arith.constant 0 : index
    %c0_5 = arith.constant 0 : index
    %c0_6 = arith.constant 0 : index
    %9 = vector.load %arg3[%c0_4, %c0_5, %c0_6] : memref<1x1x32xf32, #tpu.memory_space<vmem>>, vector<1x1x32xf32>
    %10 = vector.shape_cast %9 : vector<1x1x32xf32> to vector<1x32xf32>
    %11 = arith.negf %10 : vector<1x32xf32>
    %12 = math.exp %11 : vector<1x32xf32>
    %cst = arith.constant 1.000000e+00 : f32
    %13 = vector.broadcast %cst : f32 to vector<1x32xf32>
    %14 = arith.addf %13, %12 : vector<1x32xf32>
    %15 = arith.divf %13, %14 : vector<1x32xf32>
    %16 = arith.mulf %10, %15 : vector<1x32xf32>
    %17 = arith.truncf %16 : vector<1x32xf32> to vector<1x32xbf16>
    %c0_7 = arith.constant 0 : index
    %c0_8 = arith.constant 0 : index
    %c0_9 = arith.constant 0 : index
    %18 = vector.load %arg20[%c0_7, %c0_8, %c0_9] : memref<1x32x64xbf16, #tpu.memory_space<vmem>>, vector<1x32x64xbf16>
    %19 = vector.shape_cast %18 : vector<1x32x64xbf16> to vector<32x64xbf16>
    %cst_10 = arith.constant dense<0.000000e+00> : vector<1x64xf32>
    %20 = tpu.matmul %17, %19, %cst_10 {dimension_numbers = #tpu.dot_dimension_numbers<[1], [0], [0], [1], [0, 0, 1, 1], [], []>} : vector<1x32xbf16>, vector<32x64xbf16>, vector<1x64xf32> -> vector<1x64xf32>
    %c0_11 = arith.constant 0 : index
    %c0_12 = arith.constant 0 : index
    %c0_13 = arith.constant 0 : index
    %21 = vector.load %arg21[%c0_11, %c0_12, %c0_13] : memref<1x1x64xf32, #tpu.memory_space<vmem>>, vector<1x1x64xf32>
    %22 = vector.shape_cast %21 : vector<1x1x64xf32> to vector<1x64xf32>
    %23 = arith.addf %20, %22 : vector<1x64xf32>
    %24 = vector.extract_strided_slice %23 {offsets = [0, 0], sizes = [1, 32], strides = [1, 1]} : vector<1x64xf32> to vector<1x32xf32>
    %25 = vector.extract_strided_slice %23 {offsets = [0, 32], sizes = [1, 32], strides = [1, 1]} : vector<1x64xf32> to vector<1x32xf32>
    %c0_14 = arith.constant 0 : index
    %c0_15 = arith.constant 0 : index
    %c0_16 = arith.constant 0 : index
    %26 = vector.load %arg8[%c0_14, %c0_15, %c0_16] : memref<1x1x32xf32, #tpu.memory_space<vmem>>, vector<1x1x32xf32>
    %27 = vector.shape_cast %26 : vector<1x1x32xf32> to vector<1x32xf32>
    %c0_17 = arith.constant 0 : index
    %c0_18 = arith.constant 0 : index
    %c0_19 = arith.constant 0 : index
    %28 = vector.load %arg9[%c0_17, %c0_18, %c0_19] : memref<1x1x32xf32, #tpu.memory_space<vmem>>, vector<1x1x32xf32>
    %29 = vector.shape_cast %28 : vector<1x1x32xf32> to vector<1x32xf32>
    %cst_20 = arith.constant dense<0.000000e+00> : vector<8xf32>
    %30 = vector.multi_reduction <add>, %5, %cst_20 [1] : vector<8x32xf32> to vector<8xf32>
    %31 = vector.shape_cast %30 : vector<8xf32> to vector<8x1xf32>
    %cst_21 = arith.constant 3.200000e+01 : f32
    %32 = vector.broadcast %cst_21 : f32 to vector<8x1xf32>
    %33 = arith.divf %31, %32 : vector<8x1xf32>
    %34 = vector.broadcast %33 : vector<8x1xf32> to vector<8x32xf32>
    %35 = arith.subf %5, %34 : vector<8x32xf32>
    %36 = arith.mulf %35, %35 : vector<8x32xf32>
    %cst_22 = arith.constant dense<0.000000e+00> : vector<8xf32>
    %37 = vector.multi_reduction <add>, %36, %cst_22 [1] : vector<8x32xf32> to vector<8xf32>
    %38 = vector.shape_cast %37 : vector<8xf32> to vector<8x1xf32>
    %cst_23 = arith.constant 3.200000e+01 : f32
    %39 = vector.broadcast %cst_23 : f32 to vector<8x1xf32>
    %40 = arith.divf %38, %39 : vector<8x1xf32>
    %41 = vector.broadcast %33 : vector<8x1xf32> to vector<8x32xf32>
    %42 = arith.subf %5, %41 : vector<8x32xf32>
    %cst_24 = arith.constant 9.99999997E-7 : f32
    %43 = vector.broadcast %cst_24 : f32 to vector<8x1xf32>
    %44 = arith.addf %40, %43 : vector<8x1xf32>
    %45 = math.rsqrt %44 : vector<8x1xf32>
    %46 = vector.broadcast %45 : vector<8x1xf32> to vector<8x32xf32>
    %47 = arith.mulf %42, %46 : vector<8x32xf32>
    %48 = vector.broadcast %27 : vector<1x32xf32> to vector<8x32xf32>
    %49 = arith.mulf %47, %48 : vector<8x32xf32>
    %50 = vector.broadcast %29 : vector<1x32xf32> to vector<8x32xf32>
    %51 = arith.addf %49, %50 : vector<8x32xf32>
    %52 = arith.truncf %51 : vector<8x32xf32> to vector<8x32xbf16>
    %c0_25 = arith.constant 0 : index
    %c0_26 = arith.constant 0 : index
    %c0_27 = arith.constant 0 : index
    %53 = vector.load %arg10[%c0_25, %c0_26, %c0_27] : memref<1x32x96xbf16, #tpu.memory_space<vmem>>, vector<1x32x32xbf16>
    %54 = vector.shape_cast %53 : vector<1x32x32xbf16> to vector<32x32xbf16>
    %cst_28 = arith.constant dense<0.000000e+00> : vector<8x32xf32>
    %55 = tpu.matmul %52, %54, %cst_28 {dimension_numbers = #tpu.dot_dimension_numbers<[1], [0], [0], [1], [0, 0, 1, 1], [], []>} : vector<8x32xbf16>, vector<32x32xbf16>, vector<8x32xf32> -> vector<8x32xf32>
    %c0_29 = arith.constant 0 : index
    %c0_30 = arith.constant 0 : index
    %c0_31 = arith.constant 0 : index
    %56 = vector.load %arg11[%c0_29, %c0_30, %c0_31] : memref<1x1x96xf32, #tpu.memory_space<vmem>>, vector<1x1x32xf32>
    %57 = vector.shape_cast %56 : vector<1x1x32xf32> to vector<1x32xf32>
    %58 = vector.broadcast %57 : vector<1x32xf32> to vector<8x32xf32>
    %59 = arith.addf %55, %58 : vector<8x32xf32>
    %60 = vector.extract_strided_slice %59 {offsets = [0, 0], sizes = [8, 8], strides = [1, 1]} : vector<8x32xf32> to vector<8x8xf32>
    %61 = arith.truncf %60 : vector<8x8xf32> to vector<8x8xbf16>
    %c0_32 = arith.constant 0 : index
    %c0_33 = arith.constant 0 : index
    %c0_34 = arith.constant 0 : index
    %62 = vector.load %arg25[%c0_32, %c0_33, %c0_34] : memref<4x8x8xbf16, #tpu.memory_space<vmem>>, vector<1x8x8xbf16>
    %63 = vector.shape_cast %62 : vector<1x8x8xbf16> to vector<8x8xbf16>
    %64 = vector.shape_cast %61 : vector<8x8xbf16> to vector<1x8x8xbf16>
    tpu.vector_store %arg25[%c0_32, %c0_33, %c0_34], %64 {strides = array<i32>} : memref<4x8x8xbf16, #tpu.memory_space<vmem>>, vector<1x8x8xbf16>,
    %65 = vector.extract_strided_slice %59 {offsets = [0, 8], sizes = [8, 8], strides = [1, 1]} : vector<8x32xf32> to vector<8x8xf32>
    %66 = arith.truncf %65 : vector<8x8xf32> to vector<8x8xbf16>
    %c1 = arith.constant 1 : index
    %c0_35 = arith.constant 0 : index
    %c0_36 = arith.constant 0 : index
    %67 = vector.load %arg25[%c1, %c0_35, %c0_36] : memref<4x8x8xbf16, #tpu.memory_space<vmem>>, vector<1x8x8xbf16>
    %68 = vector.shape_cast %67 : vector<1x8x8xbf16> to vector<8x8xbf16>
    %69 = vector.shape_cast %66 : vector<8x8xbf16> to vector<1x8x8xbf16>
    tpu.vector_store %arg25[%c1, %c0_35, %c0_36], %69 {strides = array<i32>} : memref<4x8x8xbf16, #tpu.memory_space<vmem>>, vector<1x8x8xbf16>,
    %70 = vector.extract_strided_slice %59 {offsets = [0, 16], sizes = [8, 8], strides = [1, 1]} : vector<8x32xf32> to vector<8x8xf32>
    %71 = arith.truncf %70 : vector<8x8xf32> to vector<8x8xbf16>
    %c2 = arith.constant 2 : index
    %c0_37 = arith.constant 0 : index
    %c0_38 = arith.constant 0 : index
    %72 = vector.load %arg25[%c2, %c0_37, %c0_38] : memref<4x8x8xbf16, #tpu.memory_space<vmem>>, vector<1x8x8xbf16>
    %73 = vector.shape_cast %72 : vector<1x8x8xbf16> to vector<8x8xbf16>
    %74 = vector.shape_cast %71 : vector<8x8xbf16> to vector<1x8x8xbf16>
    tpu.vector_store %arg25[%c2, %c0_37, %c0_38], %74 {strides = array<i32>} : memref<4x8x8xbf16, #tpu.memory_space<vmem>>, vector<1x8x8xbf16>,
    %75 = vector.extract_strided_slice %59 {offsets = [0, 24], sizes = [8, 8], strides = [1, 1]} : vector<8x32xf32> to vector<8x8xf32>
    %76 = arith.truncf %75 : vector<8x8xf32> to vector<8x8xbf16>
    %c3 = arith.constant 3 : index
    %c0_39 = arith.constant 0 : index
    %c0_40 = arith.constant 0 : index
    %77 = vector.load %arg25[%c3, %c0_39, %c0_40] : memref<4x8x8xbf16, #tpu.memory_space<vmem>>, vector<1x8x8xbf16>
    %78 = vector.shape_cast %77 : vector<1x8x8xbf16> to vector<8x8xbf16>
    %79 = vector.shape_cast %76 : vector<8x8xbf16> to vector<1x8x8xbf16>
    tpu.vector_store %arg25[%c3, %c0_39, %c0_40], %79 {strides = array<i32>} : memref<4x8x8xbf16, #tpu.memory_space<vmem>>, vector<1x8x8xbf16>,
    %c0_41 = arith.constant 0 : index
    %c0_42 = arith.constant 0 : index
    %c32 = arith.constant 32 : index
    %80 = vector.load %arg10[%c0_41, %c0_42, %c32] : memref<1x32x96xbf16, #tpu.memory_space<vmem>>, vector<1x32x32xbf16>
    %81 = vector.shape_cast %80 : vector<1x32x32xbf16> to vector<32x32xbf16>
    %cst_43 = arith.constant dense<0.000000e+00> : vector<8x32xf32>
    %82 = tpu.matmul %52, %81, %cst_43 {dimension_numbers = #tpu.dot_dimension_numbers<[1], [0], [0], [1], [0, 0, 1, 1], [], []>} : vector<8x32xbf16>, vector<32x32xbf16>, vector<8x32xf32> -> vector<8x32xf32>
    %c0_44 = arith.constant 0 : index
    %c0_45 = arith.constant 0 : index
    %c32_46 = arith.constant 32 : index
    %83 = vector.load %arg11[%c0_44, %c0_45, %c32_46] : memref<1x1x96xf32, #tpu.memory_space<vmem>>, vector<1x1x32xf32>
    %84 = vector.shape_cast %83 : vector<1x1x32xf32> to vector<1x32xf32>
    %85 = vector.broadcast %84 : vector<1x32xf32> to vector<8x32xf32>
    %86 = arith.addf %82, %85 : vector<8x32xf32>
    %87 = vector.extract_strided_slice %86 {offsets = [0, 0], sizes = [8, 8], strides = [1, 1]} : vector<8x32xf32> to vector<8x8xf32>
    %88 = arith.truncf %87 : vector<8x8xf32> to vector<8x8xbf16>
    %c0_47 = arith.constant 0 : index
    %c0_48 = arith.constant 0 : index
    %c0_49 = arith.constant 0 : index
    %89 = vector.load %arg26[%c0_47, %c0_48, %c0_49] : memref<4x8x8xbf16, #tpu.memory_space<vmem>>, vector<1x8x8xbf16>
    %90 = vector.shape_cast %89 : vector<1x8x8xbf16> to vector<8x8xbf16>
    %91 = vector.shape_cast %88 : vector<8x8xbf16> to vector<1x8x8xbf16>
    tpu.vector_store %arg26[%c0_47, %c0_48, %c0_49], %91 {strides = array<i32>} : memref<4x8x8xbf16, #tpu.memory_space<vmem>>, vector<1x8x8xbf16>,
    %92 = vector.extract_strided_slice %86 {offsets = [0, 8], sizes = [8, 8], strides = [1, 1]} : vector<8x32xf32> to vector<8x8xf32>
    %93 = arith.truncf %92 : vector<8x8xf32> to vector<8x8xbf16>
    %c1_50 = arith.constant 1 : index
    %c0_51 = arith.constant 0 : index
    %c0_52 = arith.constant 0 : index
    %94 = vector.load %arg26[%c1_50, %c0_51, %c0_52] : memref<4x8x8xbf16, #tpu.memory_space<vmem>>, vector<1x8x8xbf16>
    %95 = vector.shape_cast %94 : vector<1x8x8xbf16> to vector<8x8xbf16>
    %96 = vector.shape_cast %93 : vector<8x8xbf16> to vector<1x8x8xbf16>
    tpu.vector_store %arg26[%c1_50, %c0_51, %c0_52], %96 {strides = array<i32>} : memref<4x8x8xbf16, #tpu.memory_space<vmem>>, vector<1x8x8xbf16>,
    %97 = vector.extract_strided_slice %86 {offsets = [0, 16], sizes = [8, 8], strides = [1, 1]} : vector<8x32xf32> to vector<8x8xf32>
    %98 = arith.truncf %97 : vector<8x8xf32> to vector<8x8xbf16>
    %c2_53 = arith.constant 2 : index
    %c0_54 = arith.constant 0 : index
    %c0_55 = arith.constant 0 : index
    %99 = vector.load %arg26[%c2_53, %c0_54, %c0_55] : memref<4x8x8xbf16, #tpu.memory_space<vmem>>, vector<1x8x8xbf16>
    %100 = vector.shape_cast %99 : vector<1x8x8xbf16> to vector<8x8xbf16>
    %101 = vector.shape_cast %98 : vector<8x8xbf16> to vector<1x8x8xbf16>
    tpu.vector_store %arg26[%c2_53, %c0_54, %c0_55], %101 {strides = array<i32>} : memref<4x8x8xbf16, #tpu.memory_space<vmem>>, vector<1x8x8xbf16>,
    %102 = vector.extract_strided_slice %86 {offsets = [0, 24], sizes = [8, 8], strides = [1, 1]} : vector<8x32xf32> to vector<8x8xf32>
    %103 = arith.truncf %102 : vector<8x8xf32> to vector<8x8xbf16>
    %c3_56 = arith.constant 3 : index
    %c0_57 = arith.constant 0 : index
    %c0_58 = arith.constant 0 : index
    %104 = vector.load %arg26[%c3_56, %c0_57, %c0_58] : memref<4x8x8xbf16, #tpu.memory_space<vmem>>, vector<1x8x8xbf16>
    %105 = vector.shape_cast %104 : vector<1x8x8xbf16> to vector<8x8xbf16>
    %106 = vector.shape_cast %103 : vector<8x8xbf16> to vector<1x8x8xbf16>
    tpu.vector_store %arg26[%c3_56, %c0_57, %c0_58], %106 {strides = array<i32>} : memref<4x8x8xbf16, #tpu.memory_space<vmem>>, vector<1x8x8xbf16>,
    %c0_59 = arith.constant 0 : index
    %c0_60 = arith.constant 0 : index
    %c64 = arith.constant 64 : index
    %107 = vector.load %arg10[%c0_59, %c0_60, %c64] : memref<1x32x96xbf16, #tpu.memory_space<vmem>>, vector<1x32x32xbf16>
    %108 = vector.shape_cast %107 : vector<1x32x32xbf16> to vector<32x32xbf16>
    %cst_61 = arith.constant dense<0.000000e+00> : vector<8x32xf32>
    %109 = tpu.matmul %52, %108, %cst_61 {dimension_numbers = #tpu.dot_dimension_numbers<[1], [0], [0], [1], [0, 0, 1, 1], [], []>} : vector<8x32xbf16>, vector<32x32xbf16>, vector<8x32xf32> -> vector<8x32xf32>
    %c0_62 = arith.constant 0 : index
    %c0_63 = arith.constant 0 : index
    %c64_64 = arith.constant 64 : index
    %110 = vector.load %arg11[%c0_62, %c0_63, %c64_64] : memref<1x1x96xf32, #tpu.memory_space<vmem>>, vector<1x1x32xf32>
    %111 = vector.shape_cast %110 : vector<1x1x32xf32> to vector<1x32xf32>
    %112 = vector.broadcast %111 : vector<1x32xf32> to vector<8x32xf32>
    %113 = arith.addf %109, %112 : vector<8x32xf32>
    %114 = vector.extract_strided_slice %113 {offsets = [0, 0], sizes = [8, 8], strides = [1, 1]} : vector<8x32xf32> to vector<8x8xf32>
    %115 = arith.truncf %114 : vector<8x8xf32> to vector<8x8xbf16>
    %c0_65 = arith.constant 0 : index
    %c0_66 = arith.constant 0 : index
    %c0_67 = arith.constant 0 : index
    %116 = vector.load %arg27[%c0_65, %c0_66, %c0_67] : memref<4x8x8xbf16, #tpu.memory_space<vmem>>, vector<1x8x8xbf16>
    %117 = vector.shape_cast %116 : vector<1x8x8xbf16> to vector<8x8xbf16>
    %118 = vector.shape_cast %115 : vector<8x8xbf16> to vector<1x8x8xbf16>
    tpu.vector_store %arg27[%c0_65, %c0_66, %c0_67], %118 {strides = array<i32>} : memref<4x8x8xbf16, #tpu.memory_space<vmem>>, vector<1x8x8xbf16>,
    %119 = vector.extract_strided_slice %113 {offsets = [0, 8], sizes = [8, 8], strides = [1, 1]} : vector<8x32xf32> to vector<8x8xf32>
    %120 = arith.truncf %119 : vector<8x8xf32> to vector<8x8xbf16>
    %c1_68 = arith.constant 1 : index
    %c0_69 = arith.constant 0 : index
    %c0_70 = arith.constant 0 : index
    %121 = vector.load %arg27[%c1_68, %c0_69, %c0_70] : memref<4x8x8xbf16, #tpu.memory_space<vmem>>, vector<1x8x8xbf16>
    %122 = vector.shape_cast %121 : vector<1x8x8xbf16> to vector<8x8xbf16>
    %123 = vector.shape_cast %120 : vector<8x8xbf16> to vector<1x8x8xbf16>
    tpu.vector_store %arg27[%c1_68, %c0_69, %c0_70], %123 {strides = array<i32>} : memref<4x8x8xbf16, #tpu.memory_space<vmem>>, vector<1x8x8xbf16>,
    %124 = vector.extract_strided_slice %113 {offsets = [0, 16], sizes = [8, 8], strides = [1, 1]} : vector<8x32xf32> to vector<8x8xf32>
    %125 = arith.truncf %124 : vector<8x8xf32> to vector<8x8xbf16>
    %c2_71 = arith.constant 2 : index
    %c0_72 = arith.constant 0 : index
    %c0_73 = arith.constant 0 : index
    %126 = vector.load %arg27[%c2_71, %c0_72, %c0_73] : memref<4x8x8xbf16, #tpu.memory_space<vmem>>, vector<1x8x8xbf16>
    %127 = vector.shape_cast %126 : vector<1x8x8xbf16> to vector<8x8xbf16>
    %128 = vector.shape_cast %125 : vector<8x8xbf16> to vector<1x8x8xbf16>
    tpu.vector_store %arg27[%c2_71, %c0_72, %c0_73], %128 {strides = array<i32>} : memref<4x8x8xbf16, #tpu.memory_space<vmem>>, vector<1x8x8xbf16>,
    %129 = vector.extract_strided_slice %113 {offsets = [0, 24], sizes = [8, 8], strides = [1, 1]} : vector<8x32xf32> to vector<8x8xf32>
    %130 = arith.truncf %129 : vector<8x8xf32> to vector<8x8xbf16>
    %c3_74 = arith.constant 3 : index
    %c0_75 = arith.constant 0 : index
    %c0_76 = arith.constant 0 : index
    %131 = vector.load %arg27[%c3_74, %c0_75, %c0_76] : memref<4x8x8xbf16, #tpu.memory_space<vmem>>, vector<1x8x8xbf16>
    %132 = vector.shape_cast %131 : vector<1x8x8xbf16> to vector<8x8xbf16>
    %133 = vector.shape_cast %130 : vector<8x8xbf16> to vector<1x8x8xbf16>
    tpu.vector_store %arg27[%c3_74, %c0_75, %c0_76], %133 {strides = array<i32>} : memref<4x8x8xbf16, #tpu.memory_space<vmem>>, vector<1x8x8xbf16>,
    %c0_77 = arith.constant 0 : index
    %c0_78 = arith.constant 0 : index
    %c0_79 = arith.constant 0 : index
    %134 = vector.load %arg25[%c0_77, %c0_78, %c0_79] : memref<4x8x8xbf16, #tpu.memory_space<vmem>>, vector<4x8x8xbf16>
    %c0_80 = arith.constant 0 : index
    %c0_81 = arith.constant 0 : index
    %c0_82 = arith.constant 0 : index
    %135 = vector.load %arg26[%c0_80, %c0_81, %c0_82] : memref<4x8x8xbf16, #tpu.memory_space<vmem>>, vector<4x8x8xbf16>
    "tpu.trace_start"() <{level = 10 : i32, message = "hqd,hkd->hqk"}> : () -> ()
    %cst_83 = arith.constant dense<0.000000e+00> : vector<4x8x8xf32>
    %136 = tpu.matmul %134, %135, %cst_83 {dimension_numbers = #tpu.dot_dimension_numbers<[2], [2], [1], [1], [0, 0, 0, 1, 1, 1], [0], [0]>} : vector<4x8x8xbf16>, vector<4x8x8xbf16>, vector<4x8x8xf32> -> vector<4x8x8xf32>
    "tpu.trace_stop"() : () -> ()
    %cst_84 = arith.constant 0.353553385 : f32
    %137 = vector.broadcast %cst_84 : f32 to vector<4x8x8xf32>
    %138 = arith.mulf %136, %137 : vector<4x8x8xf32>
    %139 = vector.shape_cast %8 : vector<8x8xf32> to vector<1x8x8xf32>
    %140 = vector.broadcast %139 : vector<1x8x8xf32> to vector<4x8x8xf32>
    %141 = arith.addf %138, %140 : vector<4x8x8xf32>
    %cst_85 = arith.constant dense<0xFF800000> : vector<4x8xf32>
    %142 = vector.multi_reduction <maximumf>, %141, %cst_85 [2] : vector<4x8x8xf32> to vector<4x8xf32>
    %143 = vector.shape_cast %142 : vector<4x8xf32> to vector<4x8x1xf32>
    %144 = vector.broadcast %143 : vector<4x8x1xf32> to vector<4x8x8xf32>
    %145 = arith.subf %141, %144 : vector<4x8x8xf32>
    %146 = math.exp %145 : vector<4x8x8xf32>
    %cst_86 = arith.constant dense<0.000000e+00> : vector<4x8xf32>
    %147 = vector.multi_reduction <add>, %146, %cst_86 [2] : vector<4x8x8xf32> to vector<4x8xf32>
    %148 = vector.shape_cast %147 : vector<4x8xf32> to vector<4x8x1xf32>
    %149 = tpu.reciprocal %148 {approx = true} : vector<4x8x1xf32> -> vector<4x8x1xf32>
    %150 = vector.broadcast %149 : vector<4x8x1xf32> to vector<4x8x8xf32>
    %151 = arith.mulf %146, %150 : vector<4x8x8xf32>
    %152 = arith.truncf %151 : vector<4x8x8xf32> to vector<4x8x8xbf16>
    %c0_87 = arith.constant 0 : index
    %c0_88 = arith.constant 0 : index
    %c0_89 = arith.constant 0 : index
    %153 = vector.load %arg27[%c0_87, %c0_88, %c0_89] : memref<4x8x8xbf16, #tpu.memory_space<vmem>>, vector<4x8x8xbf16>
    "tpu.trace_start"() <{level = 10 : i32, message = "hqk,hkd->hqd"}> : () -> ()
    %cst_90 = arith.constant dense<0.000000e+00> : vector<4x8x8xf32>
    %154 = tpu.matmul %152, %153, %cst_90 {dimension_numbers = #tpu.dot_dimension_numbers<[2], [1], [1], [2], [0, 0, 0, 1, 1, 2], [0], [0]>} : vector<4x8x8xbf16>, vector<4x8x8xbf16>, vector<4x8x8xf32> -> vector<4x8x8xf32>
    "tpu.trace_stop"() : () -> ()
    %155 = vector.extract_strided_slice %154 {offsets = [0, 0, 0], sizes = [1, 8, 8], strides = [1, 1, 1]} : vector<4x8x8xf32> to vector<1x8x8xf32>
    %156 = vector.shape_cast %155 : vector<1x8x8xf32> to vector<8x8xf32>
    %157 = arith.truncf %156 : vector<8x8xf32> to vector<8x8xbf16>
    %c0_91 = arith.constant 0 : index
    %c0_92 = arith.constant 0 : index
    %158 = vector.load %arg28[%c0_91, %c0_92] : memref<8x32xbf16, #tpu.memory_space<vmem>>, vector<8x8xbf16>
    tpu.vector_store %arg28[%c0_91, %c0_92], %157 {strides = array<i32>} : memref<8x32xbf16, #tpu.memory_space<vmem>>, vector<8x8xbf16>,
    %159 = vector.extract_strided_slice %154 {offsets = [1, 0, 0], sizes = [1, 8, 8], strides = [1, 1, 1]} : vector<4x8x8xf32> to vector<1x8x8xf32>
    %160 = vector.shape_cast %159 : vector<1x8x8xf32> to vector<8x8xf32>
    %161 = arith.truncf %160 : vector<8x8xf32> to vector<8x8xbf16>
    %c0_93 = arith.constant 0 : index
    %c8 = arith.constant 8 : index
    %162 = vector.load %arg28[%c0_93, %c8] : memref<8x32xbf16, #tpu.memory_space<vmem>>, vector<8x8xbf16>
    tpu.vector_store %arg28[%c0_93, %c8], %161 {strides = array<i32>} : memref<8x32xbf16, #tpu.memory_space<vmem>>, vector<8x8xbf16>,
    %163 = vector.extract_strided_slice %154 {offsets = [2, 0, 0], sizes = [1, 8, 8], strides = [1, 1, 1]} : vector<4x8x8xf32> to vector<1x8x8xf32>
    %164 = vector.shape_cast %163 : vector<1x8x8xf32> to vector<8x8xf32>
    %165 = arith.truncf %164 : vector<8x8xf32> to vector<8x8xbf16>
    %c0_94 = arith.constant 0 : index
    %c16 = arith.constant 16 : index
    %166 = vector.load %arg28[%c0_94, %c16] : memref<8x32xbf16, #tpu.memory_space<vmem>>, vector<8x8xbf16>
    tpu.vector_store %arg28[%c0_94, %c16], %165 {strides = array<i32>} : memref<8x32xbf16, #tpu.memory_space<vmem>>, vector<8x8xbf16>,
    %167 = vector.extract_strided_slice %154 {offsets = [3, 0, 0], sizes = [1, 8, 8], strides = [1, 1, 1]} : vector<4x8x8xf32> to vector<1x8x8xf32>
    %168 = vector.shape_cast %167 : vector<1x8x8xf32> to vector<8x8xf32>
    %169 = arith.truncf %168 : vector<8x8xf32> to vector<8x8xbf16>
    %c0_95 = arith.constant 0 : index
    %c24 = arith.constant 24 : index
    %170 = vector.load %arg28[%c0_95, %c24] : memref<8x32xbf16, #tpu.memory_space<vmem>>, vector<8x8xbf16>
    tpu.vector_store %arg28[%c0_95, %c24], %169 {strides = array<i32>} : memref<8x32xbf16, #tpu.memory_space<vmem>>, vector<8x8xbf16>,
    %c0_96 = arith.constant 0 : index
    %c0_97 = arith.constant 0 : index
    %171 = vector.load %arg28[%c0_96, %c0_97] : memref<8x32xbf16, #tpu.memory_space<vmem>>, vector<8x32xbf16>
    %c0_98 = arith.constant 0 : index
    %c0_99 = arith.constant 0 : index
    %c0_100 = arith.constant 0 : index
    %172 = vector.load %arg12[%c0_98, %c0_99, %c0_100] : memref<1x32x32xbf16, #tpu.memory_space<vmem>>, vector<1x32x32xbf16>
    %173 = vector.shape_cast %172 : vector<1x32x32xbf16> to vector<32x32xbf16>
    %cst_101 = arith.constant dense<0.000000e+00> : vector<8x32xf32>
    %174 = tpu.matmul %171, %173, %cst_101 {dimension_numbers = #tpu.dot_dimension_numbers<[1], [0], [0], [1], [0, 0, 1, 1], [], []>} : vector<8x32xbf16>, vector<32x32xbf16>, vector<8x32xf32> -> vector<8x32xf32>
    %c0_102 = arith.constant 0 : index
    %c0_103 = arith.constant 0 : index
    %c0_104 = arith.constant 0 : index
    %175 = vector.load %arg13[%c0_102, %c0_103, %c0_104] : memref<1x1x32xf32, #tpu.memory_space<vmem>>, vector<1x1x32xf32>
    %176 = vector.shape_cast %175 : vector<1x1x32xf32> to vector<1x32xf32>
    %177 = vector.broadcast %176 : vector<1x32xf32> to vector<8x32xf32>
    %178 = arith.addf %174, %177 : vector<8x32xf32>
    %179 = vector.broadcast %24 : vector<1x32xf32> to vector<8x32xf32>
    %180 = arith.mulf %178, %179 : vector<8x32xf32>
    %181 = arith.addf %5, %180 : vector<8x32xf32>
    %c0_105 = arith.constant 0 : index
    %c0_106 = arith.constant 0 : index
    %c0_107 = arith.constant 0 : index
    %182 = vector.load %arg14[%c0_105, %c0_106, %c0_107] : memref<1x1x32xf32, #tpu.memory_space<vmem>>, vector<1x1x32xf32>
    %183 = vector.shape_cast %182 : vector<1x1x32xf32> to vector<1x32xf32>
    %c0_108 = arith.constant 0 : index
    %c0_109 = arith.constant 0 : index
    %c0_110 = arith.constant 0 : index
    %184 = vector.load %arg15[%c0_108, %c0_109, %c0_110] : memref<1x1x32xf32, #tpu.memory_space<vmem>>, vector<1x1x32xf32>
    %185 = vector.shape_cast %184 : vector<1x1x32xf32> to vector<1x32xf32>
    %cst_111 = arith.constant dense<0.000000e+00> : vector<8xf32>
    %186 = vector.multi_reduction <add>, %181, %cst_111 [1] : vector<8x32xf32> to vector<8xf32>
    %187 = vector.shape_cast %186 : vector<8xf32> to vector<8x1xf32>
    %cst_112 = arith.constant 3.200000e+01 : f32
    %188 = vector.broadcast %cst_112 : f32 to vector<8x1xf32>
    %189 = arith.divf %187, %188 : vector<8x1xf32>
    %190 = vector.broadcast %189 : vector<8x1xf32> to vector<8x32xf32>
    %191 = arith.subf %181, %190 : vector<8x32xf32>
    %192 = arith.mulf %191, %191 : vector<8x32xf32>
    %cst_113 = arith.constant dense<0.000000e+00> : vector<8xf32>
    %193 = vector.multi_reduction <add>, %192, %cst_113 [1] : vector<8x32xf32> to vector<8xf32>
    %194 = vector.shape_cast %193 : vector<8xf32> to vector<8x1xf32>
    %cst_114 = arith.constant 3.200000e+01 : f32
    %195 = vector.broadcast %cst_114 : f32 to vector<8x1xf32>
    %196 = arith.divf %194, %195 : vector<8x1xf32>
    %197 = vector.broadcast %189 : vector<8x1xf32> to vector<8x32xf32>
    %198 = arith.subf %181, %197 : vector<8x32xf32>
    %cst_115 = arith.constant 9.99999997E-7 : f32
    %199 = vector.broadcast %cst_115 : f32 to vector<8x1xf32>
    %200 = arith.addf %196, %199 : vector<8x1xf32>
    %201 = math.rsqrt %200 : vector<8x1xf32>
    %202 = vector.broadcast %201 : vector<8x1xf32> to vector<8x32xf32>
    %203 = arith.mulf %198, %202 : vector<8x32xf32>
    %204 = vector.broadcast %183 : vector<1x32xf32> to vector<8x32xf32>
    %205 = arith.mulf %203, %204 : vector<8x32xf32>
    %206 = vector.broadcast %185 : vector<1x32xf32> to vector<8x32xf32>
    %207 = arith.addf %205, %206 : vector<8x32xf32>
    %208 = arith.truncf %207 : vector<8x32xf32> to vector<8x32xbf16>
    %c0_116 = arith.constant 0 : index
    %c0_117 = arith.constant 0 : index
    %c0_118 = arith.constant 0 : index
    %209 = vector.load %arg16[%c0_116, %c0_117, %c0_118] : memref<1x32x128xbf16, #tpu.memory_space<vmem>>, vector<1x32x128xbf16>
    %210 = vector.shape_cast %209 : vector<1x32x128xbf16> to vector<32x128xbf16>
    %cst_119 = arith.constant dense<0.000000e+00> : vector<8x128xf32>
    %211 = tpu.matmul %208, %210, %cst_119 {dimension_numbers = #tpu.dot_dimension_numbers<[1], [0], [0], [1], [0, 0, 1, 1], [], []>} : vector<8x32xbf16>, vector<32x128xbf16>, vector<8x128xf32> -> vector<8x128xf32>
    %c0_120 = arith.constant 0 : index
    %c0_121 = arith.constant 0 : index
    %c0_122 = arith.constant 0 : index
    %212 = vector.load %arg17[%c0_120, %c0_121, %c0_122] : memref<1x1x128xf32, #tpu.memory_space<vmem>>, vector<1x1x128xf32>
    %213 = vector.shape_cast %212 : vector<1x1x128xf32> to vector<1x128xf32>
    %214 = vector.broadcast %213 : vector<1x128xf32> to vector<8x128xf32>
    %215 = arith.addf %211, %214 : vector<8x128xf32>
    %216 = arith.negf %215 : vector<8x128xf32>
    %217 = math.exp %216 : vector<8x128xf32>
    %cst_123 = arith.constant 1.000000e+00 : f32
    %218 = vector.broadcast %cst_123 : f32 to vector<8x128xf32>
    %219 = arith.addf %218, %217 : vector<8x128xf32>
    %220 = arith.divf %218, %219 : vector<8x128xf32>
    %221 = arith.mulf %215, %220 : vector<8x128xf32>
    %222 = arith.truncf %221 : vector<8x128xf32> to vector<8x128xbf16>
    %c0_124 = arith.constant 0 : index
    %c0_125 = arith.constant 0 : index
    %c0_126 = arith.constant 0 : index
    %223 = vector.load %arg18[%c0_124, %c0_125, %c0_126] : memref<1x128x32xbf16, #tpu.memory_space<vmem>>, vector<1x128x32xbf16>
    %224 = vector.shape_cast %223 : vector<1x128x32xbf16> to vector<128x32xbf16>
    %cst_127 = arith.constant dense<0.000000e+00> : vector<8x32xf32>
    %225 = tpu.matmul %222, %224, %cst_127 {dimension_numbers = #tpu.dot_dimension_numbers<[1], [0], [0], [1], [0, 0, 1, 1], [], []>} : vector<8x128xbf16>, vector<128x32xbf16>, vector<8x32xf32> -> vector<8x32xf32>
    %c0_128 = arith.constant 0 : index
    %c0_129 = arith.constant 0 : index
    %c0_130 = arith.constant 0 : index
    %226 = vector.load %arg19[%c0_128, %c0_129, %c0_130] : memref<1x1x32xf32, #tpu.memory_space<vmem>>, vector<1x1x32xf32>
    %227 = vector.shape_cast %226 : vector<1x1x32xf32> to vector<1x32xf32>
    %228 = vector.broadcast %227 : vector<1x32xf32> to vector<8x32xf32>
    %229 = arith.addf %225, %228 : vector<8x32xf32>
    %230 = vector.broadcast %25 : vector<1x32xf32> to vector<8x32xf32>
    %231 = arith.mulf %229, %230 : vector<8x32xf32>
    %232 = arith.addf %181, %231 : vector<8x32xf32>
    %233 = arith.index_cast %arg1 : i32 to index
    %c0_131 = arith.constant 0 : index
    %c0_132 = arith.constant 0 : index
    %234 = vector.load %arg23[%233, %c0_131, %c0_132] : memref<2x8x32xf32, #tpu.memory_space<vmem>>, vector<1x8x32xf32>
    %235 = vector.shape_cast %234 : vector<1x8x32xf32> to vector<8x32xf32>
    %236 = vector.shape_cast %232 : vector<8x32xf32> to vector<1x8x32xf32>
    tpu.vector_store %arg23[%233, %c0_131, %c0_132], %236 {strides = array<i32>} : memref<2x8x32xf32, #tpu.memory_space<vmem>>, vector<1x8x32xf32>,
    %c0_133 = arith.constant 0 : index
    %c0_134 = arith.constant 0 : index
    %c0_135 = arith.constant 0 : index
    %237 = vector.load %arg22[%c0_133, %c0_134, %c0_135] : memref<1x8x32xf32, #tpu.memory_space<vmem>>, vector<1x8x32xf32>
    %238 = vector.shape_cast %237 : vector<1x8x32xf32> to vector<8x32xf32>
    %239 = vector.shape_cast %232 : vector<8x32xf32> to vector<1x8x32xf32>
    tpu.vector_store %arg22[%c0_133, %c0_134, %c0_135], %239 {strides = array<i32>} : memref<1x8x32xf32, #tpu.memory_space<vmem>>, vector<1x8x32xf32>,
    return
  }
  func.func @transform_0(%arg0: i32, %arg1: i32) -> (i32, i32, i32) {
    %c0_i32 = arith.constant 0 : i32
    %c0_i32_0 = arith.constant 0 : i32
    %c0_i32_1 = arith.constant 0 : i32
    return %arg1, %c0_i32, %c0_i32_0 : i32, i32, i32
  }
  func.func @transform_1(%arg0: i32, %arg1: i32) -> (i32, i32, i32) {
    %c0_i32 = arith.constant 0 : i32
    %c0_i32_0 = arith.constant 0 : i32
    %c0_i32_1 = arith.constant 0 : i32
    return %arg1, %c0_i32, %c0_i32_0 : i32, i32, i32
  }
  func.func @transform_2(%arg0: i32, %arg1: i32) -> (i32, i32, i32) {
    %c0_i32 = arith.constant 0 : i32
    %c0_i32_0 = arith.constant 0 : i32
    %c0_i32_1 = arith.constant 0 : i32
    return %arg1, %c0_i32, %c0_i32_0 : i32, i32, i32
  }
  func.func @transform_3(%arg0: i32, %arg1: i32) -> (i32, i32, i32) {
    %c0_i32 = arith.constant 0 : i32
    %c0_i32_0 = arith.constant 0 : i32
    %c0_i32_1 = arith.constant 0 : i32
    return %arg1, %c0_i32, %c0_i32_0 : i32, i32, i32
  }
  func.func @transform_4(%arg0: i32, %arg1: i32) -> (i32, i32) {
    %c0_i32 = arith.constant 0 : i32
    %c0_i32_0 = arith.constant 0 : i32
    %c0_i32_1 = arith.constant 0 : i32
    return %c0_i32, %c0_i32_0 : i32, i32
  }
  func.func @transform_5(%arg0: i32, %arg1: i32) -> (i32, i32) {
    %c0_i32 = arith.constant 0 : i32
    %c0_i32_0 = arith.constant 0 : i32
    %c0_i32_1 = arith.constant 0 : i32
    return %c0_i32, %c0_i32_0 : i32, i32
  }
  func.func @transform_6(%arg0: i32, %arg1: i32) -> (i32, i32, i32) {
    %c0_i32 = arith.constant 0 : i32
    %c0_i32_0 = arith.constant 0 : i32
    %c0_i32_1 = arith.constant 0 : i32
    return %arg0, %c0_i32, %c0_i32_0 : i32, i32, i32
  }
  func.func @transform_7(%arg0: i32, %arg1: i32) -> (i32, i32, i32) {
    %c0_i32 = arith.constant 0 : i32
    %c0_i32_0 = arith.constant 0 : i32
    %c0_i32_1 = arith.constant 0 : i32
    return %arg0, %c0_i32, %c0_i32_0 : i32, i32, i32
  }
  func.func @transform_8(%arg0: i32, %arg1: i32) -> (i32, i32, i32) {
    %c0_i32 = arith.constant 0 : i32
    %c0_i32_0 = arith.constant 0 : i32
    %c0_i32_1 = arith.constant 0 : i32
    return %arg0, %c0_i32, %c0_i32_0 : i32, i32, i32
  }
  func.func @transform_9(%arg0: i32, %arg1: i32) -> (i32, i32, i32) {
    %c0_i32 = arith.constant 0 : i32
    %c0_i32_0 = arith.constant 0 : i32
    %c0_i32_1 = arith.constant 0 : i32
    return %arg0, %c0_i32, %c0_i32_0 : i32, i32, i32
  }
  func.func @transform_10(%arg0: i32, %arg1: i32) -> (i32, i32, i32) {
    %c0_i32 = arith.constant 0 : i32
    %c0_i32_0 = arith.constant 0 : i32
    %c0_i32_1 = arith.constant 0 : i32
    return %arg0, %c0_i32, %c0_i32_0 : i32, i32, i32
  }
  func.func @transform_11(%arg0: i32, %arg1: i32) -> (i32, i32, i32) {
    %c0_i32 = arith.constant 0 : i32
    %c0_i32_0 = arith.constant 0 : i32
    %c0_i32_1 = arith.constant 0 : i32
    return %arg0, %c0_i32, %c0_i32_0 : i32, i32, i32
  }
  func.func @transform_12(%arg0: i32, %arg1: i32) -> (i32, i32, i32) {
    %c0_i32 = arith.constant 0 : i32
    %c0_i32_0 = arith.constant 0 : i32
    %c0_i32_1 = arith.constant 0 : i32
    return %arg0, %c0_i32, %c0_i32_0 : i32, i32, i32
  }
  func.func @transform_13(%arg0: i32, %arg1: i32) -> (i32, i32, i32) {
    %c0_i32 = arith.constant 0 : i32
    %c0_i32_0 = arith.constant 0 : i32
    %c0_i32_1 = arith.constant 0 : i32
    return %arg0, %c0_i32, %c0_i32_0 : i32, i32, i32
  }
  func.func @transform_14(%arg0: i32, %arg1: i32) -> (i32, i32, i32) {
    %c0_i32 = arith.constant 0 : i32
    %c0_i32_0 = arith.constant 0 : i32
    %c0_i32_1 = arith.constant 0 : i32
    return %arg0, %c0_i32, %c0_i32_0 : i32, i32, i32
  }
  func.func @transform_15(%arg0: i32, %arg1: i32) -> (i32, i32, i32) {
    %c0_i32 = arith.constant 0 : i32
    %c0_i32_0 = arith.constant 0 : i32
    %c0_i32_1 = arith.constant 0 : i32
    return %arg0, %c0_i32, %c0_i32_0 : i32, i32, i32
  }
  func.func @transform_16(%arg0: i32, %arg1: i32) -> (i32, i32, i32) {
    %c0_i32 = arith.constant 0 : i32
    %c0_i32_0 = arith.constant 0 : i32
    %c0_i32_1 = arith.constant 0 : i32
    return %arg0, %c0_i32, %c0_i32_0 : i32, i32, i32
  }
  func.func @transform_17(%arg0: i32, %arg1: i32) -> (i32, i32, i32) {
    %c0_i32 = arith.constant 0 : i32
    %c0_i32_0 = arith.constant 0 : i32
    %c0_i32_1 = arith.constant 0 : i32
    return %arg0, %c0_i32, %c0_i32_0 : i32, i32, i32
  }
  func.func @transform_18(%arg0: i32, %arg1: i32) -> (i32, i32, i32) {
    %c0_i32 = arith.constant 0 : i32
    %c0_i32_0 = arith.constant 0 : i32
    %c0_i32_1 = arith.constant 0 : i32
    return %arg0, %c0_i32, %c0_i32_0 : i32, i32, i32
  }
  func.func @transform_19(%arg0: i32, %arg1: i32) -> (i32, i32, i32) {
    %c0_i32 = arith.constant 0 : i32
    %c0_i32_0 = arith.constant 0 : i32
    %c0_i32_1 = arith.constant 0 : i32
    return %arg0, %c0_i32, %c0_i32_0 : i32, i32, i32
  }
  func.func @transform_20(%arg0: i32, %arg1: i32) -> (i32, i32, i32) {
    %c0_i32 = arith.constant 0 : i32
    %c0_i32_0 = arith.constant 0 : i32
    %c0_i32_1 = arith.constant 0 : i32
    return %arg1, %c0_i32, %c0_i32_0 : i32, i32, i32
  }
}

module attributes {stable_mosaic.version = 11 : i64} {
  func.func @refiner_kernel(%arg0: i32, %arg1: i32, %arg2: memref<1x8x16xf32, #tpu.memory_space<vmem>>, %arg3: memref<1x1x32xf32, #tpu.memory_space<vmem>>, %arg4: memref<1x1x8xf32, #tpu.memory_space<vmem>>, %arg5: memref<1x8x1xf32, #tpu.memory_space<vmem>>, %arg6: memref<16x32xbf16, #tpu.memory_space<vmem>>, %arg7: memref<1x32xf32, #tpu.memory_space<vmem>>, %arg8: memref<1x1x32xf32, #tpu.memory_space<vmem>>, %arg9: memref<1x1x32xf32, #tpu.memory_space<vmem>>, %arg10: memref<1x32x96xbf16, #tpu.memory_space<vmem>>, %arg11: memref<1x1x96xf32, #tpu.memory_space<vmem>>, %arg12: memref<1x32x32xbf16, #tpu.memory_space<vmem>>, %arg13: memref<1x1x32xf32, #tpu.memory_space<vmem>>, %arg14: memref<1x1x32xf32, #tpu.memory_space<vmem>>, %arg15: memref<1x1x32xf32, #tpu.memory_space<vmem>>, %arg16: memref<1x32x128xbf16, #tpu.memory_space<vmem>>, %arg17: memref<1x1x128xf32, #tpu.memory_space<vmem>>, %arg18: memref<1x128x32xbf16, #tpu.memory_space<vmem>>, %arg19: memref<1x1x32xf32, #tpu.memory_space<vmem>>, %arg20: memref<1x32x64xbf16, #tpu.memory_space<vmem>>, %arg21: memref<1x1x64xf32, #tpu.memory_space<vmem>>, %arg22: memref<1x8x32xf32, #tpu.memory_space<vmem>>, %arg23: memref<2x8x32xf32, #tpu.memory_space<vmem>>, %arg24: memref<2x8x8xf32, #tpu.memory_space<vmem>>, %arg25: memref<4x8x8xbf16, #tpu.memory_space<vmem>>, %arg26: memref<4x8x8xbf16, #tpu.memory_space<vmem>>, %arg27: memref<4x8x8xbf16, #tpu.memory_space<vmem>>, %arg28: memref<8x32xbf16, #tpu.memory_space<vmem>>) attributes {dimension_semantics = [#tpu.dimension_semantics<arbitrary>, #tpu.dimension_semantics<arbitrary>], iteration_bounds = array<i64: 2, 2>, scalar_prefetch = 0 : i64, scratch_operands = 6 : i64, tpu.core_type = #tpu.core_type<tc>, window_params = [{transform_indices = @transform_0, window_bounds = array<i64: 1, 8, 16>}, {transform_indices = @transform_1, window_bounds = array<i64: 1, 1, 32>}, {transform_indices = @transform_2, window_bounds = array<i64: 1, 1, 8>}, {transform_indices = @transform_3, window_bounds = array<i64: 1, 8, 1>}, {pipeline_mode = #tpu.pipeline_mode<synchronous>, transform_indices = @transform_4, window_bounds = array<i64: 16, 32>}, {pipeline_mode = #tpu.pipeline_mode<synchronous>, transform_indices = @transform_5, window_bounds = array<i64: 1, 32>}, {transform_indices = @transform_6, window_bounds = array<i64: 1, 1, 32>}, {transform_indices = @transform_7, window_bounds = array<i64: 1, 1, 32>}, {transform_indices = @transform_8, window_bounds = array<i64: 1, 32, 96>}, {transform_indices = @transform_9, window_bounds = array<i64: 1, 1, 96>}, {transform_indices = @transform_10, window_bounds = array<i64: 1, 32, 32>}, {transform_indices = @transform_11, window_bounds = array<i64: 1, 1, 32>}, {transform_indices = @transform_12, window_bounds = array<i64: 1, 1, 32>}, {transform_indices = @transform_13, window_bounds = array<i64: 1, 1, 32>}, {transform_indices = @transform_14, window_bounds = array<i64: 1, 32, 128>}, {transform_indices = @transform_15, window_bounds = array<i64: 1, 1, 128>}, {transform_indices = @transform_16, window_bounds = array<i64: 1, 128, 32>}, {transform_indices = @transform_17, window_bounds = array<i64: 1, 1, 32>}, {transform_indices = @transform_18, window_bounds = array<i64: 1, 32, 64>}, {transform_indices = @transform_19, window_bounds = array<i64: 1, 1, 64>}, {transform_indices = @transform_20, window_bounds = array<i64: 1, 8, 32>}]} {
    %c0_i32 = arith.constant 0 : i32
    %0 = arith.cmpi eq, %arg0, %c0_i32 : i32
    %1 = arith.extui %0 : i1 to i32
    %c0_i32_0 = arith.constant 0 : i32
    %2 = arith.cmpi ne, %1, %c0_i32_0 : i32
    scf.if %2 {
      %c0_136 = arith.constant 0 : index
      %c0_137 = arith.constant 0 : index
      %c0_138 = arith.constant 0 : index
      %240 = vector.load %arg2[%c0_136, %c0_137, %c0_138] : memref<1x8x16xf32, #tpu.memory_space<vmem>>, vector<1x8x16xf32>
      %241 = vector.shape_cast %240 : vector<1x8x16xf32> to vector<8x16xf32>
      %242 = arith.truncf %241 : vector<8x16xf32> to vector<8x16xbf16>
      %c0_139 = arith.constant 0 : index
      %c0_140 = arith.constant 0 : index
      %243 = vector.load %arg6[%c0_139, %c0_140] : memref<16x32xbf16, #tpu.memory_space<vmem>>, vector<16x32xbf16>
      %cst_141 = arith.constant dense<0.000000e+00> : vector<8x32xf32>
      %244 = tpu.matmul %242, %243, %cst_141 {dimension_numbers = #tpu.dot_dimension_numbers<[1], [0], [0], [1], [0, 0, 1, 1], [], []>} : vector<8x16xbf16>, vector<16x32xbf16>, vector<8x32xf32> -> vector<8x32xf32>
      %c0_142 = arith.constant 0 : index
      %c0_143 = arith.constant 0 : index
      %245 = vector.load %arg7[%c0_142, %c0_143] : memref<1x32xf32, #tpu.memory_space<vmem>>, vector<1x32xf32>
      %246 = vector.broadcast %245 : vector<1x32xf32> to vector<8x32xf32>
      %247 = arith.addf %244, %246 : vector<8x32xf32>
      %248 = arith.index_cast %arg1 : i32 to index
      %c0_144 = arith.constant 0 : index
      %c0_145 = arith.constant 0 : index
      %249 = vector.load %arg23[%248, %c0_144, %c0_145] : memref<2x8x32xf32, #tpu.memory_space<vmem>>, vector<1x8x32xf32>
      %250 = vector.shape_cast %249 : vector<1x8x32xf32> to vector<8x32xf32>
      %251 = vector.shape_cast %247 : vector<8x32xf32> to vector<1x8x32xf32>
      tpu.vector_store %arg23[%248, %c0_144, %c0_145], %251 {strides = array<i32>} : memref<2x8x32xf32, #tpu.memory_space<vmem>>, vector<1x8x32xf32>,
      %c0_146 = arith.constant 0 : index
      %c0_147 = arith.constant 0 : index
      %c0_148 = arith.constant 0 : index
      %252 = vector.load %arg4[%c0_146, %c0_147, %c0_148] : memref<1x1x8xf32, #tpu.memory_space<vmem>>, vector<1x1x8xf32>
      %253 = vector.shape_cast %252 : vector<1x1x8xf32> to vector<1x8xf32>
      %c0_149 = arith.constant 0 : index
      %c0_150 = arith.constant 0 : index
      %c0_151 = arith.constant 0 : index
      %254 = vector.load %arg5[%c0_149, %c0_150, %c0_151] : memref<1x8x1xf32, #tpu.memory_space<vmem>>, vector<1x8x1xf32>
      %255 = vector.shape_cast %254 : vector<1x8x1xf32> to vector<8x1xf32>
      %256 = tpu.iota {dimensions = array<i32: 1>} : vector<1x8xi32>
      %cst_152 = arith.constant 5.000000e-01 : f32
      %257 = vector.broadcast %cst_152 : f32 to vector<8x1xf32>
      %258 = arith.cmpf ogt, %255, %257 : vector<8x1xf32>
      %cst_153 = arith.constant 5.000000e-01 : f32
      %259 = vector.broadcast %cst_153 : f32 to vector<1x8xf32>
      %260 = arith.cmpf ogt, %253, %259 : vector<1x8xf32>
      %261 = vector.broadcast %258 : vector<8x1xi1> to vector<8x8xi1>
      %262 = vector.broadcast %260 : vector<1x8xi1> to vector<8x8xi1>
      %263 = arith.andi %261, %262 : vector<8x8xi1>
      %c0_i32_154 = arith.constant 0 : i32
      %264 = vector.broadcast %c0_i32_154 : i32 to vector<1x8xi32>
      %265 = arith.cmpi eq, %256, %264 : vector<1x8xi32>
      %266 = vector.broadcast %265 : vector<1x8xi1> to vector<8x8xi1>
      %267 = arith.ori %263, %266 : vector<8x8xi1>
      %cst_155 = arith.constant 0.000000e+00 : f32
      %cst_156 = arith.constant -1.000000e+30 : f32
      %268 = vector.broadcast %cst_155 : f32 to vector<8x8xf32>
      %269 = vector.broadcast %cst_156 : f32 to vector<8x8xf32>
      %270 = arith.select %267, %268, %269 : vector<8x8xi1>, vector<8x8xf32>
      %271 = arith.index_cast %arg1 : i32 to index
      %c0_157 = arith.constant 0 : index
      %c0_158 = arith.constant 0 : index
      %272 = vector.load %arg24[%271, %c0_157, %c0_158] : memref<2x8x8xf32, #tpu.memory_space<vmem>>, vector<1x8x8xf32>
      %273 = vector.shape_cast %272 : vector<1x8x8xf32> to vector<8x8xf32>
      %274 = vector.shape_cast %270 : vector<8x8xf32> to vector<1x8x8xf32>
      tpu.vector_store %arg24[%271, %c0_157, %c0_158], %274 {strides = array<i32>} : memref<2x8x8xf32, #tpu.memory_space<vmem>>, vector<1x8x8xf32>,
    } else {
    }
    %3 = arith.index_cast %arg1 : i32 to index
    %c0 = arith.constant 0 : index
    %c0_1 = arith.constant 0 : index
    %4 = vector.load %arg23[%3, %c0, %c0_1] : memref<2x8x32xf32, #tpu.memory_space<vmem>>, vector<1x8x32xf32>
    %5 = vector.shape_cast %4 : vector<1x8x32xf32> to vector<8x32xf32>
    %6 = arith.index_cast %arg1 : i32 to index
    %c0_2 = arith.constant 0 : index
    %c0_3 = arith.constant 0 : index
    %7 = vector.load %arg24[%6, %c0_2, %c0_3] : memref<2x8x8xf32, #tpu.memory_space<vmem>>, vector<1x8x8xf32>
    %8 = vector.shape_cast %7 : vector<1x8x8xf32> to vector<8x8xf32>
    %c0_4 = arith.constant 0 : index
    %c0_5 = arith.constant 0 : index
    %c0_6 = arith.constant 0 : index
    %9 = vector.load %arg3[%c0_4, %c0_5, %c0_6] : memref<1x1x32xf32, #tpu.memory_space<vmem>>, vector<1x1x32xf32>
    %10 = vector.shape_cast %9 : vector<1x1x32xf32> to vector<1x32xf32>
    %11 = arith.negf %10 : vector<1x32xf32>
    %12 = math.exp %11 : vector<1x32xf32>
    %cst = arith.constant 1.000000e+00 : f32
    %13 = vector.broadcast %cst : f32 to vector<1x32xf32>
    %14 = arith.addf %13, %12 : vector<1x32xf32>
    %15 = arith.divf %13, %14 : vector<1x32xf32>
    %16 = arith.mulf %10, %15 : vector<1x32xf32>
    %17 = arith.truncf %16 : vector<1x32xf32> to vector<1x32xbf16>
    %c0_7 = arith.constant 0 : index
    %c0_8 = arith.constant 0 : index
    %c0_9 = arith.constant 0 : index
    %18 = vector.load %arg20[%c0_7, %c0_8, %c0_9] : memref<1x32x64xbf16, #tpu.memory_space<vmem>>, vector<1x32x64xbf16>
    %19 = vector.shape_cast %18 : vector<1x32x64xbf16> to vector<32x64xbf16>
    %cst_10 = arith.constant dense<0.000000e+00> : vector<1x64xf32>
    %20 = tpu.matmul %17, %19, %cst_10 {dimension_numbers = #tpu.dot_dimension_numbers<[1], [0], [0], [1], [0, 0, 1, 1], [], []>} : vector<1x32xbf16>, vector<32x64xbf16>, vector<1x64xf32> -> vector<1x64xf32>
    %c0_11 = arith.constant 0 : index
    %c0_12 = arith.constant 0 : index
    %c0_13 = arith.constant 0 : index
    %21 = vector.load %arg21[%c0_11, %c0_12, %c0_13] : memref<1x1x64xf32, #tpu.memory_space<vmem>>, vector<1x1x64xf32>
    %22 = vector.shape_cast %21 : vector<1x1x64xf32> to vector<1x64xf32>
    %23 = arith.addf %20, %22 : vector<1x64xf32>
    %24 = vector.extract_strided_slice %23 {offsets = [0, 0], sizes = [1, 32], strides = [1, 1]} : vector<1x64xf32> to vector<1x32xf32>
    %25 = vector.extract_strided_slice %23 {offsets = [0, 32], sizes = [1, 32], strides = [1, 1]} : vector<1x64xf32> to vector<1x32xf32>
    %c0_14 = arith.constant 0 : index
    %c0_15 = arith.constant 0 : index
    %c0_16 = arith.constant 0 : index
    %26 = vector.load %arg8[%c0_14, %c0_15, %c0_16] : memref<1x1x32xf32, #tpu.memory_space<vmem>>, vector<1x1x32xf32>
    %27 = vector.shape_cast %26 : vector<1x1x32xf32> to vector<1x32xf32>
    %c0_17 = arith.constant 0 : index
    %c0_18 = arith.constant 0 : index
    %c0_19 = arith.constant 0 : index
    %28 = vector.load %arg9[%c0_17, %c0_18, %c0_19] : memref<1x1x32xf32, #tpu.memory_space<vmem>>, vector<1x1x32xf32>
    %29 = vector.shape_cast %28 : vector<1x1x32xf32> to vector<1x32xf32>
    %cst_20 = arith.constant dense<0.000000e+00> : vector<8xf32>
    %30 = vector.multi_reduction <add>, %5, %cst_20 [1] : vector<8x32xf32> to vector<8xf32>
    %31 = vector.shape_cast %30 : vector<8xf32> to vector<8x1xf32>
    %cst_21 = arith.constant 3.200000e+01 : f32
    %32 = vector.broadcast %cst_21 : f32 to vector<8x1xf32>
    %33 = arith.divf %31, %32 : vector<8x1xf32>
    %34 = vector.broadcast %33 : vector<8x1xf32> to vector<8x32xf32>
    %35 = arith.subf %5, %34 : vector<8x32xf32>
    %36 = arith.mulf %35, %35 : vector<8x32xf32>
    %cst_22 = arith.constant dense<0.000000e+00> : vector<8xf32>
    %37 = vector.multi_reduction <add>, %36, %cst_22 [1] : vector<8x32xf32> to vector<8xf32>
    %38 = vector.shape_cast %37 : vector<8xf32> to vector<8x1xf32>
    %cst_23 = arith.constant 3.200000e+01 : f32
    %39 = vector.broadcast %cst_23 : f32 to vector<8x1xf32>
    %40 = arith.divf %38, %39 : vector<8x1xf32>
    %41 = vector.broadcast %33 : vector<8x1xf32> to vector<8x32xf32>
    %42 = arith.subf %5, %41 : vector<8x32xf32>
    %cst_24 = arith.constant 9.99999997E-7 : f32
    %43 = vector.broadcast %cst_24 : f32 to vector<8x1xf32>
    %44 = arith.addf %40, %43 : vector<8x1xf32>
    %45 = math.rsqrt %44 : vector<8x1xf32>
    %46 = vector.broadcast %45 : vector<8x1xf32> to vector<8x32xf32>
    %47 = arith.mulf %42, %46 : vector<8x32xf32>
    %48 = vector.broadcast %27 : vector<1x32xf32> to vector<8x32xf32>
    %49 = arith.mulf %47, %48 : vector<8x32xf32>
    %50 = vector.broadcast %29 : vector<1x32xf32> to vector<8x32xf32>
    %51 = arith.addf %49, %50 : vector<8x32xf32>
    %52 = arith.truncf %51 : vector<8x32xf32> to vector<8x32xbf16>
    %c0_25 = arith.constant 0 : index
    %c0_26 = arith.constant 0 : index
    %c0_27 = arith.constant 0 : index
    %53 = vector.load %arg10[%c0_25, %c0_26, %c0_27] : memref<1x32x96xbf16, #tpu.memory_space<vmem>>, vector<1x32x32xbf16>
    %54 = vector.shape_cast %53 : vector<1x32x32xbf16> to vector<32x32xbf16>
    %cst_28 = arith.constant dense<0.000000e+00> : vector<8x32xf32>
    %55 = tpu.matmul %52, %54, %cst_28 {dimension_numbers = #tpu.dot_dimension_numbers<[1], [0], [0], [1], [0, 0, 1, 1], [], []>} : vector<8x32xbf16>, vector<32x32xbf16>, vector<8x32xf32> -> vector<8x32xf32>
    %c0_29 = arith.constant 0 : index
    %c0_30 = arith.constant 0 : index
    %c0_31 = arith.constant 0 : index
    %56 = vector.load %arg11[%c0_29, %c0_30, %c0_31] : memref<1x1x96xf32, #tpu.memory_space<vmem>>, vector<1x1x32xf32>
    %57 = vector.shape_cast %56 : vector<1x1x32xf32> to vector<1x32xf32>
    %58 = vector.broadcast %57 : vector<1x32xf32> to vector<8x32xf32>
    %59 = arith.addf %55, %58 : vector<8x32xf32>
    %60 = vector.extract_strided_slice %59 {offsets = [0, 0], sizes = [8, 8], strides = [1, 1]} : vector<8x32xf32> to vector<8x8xf32>
    %61 = arith.truncf %60 : vector<8x8xf32> to vector<8x8xbf16>
    %c0_32 = arith.constant 0 : index
    %c0_33 = arith.constant 0 : index
    %c0_34 = arith.constant 0 : index
    %62 = vector.load %arg25[%c0_32, %c0_33, %c0_34] : memref<4x8x8xbf16, #tpu.memory_space<vmem>>, vector<1x8x8xbf16>
    %63 = vector.shape_cast %62 : vector<1x8x8xbf16> to vector<8x8xbf16>
    %64 = vector.shape_cast %61 : vector<8x8xbf16> to vector<1x8x8xbf16>
    tpu.vector_store %arg25[%c0_32, %c0_33, %c0_34], %64 {strides = array<i32>} : memref<4x8x8xbf16, #tpu.memory_space<vmem>>, vector<1x8x8xbf16>,
    %65 = vector.extract_strided_slice %59 {offsets = [0, 8], sizes = [8, 8], strides = [1, 1]} : vector<8x32xf32> to vector<8x8xf32>
    %66 = arith.truncf %65 : vector<8x8xf32> to vector<8x8xbf16>
    %c1 = arith.constant 1 : index
    %c0_35 = arith.constant 0 : index
    %c0_36 = arith.constant 0 : index
    %67 = vector.load %arg25[%c1, %c0_35, %c0_36] : memref<4x8x8xbf16, #tpu.memory_space<vmem>>, vector<1x8x8xbf16>
    %68 = vector.shape_cast %67 : vector<1x8x8xbf16> to vector<8x8xbf16>
    %69 = vector.shape_cast %66 : vector<8x8xbf16> to vector<1x8x8xbf16>
    tpu.vector_store %arg25[%c1, %c0_35, %c0_36], %69 {strides = array<i32>} : memref<4x8x8xbf16, #tpu.memory_space<vmem>>, vector<1x8x8xbf16>,
    %70 = vector.extract_strided_slice %59 {offsets = [0, 16], sizes = [8, 8], strides = [1, 1]} : vector<8x32xf32> to vector<8x8xf32>
    %71 = arith.truncf %70 : vector<8x8xf32> to vector<8x8xbf16>
    %c2 = arith.constant 2 : index
    %c0_37 = arith.constant 0 : index
    %c0_38 = arith.constant 0 : index
    %72 = vector.load %arg25[%c2, %c0_37, %c0_38] : memref<4x8x8xbf16, #tpu.memory_space<vmem>>, vector<1x8x8xbf16>
    %73 = vector.shape_cast %72 : vector<1x8x8xbf16> to vector<8x8xbf16>
    %74 = vector.shape_cast %71 : vector<8x8xbf16> to vector<1x8x8xbf16>
    tpu.vector_store %arg25[%c2, %c0_37, %c0_38], %74 {strides = array<i32>} : memref<4x8x8xbf16, #tpu.memory_space<vmem>>, vector<1x8x8xbf16>,
    %75 = vector.extract_strided_slice %59 {offsets = [0, 24], sizes = [8, 8], strides = [1, 1]} : vector<8x32xf32> to vector<8x8xf32>
    %76 = arith.truncf %75 : vector<8x8xf32> to vector<8x8xbf16>
    %c3 = arith.constant 3 : index
    %c0_39 = arith.constant 0 : index
    %c0_40 = arith.constant 0 : index
    %77 = vector.load %arg25[%c3, %c0_39, %c0_40] : memref<4x8x8xbf16, #tpu.memory_space<vmem>>, vector<1x8x8xbf16>
    %78 = vector.shape_cast %77 : vector<1x8x8xbf16> to vector<8x8xbf16>
    %79 = vector.shape_cast %76 : vector<8x8xbf16> to vector<1x8x8xbf16>
    tpu.vector_store %arg25[%c3, %c0_39, %c0_40], %79 {strides = array<i32>} : memref<4x8x8xbf16, #tpu.memory_space<vmem>>, vector<1x8x8xbf16>,
    %c0_41 = arith.constant 0 : index
    %c0_42 = arith.constant 0 : index
    %c32 = arith.constant 32 : index
    %80 = vector.load %arg10[%c0_41, %c0_42, %c32] : memref<1x32x96xbf16, #tpu.memory_space<vmem>>, vector<1x32x32xbf16>
    %81 = vector.shape_cast %80 : vector<1x32x32xbf16> to vector<32x32xbf16>
    %cst_43 = arith.constant dense<0.000000e+00> : vector<8x32xf32>
    %82 = tpu.matmul %52, %81, %cst_43 {dimension_numbers = #tpu.dot_dimension_numbers<[1], [0], [0], [1], [0, 0, 1, 1], [], []>} : vector<8x32xbf16>, vector<32x32xbf16>, vector<8x32xf32> -> vector<8x32xf32>
    %c0_44 = arith.constant 0 : index
    %c0_45 = arith.constant 0 : index
    %c32_46 = arith.constant 32 : index
    %83 = vector.load %arg11[%c0_44, %c0_45, %c32_46] : memref<1x1x96xf32, #tpu.memory_space<vmem>>, vector<1x1x32xf32>
    %84 = vector.shape_cast %83 : vector<1x1x32xf32> to vector<1x32xf32>
    %85 = vector.broadcast %84 : vector<1x32xf32> to vector<8x32xf32>
    %86 = arith.addf %82, %85 : vector<8x32xf32>
    %87 = vector.extract_strided_slice %86 {offsets = [0, 0], sizes = [8, 8], strides = [1, 1]} : vector<8x32xf32> to vector<8x8xf32>
    %88 = arith.truncf %87 : vector<8x8xf32> to vector<8x8xbf16>
    %c0_47 = arith.constant 0 : index
    %c0_48 = arith.constant 0 : index
    %c0_49 = arith.constant 0 : index
    %89 = vector.load %arg26[%c0_47, %c0_48, %c0_49] : memref<4x8x8xbf16, #tpu.memory_space<vmem>>, vector<1x8x8xbf16>
    %90 = vector.shape_cast %89 : vector<1x8x8xbf16> to vector<8x8xbf16>
    %91 = vector.shape_cast %88 : vector<8x8xbf16> to vector<1x8x8xbf16>
    tpu.vector_store %arg26[%c0_47, %c0_48, %c0_49], %91 {strides = array<i32>} : memref<4x8x8xbf16, #tpu.memory_space<vmem>>, vector<1x8x8xbf16>,
    %92 = vector.extract_strided_slice %86 {offsets = [0, 8], sizes = [8, 8], strides = [1, 1]} : vector<8x32xf32> to vector<8x8xf32>
    %93 = arith.truncf %92 : vector<8x8xf32> to vector<8x8xbf16>
    %c1_50 = arith.constant 1 : index
    %c0_51 = arith.constant 0 : index
    %c0_52 = arith.constant 0 : index
    %94 = vector.load %arg26[%c1_50, %c0_51, %c0_52] : memref<4x8x8xbf16, #tpu.memory_space<vmem>>, vector<1x8x8xbf16>
    %95 = vector.shape_cast %94 : vector<1x8x8xbf16> to vector<8x8xbf16>
    %96 = vector.shape_cast %93 : vector<8x8xbf16> to vector<1x8x8xbf16>
    tpu.vector_store %arg26[%c1_50, %c0_51, %c0_52], %96 {strides = array<i32>} : memref<4x8x8xbf16, #tpu.memory_space<vmem>>, vector<1x8x8xbf16>,
    %97 = vector.extract_strided_slice %86 {offsets = [0, 16], sizes = [8, 8], strides = [1, 1]} : vector<8x32xf32> to vector<8x8xf32>
    %98 = arith.truncf %97 : vector<8x8xf32> to vector<8x8xbf16>
    %c2_53 = arith.constant 2 : index
    %c0_54 = arith.constant 0 : index
    %c0_55 = arith.constant 0 : index
    %99 = vector.load %arg26[%c2_53, %c0_54, %c0_55] : memref<4x8x8xbf16, #tpu.memory_space<vmem>>, vector<1x8x8xbf16>
    %100 = vector.shape_cast %99 : vector<1x8x8xbf16> to vector<8x8xbf16>
    %101 = vector.shape_cast %98 : vector<8x8xbf16> to vector<1x8x8xbf16>
    tpu.vector_store %arg26[%c2_53, %c0_54, %c0_55], %101 {strides = array<i32>} : memref<4x8x8xbf16, #tpu.memory_space<vmem>>, vector<1x8x8xbf16>,
    %102 = vector.extract_strided_slice %86 {offsets = [0, 24], sizes = [8, 8], strides = [1, 1]} : vector<8x32xf32> to vector<8x8xf32>
    %103 = arith.truncf %102 : vector<8x8xf32> to vector<8x8xbf16>
    %c3_56 = arith.constant 3 : index
    %c0_57 = arith.constant 0 : index
    %c0_58 = arith.constant 0 : index
    %104 = vector.load %arg26[%c3_56, %c0_57, %c0_58] : memref<4x8x8xbf16, #tpu.memory_space<vmem>>, vector<1x8x8xbf16>
    %105 = vector.shape_cast %104 : vector<1x8x8xbf16> to vector<8x8xbf16>
    %106 = vector.shape_cast %103 : vector<8x8xbf16> to vector<1x8x8xbf16>
    tpu.vector_store %arg26[%c3_56, %c0_57, %c0_58], %106 {strides = array<i32>} : memref<4x8x8xbf16, #tpu.memory_space<vmem>>, vector<1x8x8xbf16>,
    %c0_59 = arith.constant 0 : index
    %c0_60 = arith.constant 0 : index
    %c64 = arith.constant 64 : index
    %107 = vector.load %arg10[%c0_59, %c0_60, %c64] : memref<1x32x96xbf16, #tpu.memory_space<vmem>>, vector<1x32x32xbf16>
    %108 = vector.shape_cast %107 : vector<1x32x32xbf16> to vector<32x32xbf16>
    %cst_61 = arith.constant dense<0.000000e+00> : vector<8x32xf32>
    %109 = tpu.matmul %52, %108, %cst_61 {dimension_numbers = #tpu.dot_dimension_numbers<[1], [0], [0], [1], [0, 0, 1, 1], [], []>} : vector<8x32xbf16>, vector<32x32xbf16>, vector<8x32xf32> -> vector<8x32xf32>
    %c0_62 = arith.constant 0 : index
    %c0_63 = arith.constant 0 : index
    %c64_64 = arith.constant 64 : index
    %110 = vector.load %arg11[%c0_62, %c0_63, %c64_64] : memref<1x1x96xf32, #tpu.memory_space<vmem>>, vector<1x1x32xf32>
    %111 = vector.shape_cast %110 : vector<1x1x32xf32> to vector<1x32xf32>
    %112 = vector.broadcast %111 : vector<1x32xf32> to vector<8x32xf32>
    %113 = arith.addf %109, %112 : vector<8x32xf32>
    %114 = vector.extract_strided_slice %113 {offsets = [0, 0], sizes = [8, 8], strides = [1, 1]} : vector<8x32xf32> to vector<8x8xf32>
    %115 = arith.truncf %114 : vector<8x8xf32> to vector<8x8xbf16>
    %c0_65 = arith.constant 0 : index
    %c0_66 = arith.constant 0 : index
    %c0_67 = arith.constant 0 : index
    %116 = vector.load %arg27[%c0_65, %c0_66, %c0_67] : memref<4x8x8xbf16, #tpu.memory_space<vmem>>, vector<1x8x8xbf16>
    %117 = vector.shape_cast %116 : vector<1x8x8xbf16> to vector<8x8xbf16>
    %118 = vector.shape_cast %115 : vector<8x8xbf16> to vector<1x8x8xbf16>
    tpu.vector_store %arg27[%c0_65, %c0_66, %c0_67], %118 {strides = array<i32>} : memref<4x8x8xbf16, #tpu.memory_space<vmem>>, vector<1x8x8xbf16>,
    %119 = vector.extract_strided_slice %113 {offsets = [0, 8], sizes = [8, 8], strides = [1, 1]} : vector<8x32xf32> to vector<8x8xf32>
    %120 = arith.truncf %119 : vector<8x8xf32> to vector<8x8xbf16>
    %c1_68 = arith.constant 1 : index
    %c0_69 = arith.constant 0 : index
    %c0_70 = arith.constant 0 : index
    %121 = vector.load %arg27[%c1_68, %c0_69, %c0_70] : memref<4x8x8xbf16, #tpu.memory_space<vmem>>, vector<1x8x8xbf16>
    %122 = vector.shape_cast %121 : vector<1x8x8xbf16> to vector<8x8xbf16>
    %123 = vector.shape_cast %120 : vector<8x8xbf16> to vector<1x8x8xbf16>
    tpu.vector_store %arg27[%c1_68, %c0_69, %c0_70], %123 {strides = array<i32>} : memref<4x8x8xbf16, #tpu.memory_space<vmem>>, vector<1x8x8xbf16>,
    %124 = vector.extract_strided_slice %113 {offsets = [0, 16], sizes = [8, 8], strides = [1, 1]} : vector<8x32xf32> to vector<8x8xf32>
    %125 = arith.truncf %124 : vector<8x8xf32> to vector<8x8xbf16>
    %c2_71 = arith.constant 2 : index
    %c0_72 = arith.constant 0 : index
    %c0_73 = arith.constant 0 : index
    %126 = vector.load %arg27[%c2_71, %c0_72, %c0_73] : memref<4x8x8xbf16, #tpu.memory_space<vmem>>, vector<1x8x8xbf16>
    %127 = vector.shape_cast %126 : vector<1x8x8xbf16> to vector<8x8xbf16>
    %128 = vector.shape_cast %125 : vector<8x8xbf16> to vector<1x8x8xbf16>
    tpu.vector_store %arg27[%c2_71, %c0_72, %c0_73], %128 {strides = array<i32>} : memref<4x8x8xbf16, #tpu.memory_space<vmem>>, vector<1x8x8xbf16>,
    %129 = vector.extract_strided_slice %113 {offsets = [0, 24], sizes = [8, 8], strides = [1, 1]} : vector<8x32xf32> to vector<8x8xf32>
    %130 = arith.truncf %129 : vector<8x8xf32> to vector<8x8xbf16>
    %c3_74 = arith.constant 3 : index
    %c0_75 = arith.constant 0 : index
    %c0_76 = arith.constant 0 : index
    %131 = vector.load %arg27[%c3_74, %c0_75, %c0_76] : memref<4x8x8xbf16, #tpu.memory_space<vmem>>, vector<1x8x8xbf16>
    %132 = vector.shape_cast %131 : vector<1x8x8xbf16> to vector<8x8xbf16>
    %133 = vector.shape_cast %130 : vector<8x8xbf16> to vector<1x8x8xbf16>
    tpu.vector_store %arg27[%c3_74, %c0_75, %c0_76], %133 {strides = array<i32>} : memref<4x8x8xbf16, #tpu.memory_space<vmem>>, vector<1x8x8xbf16>,
    %c0_77 = arith.constant 0 : index
    %c0_78 = arith.constant 0 : index
    %c0_79 = arith.constant 0 : index
    %134 = vector.load %arg25[%c0_77, %c0_78, %c0_79] : memref<4x8x8xbf16, #tpu.memory_space<vmem>>, vector<4x8x8xbf16>
    %c0_80 = arith.constant 0 : index
    %c0_81 = arith.constant 0 : index
    %c0_82 = arith.constant 0 : index
    %135 = vector.load %arg26[%c0_80, %c0_81, %c0_82] : memref<4x8x8xbf16, #tpu.memory_space<vmem>>, vector<4x8x8xbf16>
    "tpu.trace_start"() <{level = 10 : i32, message = "hqd,hkd->hqk"}> : () -> ()
    %cst_83 = arith.constant dense<0.000000e+00> : vector<4x8x8xf32>
    %136 = tpu.matmul %134, %135, %cst_83 {dimension_numbers = #tpu.dot_dimension_numbers<[2], [2], [1], [1], [0, 0, 0, 1, 1, 1], [0], [0]>} : vector<4x8x8xbf16>, vector<4x8x8xbf16>, vector<4x8x8xf32> -> vector<4x8x8xf32>
    "tpu.trace_stop"() : () -> ()
    %cst_84 = arith.constant 0.353553385 : f32
    %137 = vector.broadcast %cst_84 : f32 to vector<4x8x8xf32>
    %138 = arith.mulf %136, %137 : vector<4x8x8xf32>
    %139 = vector.shape_cast %8 : vector<8x8xf32> to vector<1x8x8xf32>
    %140 = vector.broadcast %139 : vector<1x8x8xf32> to vector<4x8x8xf32>
    %141 = arith.addf %138, %140 : vector<4x8x8xf32>
    %cst_85 = arith.constant dense<0xFF800000> : vector<4x8xf32>
    %142 = vector.multi_reduction <maximumf>, %141, %cst_85 [2] : vector<4x8x8xf32> to vector<4x8xf32>
    %143 = vector.shape_cast %142 : vector<4x8xf32> to vector<4x8x1xf32>
    %144 = vector.broadcast %143 : vector<4x8x1xf32> to vector<4x8x8xf32>
    %145 = arith.subf %141, %144 : vector<4x8x8xf32>
    %146 = math.exp %145 : vector<4x8x8xf32>
    %cst_86 = arith.constant dense<0.000000e+00> : vector<4x8xf32>
    %147 = vector.multi_reduction <add>, %146, %cst_86 [2] : vector<4x8x8xf32> to vector<4x8xf32>
    %148 = vector.shape_cast %147 : vector<4x8xf32> to vector<4x8x1xf32>
    %149 = tpu.reciprocal %148 {approx = true} : vector<4x8x1xf32> -> vector<4x8x1xf32>
    %150 = vector.broadcast %149 : vector<4x8x1xf32> to vector<4x8x8xf32>
    %151 = arith.mulf %146, %150 : vector<4x8x8xf32>
    %152 = arith.truncf %151 : vector<4x8x8xf32> to vector<4x8x8xbf16>
    %c0_87 = arith.constant 0 : index
    %c0_88 = arith.constant 0 : index
    %c0_89 = arith.constant 0 : index
    %153 = vector.load %arg27[%c0_87, %c0_88, %c0_89] : memref<4x8x8xbf16, #tpu.memory_space<vmem>>, vector<4x8x8xbf16>
    "tpu.trace_start"() <{level = 10 : i32, message = "hqk,hkd->hqd"}> : () -> ()
    %cst_90 = arith.constant dense<0.000000e+00> : vector<4x8x8xf32>
    %154 = tpu.matmul %152, %153, %cst_90 {dimension_numbers = #tpu.dot_dimension_numbers<[2], [1], [1], [2], [0, 0, 0, 1, 1, 2], [0], [0]>} : vector<4x8x8xbf16>, vector<4x8x8xbf16>, vector<4x8x8xf32> -> vector<4x8x8xf32>
    "tpu.trace_stop"() : () -> ()
    %155 = vector.extract_strided_slice %154 {offsets = [0, 0, 0], sizes = [1, 8, 8], strides = [1, 1, 1]} : vector<4x8x8xf32> to vector<1x8x8xf32>
    %156 = vector.shape_cast %155 : vector<1x8x8xf32> to vector<8x8xf32>
    %157 = arith.truncf %156 : vector<8x8xf32> to vector<8x8xbf16>
    %c0_91 = arith.constant 0 : index
    %c0_92 = arith.constant 0 : index
    %158 = vector.load %arg28[%c0_91, %c0_92] : memref<8x32xbf16, #tpu.memory_space<vmem>>, vector<8x8xbf16>
    tpu.vector_store %arg28[%c0_91, %c0_92], %157 {strides = array<i32>} : memref<8x32xbf16, #tpu.memory_space<vmem>>, vector<8x8xbf16>,
    %159 = vector.extract_strided_slice %154 {offsets = [1, 0, 0], sizes = [1, 8, 8], strides = [1, 1, 1]} : vector<4x8x8xf32> to vector<1x8x8xf32>
    %160 = vector.shape_cast %159 : vector<1x8x8xf32> to vector<8x8xf32>
    %161 = arith.truncf %160 : vector<8x8xf32> to vector<8x8xbf16>
    %c0_93 = arith.constant 0 : index
    %c8 = arith.constant 8 : index
    %162 = vector.load %arg28[%c0_93, %c8] : memref<8x32xbf16, #tpu.memory_space<vmem>>, vector<8x8xbf16>
    tpu.vector_store %arg28[%c0_93, %c8], %161 {strides = array<i32>} : memref<8x32xbf16, #tpu.memory_space<vmem>>, vector<8x8xbf16>,
    %163 = vector.extract_strided_slice %154 {offsets = [2, 0, 0], sizes = [1, 8, 8], strides = [1, 1, 1]} : vector<4x8x8xf32> to vector<1x8x8xf32>
    %164 = vector.shape_cast %163 : vector<1x8x8xf32> to vector<8x8xf32>
    %165 = arith.truncf %164 : vector<8x8xf32> to vector<8x8xbf16>
    %c0_94 = arith.constant 0 : index
    %c16 = arith.constant 16 : index
    %166 = vector.load %arg28[%c0_94, %c16] : memref<8x32xbf16, #tpu.memory_space<vmem>>, vector<8x8xbf16>
    tpu.vector_store %arg28[%c0_94, %c16], %165 {strides = array<i32>} : memref<8x32xbf16, #tpu.memory_space<vmem>>, vector<8x8xbf16>,
    %167 = vector.extract_strided_slice %154 {offsets = [3, 0, 0], sizes = [1, 8, 8], strides = [1, 1, 1]} : vector<4x8x8xf32> to vector<1x8x8xf32>
    %168 = vector.shape_cast %167 : vector<1x8x8xf32> to vector<8x8xf32>
    %169 = arith.truncf %168 : vector<8x8xf32> to vector<8x8xbf16>
    %c0_95 = arith.constant 0 : index
    %c24 = arith.constant 24 : index
    %170 = vector.load %arg28[%c0_95, %c24] : memref<8x32xbf16, #tpu.memory_space<vmem>>, vector<8x8xbf16>
    tpu.vector_store %arg28[%c0_95, %c24], %169 {strides = array<i32>} : memref<8x32xbf16, #tpu.memory_space<vmem>>, vector<8x8xbf16>,
    %c0_96 = arith.constant 0 : index
    %c0_97 = arith.constant 0 : index
    %171 = vector.load %arg28[%c0_96, %c0_97] : memref<8x32xbf16, #tpu.memory_space<vmem>>, vector<8x32xbf16>
    %c0_98 = arith.constant 0 : index
    %c0_99 = arith.constant 0 : index
    %c0_100 = arith.constant 0 : index
    %172 = vector.load %arg12[%c0_98, %c0_99, %c0_100] : memref<1x32x32xbf16, #tpu.memory_space<vmem>>, vector<1x32x32xbf16>
    %173 = vector.shape_cast %172 : vector<1x32x32xbf16> to vector<32x32xbf16>
    %cst_101 = arith.constant dense<0.000000e+00> : vector<8x32xf32>
    %174 = tpu.matmul %171, %173, %cst_101 {dimension_numbers = #tpu.dot_dimension_numbers<[1], [0], [0], [1], [0, 0, 1, 1], [], []>} : vector<8x32xbf16>, vector<32x32xbf16>, vector<8x32xf32> -> vector<8x32xf32>
    %c0_102 = arith.constant 0 : index
    %c0_103 = arith.constant 0 : index
    %c0_104 = arith.constant 0 : index
    %175 = vector.load %arg13[%c0_102, %c0_103, %c0_104] : memref<1x1x32xf32, #tpu.memory_space<vmem>>, vector<1x1x32xf32>
    %176 = vector.shape_cast %175 : vector<1x1x32xf32> to vector<1x32xf32>
    %177 = vector.broadcast %176 : vector<1x32xf32> to vector<8x32xf32>
    %178 = arith.addf %174, %177 : vector<8x32xf32>
    %179 = vector.broadcast %24 : vector<1x32xf32> to vector<8x32xf32>
    %180 = arith.mulf %178, %179 : vector<8x32xf32>
    %181 = arith.addf %5, %180 : vector<8x32xf32>
    %c0_105 = arith.constant 0 : index
    %c0_106 = arith.constant 0 : index
    %c0_107 = arith.constant 0 : index
    %182 = vector.load %arg14[%c0_105, %c0_106, %c0_107] : memref<1x1x32xf32, #tpu.memory_space<vmem>>, vector<1x1x32xf32>
    %183 = vector.shape_cast %182 : vector<1x1x32xf32> to vector<1x32xf32>
    %c0_108 = arith.constant 0 : index
    %c0_109 = arith.constant 0 : index
    %c0_110 = arith.constant 0 : index
    %184 = vector.load %arg15[%c0_108, %c0_109, %c0_110] : memref<1x1x32xf32, #tpu.memory_space<vmem>>, vector<1x1x32xf32>
    %185 = vector.shape_cast %184 : vector<1x1x32xf32> to vector<1x32xf32>
    %cst_111 = arith.constant dense<0.000000e+00> : vector<8xf32>
    %186 = vector.multi_reduction <add>, %181, %cst_111 [1] : vector<8x32xf32> to vector<8xf32>
    %187 = vector.shape_cast %186 : vector<8xf32> to vector<8x1xf32>
    %cst_112 = arith.constant 3.200000e+01 : f32
    %188 = vector.broadcast %cst_112 : f32 to vector<8x1xf32>
    %189 = arith.divf %187, %188 : vector<8x1xf32>
    %190 = vector.broadcast %189 : vector<8x1xf32> to vector<8x32xf32>
    %191 = arith.subf %181, %190 : vector<8x32xf32>
    %192 = arith.mulf %191, %191 : vector<8x32xf32>
    %cst_113 = arith.constant dense<0.000000e+00> : vector<8xf32>
    %193 = vector.multi_reduction <add>, %192, %cst_113 [1] : vector<8x32xf32> to vector<8xf32>
    %194 = vector.shape_cast %193 : vector<8xf32> to vector<8x1xf32>
    %cst_114 = arith.constant 3.200000e+01 : f32
    %195 = vector.broadcast %cst_114 : f32 to vector<8x1xf32>
    %196 = arith.divf %194, %195 : vector<8x1xf32>
    %197 = vector.broadcast %189 : vector<8x1xf32> to vector<8x32xf32>
    %198 = arith.subf %181, %197 : vector<8x32xf32>
    %cst_115 = arith.constant 9.99999997E-7 : f32
    %199 = vector.broadcast %cst_115 : f32 to vector<8x1xf32>
    %200 = arith.addf %196, %199 : vector<8x1xf32>
    %201 = math.rsqrt %200 : vector<8x1xf32>
    %202 = vector.broadcast %201 : vector<8x1xf32> to vector<8x32xf32>
    %203 = arith.mulf %198, %202 : vector<8x32xf32>
    %204 = vector.broadcast %183 : vector<1x32xf32> to vector<8x32xf32>
    %205 = arith.mulf %203, %204 : vector<8x32xf32>
    %206 = vector.broadcast %185 : vector<1x32xf32> to vector<8x32xf32>
    %207 = arith.addf %205, %206 : vector<8x32xf32>
    %208 = arith.truncf %207 : vector<8x32xf32> to vector<8x32xbf16>
    %c0_116 = arith.constant 0 : index
    %c0_117 = arith.constant 0 : index
    %c0_118 = arith.constant 0 : index
    %209 = vector.load %arg16[%c0_116, %c0_117, %c0_118] : memref<1x32x128xbf16, #tpu.memory_space<vmem>>, vector<1x32x128xbf16>
    %210 = vector.shape_cast %209 : vector<1x32x128xbf16> to vector<32x128xbf16>
    %cst_119 = arith.constant dense<0.000000e+00> : vector<8x128xf32>
    %211 = tpu.matmul %208, %210, %cst_119 {dimension_numbers = #tpu.dot_dimension_numbers<[1], [0], [0], [1], [0, 0, 1, 1], [], []>} : vector<8x32xbf16>, vector<32x128xbf16>, vector<8x128xf32> -> vector<8x128xf32>
    %c0_120 = arith.constant 0 : index
    %c0_121 = arith.constant 0 : index
    %c0_122 = arith.constant 0 : index
    %212 = vector.load %arg17[%c0_120, %c0_121, %c0_122] : memref<1x1x128xf32, #tpu.memory_space<vmem>>, vector<1x1x128xf32>
    %213 = vector.shape_cast %212 : vector<1x1x128xf32> to vector<1x128xf32>
    %214 = vector.broadcast %213 : vector<1x128xf32> to vector<8x128xf32>
    %215 = arith.addf %211, %214 : vector<8x128xf32>
    %216 = arith.negf %215 : vector<8x128xf32>
    %217 = math.exp %216 : vector<8x128xf32>
    %cst_123 = arith.constant 1.000000e+00 : f32
    %218 = vector.broadcast %cst_123 : f32 to vector<8x128xf32>
    %219 = arith.addf %218, %217 : vector<8x128xf32>
    %220 = arith.divf %218, %219 : vector<8x128xf32>
    %221 = arith.mulf %215, %220 : vector<8x128xf32>
    %222 = arith.truncf %221 : vector<8x128xf32> to vector<8x128xbf16>
    %c0_124 = arith.constant 0 : index
    %c0_125 = arith.constant 0 : index
    %c0_126 = arith.constant 0 : index
    %223 = vector.load %arg18[%c0_124, %c0_125, %c0_126] : memref<1x128x32xbf16, #tpu.memory_space<vmem>>, vector<1x128x32xbf16>
    %224 = vector.shape_cast %223 : vector<1x128x32xbf16> to vector<128x32xbf16>
    %cst_127 = arith.constant dense<0.000000e+00> : vector<8x32xf32>
    %225 = tpu.matmul %222, %224, %cst_127 {dimension_numbers = #tpu.dot_dimension_numbers<[1], [0], [0], [1], [0, 0, 1, 1], [], []>} : vector<8x128xbf16>, vector<128x32xbf16>, vector<8x32xf32> -> vector<8x32xf32>
    %c0_128 = arith.constant 0 : index
    %c0_129 = arith.constant 0 : index
    %c0_130 = arith.constant 0 : index
    %226 = vector.load %arg19[%c0_128, %c0_129, %c0_130] : memref<1x1x32xf32, #tpu.memory_space<vmem>>, vector<1x1x32xf32>
    %227 = vector.shape_cast %226 : vector<1x1x32xf32> to vector<1x32xf32>
    %228 = vector.broadcast %227 : vector<1x32xf32> to vector<8x32xf32>
    %229 = arith.addf %225, %228 : vector<8x32xf32>
    %230 = vector.broadcast %25 : vector<1x32xf32> to vector<8x32xf32>
    %231 = arith.mulf %229, %230 : vector<8x32xf32>
    %232 = arith.addf %181, %231 : vector<8x32xf32>
    %233 = arith.index_cast %arg1 : i32 to index
    %c0_131 = arith.constant 0 : index
    %c0_132 = arith.constant 0 : index
    %234 = vector.load %arg23[%233, %c0_131, %c0_132] : memref<2x8x32xf32, #tpu.memory_space<vmem>>, vector<1x8x32xf32>
    %235 = vector.shape_cast %234 : vector<1x8x32xf32> to vector<8x32xf32>
    %236 = vector.shape_cast %232 : vector<8x32xf32> to vector<1x8x32xf32>
    tpu.vector_store %arg23[%233, %c0_131, %c0_132], %236 {strides = array<i32>} : memref<2x8x32xf32, #tpu.memory_space<vmem>>, vector<1x8x32xf32>,
    %c0_133 = arith.constant 0 : index
    %c0_134 = arith.constant 0 : index
    %c0_135 = arith.constant 0 : index
    %237 = vector.load %arg22[%c0_133, %c0_134, %c0_135] : memref<1x8x32xf32, #tpu.memory_space<vmem>>, vector<1x8x32xf32>
    %238 = vector.shape_cast %237 : vector<1x8x32xf32> to vector<8x32xf32>
    %239 = vector.shape_cast %232 : vector<8x32xf32> to vector<1x8x32xf32>
    tpu.vector_store %arg22[%c0_133, %c0_134, %c0_135], %239 {strides = array<i32>} : memref<1x8x32xf32, #tpu.memory_space<vmem>>, vector<1x8x32xf32>,
    return
  }
  func.func @transform_0(%arg0: i32, %arg1: i32) -> (i32, i32, i32) {
    %c0_i32 = arith.constant 0 : i32
    %c0_i32_0 = arith.constant 0 : i32
    %c0_i32_1 = arith.constant 0 : i32
    return %arg1, %c0_i32, %c0_i32_0 : i32, i32, i32
  }
  func.func @transform_1(%arg0: i32, %arg1: i32) -> (i32, i32, i32) {
    %c0_i32 = arith.constant 0 : i32
    %c0_i32_0 = arith.constant 0 : i32
    %c0_i32_1 = arith.constant 0 : i32
    return %arg1, %c0_i32, %c0_i32_0 : i32, i32, i32
  }
  func.func @transform_2(%arg0: i32, %arg1: i32) -> (i32, i32, i32) {
    %c0_i32 = arith.constant 0 : i32
    %c0_i32_0 = arith.constant 0 : i32
    %c0_i32_1 = arith.constant 0 : i32
    return %arg1, %c0_i32, %c0_i32_0 : i32, i32, i32
  }
  func.func @transform_3(%arg0: i32, %arg1: i32) -> (i32, i32, i32) {
    %c0_i32 = arith.constant 0 : i32
    %c0_i32_0 = arith.constant 0 : i32
    %c0_i32_1 = arith.constant 0 : i32
    return %arg1, %c0_i32, %c0_i32_0 : i32, i32, i32
  }
  func.func @transform_4(%arg0: i32, %arg1: i32) -> (i32, i32) {
    %c0_i32 = arith.constant 0 : i32
    %c0_i32_0 = arith.constant 0 : i32
    %c0_i32_1 = arith.constant 0 : i32
    return %c0_i32, %c0_i32_0 : i32, i32
  }
  func.func @transform_5(%arg0: i32, %arg1: i32) -> (i32, i32) {
    %c0_i32 = arith.constant 0 : i32
    %c0_i32_0 = arith.constant 0 : i32
    %c0_i32_1 = arith.constant 0 : i32
    return %c0_i32, %c0_i32_0 : i32, i32
  }
  func.func @transform_6(%arg0: i32, %arg1: i32) -> (i32, i32, i32) {
    %c0_i32 = arith.constant 0 : i32
    %c0_i32_0 = arith.constant 0 : i32
    %c0_i32_1 = arith.constant 0 : i32
    return %arg0, %c0_i32, %c0_i32_0 : i32, i32, i32
  }
  func.func @transform_7(%arg0: i32, %arg1: i32) -> (i32, i32, i32) {
    %c0_i32 = arith.constant 0 : i32
    %c0_i32_0 = arith.constant 0 : i32
    %c0_i32_1 = arith.constant 0 : i32
    return %arg0, %c0_i32, %c0_i32_0 : i32, i32, i32
  }
  func.func @transform_8(%arg0: i32, %arg1: i32) -> (i32, i32, i32) {
    %c0_i32 = arith.constant 0 : i32
    %c0_i32_0 = arith.constant 0 : i32
    %c0_i32_1 = arith.constant 0 : i32
    return %arg0, %c0_i32, %c0_i32_0 : i32, i32, i32
  }
  func.func @transform_9(%arg0: i32, %arg1: i32) -> (i32, i32, i32) {
    %c0_i32 = arith.constant 0 : i32
    %c0_i32_0 = arith.constant 0 : i32
    %c0_i32_1 = arith.constant 0 : i32
    return %arg0, %c0_i32, %c0_i32_0 : i32, i32, i32
  }
  func.func @transform_10(%arg0: i32, %arg1: i32) -> (i32, i32, i32) {
    %c0_i32 = arith.constant 0 : i32
    %c0_i32_0 = arith.constant 0 : i32
    %c0_i32_1 = arith.constant 0 : i32
    return %arg0, %c0_i32, %c0_i32_0 : i32, i32, i32
  }
  func.func @transform_11(%arg0: i32, %arg1: i32) -> (i32, i32, i32) {
    %c0_i32 = arith.constant 0 : i32
    %c0_i32_0 = arith.constant 0 : i32
    %c0_i32_1 = arith.constant 0 : i32
    return %arg0, %c0_i32, %c0_i32_0 : i32, i32, i32
  }
  func.func @transform_12(%arg0: i32, %arg1: i32) -> (i32, i32, i32) {
    %c0_i32 = arith.constant 0 : i32
    %c0_i32_0 = arith.constant 0 : i32
    %c0_i32_1 = arith.constant 0 : i32
    return %arg0, %c0_i32, %c0_i32_0 : i32, i32, i32
  }
  func.func @transform_13(%arg0: i32, %arg1: i32) -> (i32, i32, i32) {
    %c0_i32 = arith.constant 0 : i32
    %c0_i32_0 = arith.constant 0 : i32
    %c0_i32_1 = arith.constant 0 : i32
    return %arg0, %c0_i32, %c0_i32_0 : i32, i32, i32
  }
  func.func @transform_14(%arg0: i32, %arg1: i32) -> (i32, i32, i32) {
    %c0_i32 = arith.constant 0 : i32
    %c0_i32_0 = arith.constant 0 : i32
    %c0_i32_1 = arith.constant 0 : i32
    return %arg0, %c0_i32, %c0_i32_0 : i32, i32, i32
  }
  func.func @transform_15(%arg0: i32, %arg1: i32) -> (i32, i32, i32) {
    %c0_i32 = arith.constant 0 : i32
    %c0_i32_0 = arith.constant 0 : i32
    %c0_i32_1 = arith.constant 0 : i32
    return %arg0, %c0_i32, %c0_i32_0 : i32, i32, i32
  }
  func.func @transform_16(%arg0: i32, %arg1: i32) -> (i32, i32, i32) {
    %c0_i32 = arith.constant 0 : i32
    %c0_i32_0 = arith.constant 0 : i32
    %c0_i32_1 = arith.constant 0 : i32
    return %arg0, %c0_i32, %c0_i32_0 : i32, i32, i32
  }
  func.func @transform_17(%arg0: i32, %arg1: i32) -> (i32, i32, i32) {
    %c0_i32 = arith.constant 0 : i32
    %c0_i32_0 = arith.constant 0 : i32
    %c0_i32_1 = arith.constant 0 : i32
    return %arg0, %c0_i32, %c0_i32_0 : i32, i32, i32
  }
  func.func @transform_18(%arg0: i32, %arg1: i32) -> (i32, i32, i32) {
    %c0_i32 = arith.constant 0 : i32
    %c0_i32_0 = arith.constant 0 : i32
    %c0_i32_1 = arith.constant 0 : i32
    return %arg0, %c0_i32, %c0_i32_0 : i32, i32, i32
  }
  func.func @transform_19(%arg0: i32, %arg1: i32) -> (i32, i32, i32) {
    %c0_i32 = arith.constant 0 : i32
    %c0_i32_0 = arith.constant 0 : i32
    %c0_i32_1 = arith.constant 0 : i32
    return %arg0, %c0_i32, %c0_i32_0 : i32, i32, i32
  }
  func.func @transform_20(%arg0: i32, %arg1: i32) -> (i32, i32, i32) {
    %c0_i32 = arith.constant 0 : i32
    %c0_i32_0 = arith.constant 0 : i32
    %c0_i32_1 = arith.constant 0 : i32
    return %arg1, %c0_i32, %c0_i32_0 : i32, i32, i32
  }
}

</mosaic_0001>

<llo_original>
// kernel: tpu_custom_call.1
$region0: #{tpu_custom_call.1}
  #allocation0 [shape = 'u32[]', space=smem, size = 0x4, offset = 0x4, fixed_abs, tag = 'smem constant byte address 0x4 - core index']
  #allocation1 [shape = 'u32[144,128]{1,0:T(1,128)}', space=vmem, size = 0x12000, scoped, tag = 'internal scratch']
  #allocation2 [shape = 'f32[2,8,32]{2,1,0:T(8,128)}', space=vmem, size = 0x2000, scoped, tag = 'scratch operand']
  #allocation3 [shape = 'f32[2,8,8]{2,1,0:T(8,128)}', space=vmem, size = 0x2000, scoped, tag = 'scratch operand']
  #allocation4 [shape = 'bf16[4,8,8]{2,1,0:T(8,128)(2,1)}', space=vmem, size = 0x2000, scoped, tag = 'scratch operand']
  #allocation5 [shape = 'bf16[4,8,8]{2,1,0:T(8,128)(2,1)}', space=vmem, size = 0x2000, scoped, tag = 'scratch operand']
  #allocation6 [shape = 'bf16[4,8,8]{2,1,0:T(8,128)(2,1)}', space=vmem, size = 0x2000, scoped, tag = 'scratch operand']
  #allocation7 [shape = 'bf16[8,32]{1,0:T(8,128)(2,1)}', space=vmem, size = 0x800, scoped, tag = 'scratch operand']
  %s0 = inlined_call_operand.vmem [shape: f32[2,8,16], index: 0, kind: input, shape index: {}]
  %s1 = inlined_call_operand.vmem [shape: f32[2,1,32], index: 1, kind: input, shape index: {}]
  %s2 = inlined_call_operand.vmem [shape: f32[2,1,8], index: 2, kind: input, shape index: {}]
  %s3 = inlined_call_operand.vmem [shape: f32[2,8,1], index: 3, kind: input, shape index: {}]
  %s4 = inlined_call_operand.vmem [shape: bf16[16,32], index: 4, kind: input, shape index: {}]
  %s5 = inlined_call_operand.vmem [shape: f32[1,32], index: 5, kind: input, shape index: {}]
  %s6 = inlined_call_operand.vmem [shape: f32[2,1,32], index: 6, kind: input, shape index: {}]
  %s7 = inlined_call_operand.vmem [shape: f32[2,1,32], index: 7, kind: input, shape index: {}]
  %s8 = inlined_call_operand.vmem [shape: bf16[2,32,96], index: 8, kind: input, shape index: {}]
  %s9 = inlined_call_operand.vmem [shape: f32[2,1,96], index: 9, kind: input, shape index: {}]
  %s10 = inlined_call_operand.vmem [shape: bf16[2,32,32], index: 10, kind: input, shape index: {}]
  %s11 = inlined_call_operand.vmem [shape: f32[2,1,32], index: 11, kind: input, shape index: {}]
  %s12 = inlined_call_operand.vmem [shape: f32[2,1,32], index: 12, kind: input, shape index: {}]
  %s13 = inlined_call_operand.vmem [shape: f32[2,1,32], index: 13, kind: input, shape index: {}]
  %s14 = inlined_call_operand.vmem [shape: bf16[2,32,128], index: 14, kind: input, shape index: {}]
  %s15 = inlined_call_operand.vmem [shape: f32[2,1,128], index: 15, kind: input, shape index: {}]
  %s16 = inlined_call_operand.vmem [shape: bf16[2,128,32], index: 16, kind: input, shape index: {}]
  %s17 = inlined_call_operand.vmem [shape: f32[2,1,32], index: 17, kind: input, shape index: {}]
  %s18 = inlined_call_operand.vmem [shape: bf16[2,32,64], index: 18, kind: input, shape index: {}]
  %s19 = inlined_call_operand.vmem [shape: f32[2,1,64], index: 19, kind: input, shape index: {}]
  %s20 = inlined_call_operand.hbm [shape: f32[2,8,32], index: 20, kind: output, shape index: {}]
  %s21 = sld [smem:[#allocation0]]
  $region117: #{tpu_custom_call.1} parent=0
    _
  %s23 = ssub.s32 1, %s21
  %s24 = scalar_select 0, %s23, %s21
  $region1: #{tpu_custom_call.1} parent=0
    #allocation8 [shape = 'u8[8192]{0}', space=vmem, size = 0x2000, scoped, tag = 'output window, operand 0']
    #allocation9 [shape = 's32[2]{0}', space=sflag, size = 0x8, scoped, tag = 'scoped memory for tpu_custom_call.1']
    %25 = vsyncpa [#allocation9], 0
    %s26 = scalar_lea.sflag [#allocation9], 1
    %27 = vsyncpa %s26, 0
    loop: start=0, step=1, limit=6
    $region2: #{tpu_custom_call.1} parent=1 // loop_pre_header
      _
    $region3: #{tpu_custom_call.1} parent=1 // loop_header
      %s29 = sphi 0, %s33
      %p30 = scmp.ge.s32.totalorder %s29, 6
      %s36 = sphi 0, %s48
      %s37 = sphi 0, %s44
      %s38 = sphi 0, %s36
      %s39 = sphi 0, %s37
      %s40 = sphi 0, %s38
      %s41 = sphi 0, %s39
      %s51 = sphi 0, %s53
      %s54 = sphi 0, %s51
      %s55 = sphi 0, %s54
      %s71 = sphi 0, %s55
      %s77 = sphi 0, %s79
      %s80 = sphi 0, %s77
      %s81 = sphi 0, %s80
      %s97 = sphi 0, %s81
      %s103 = sphi 0, %s105
      %s106 = sphi 0, %s103
      %s107 = sphi 0, %s106
      %s123 = sphi 0, %s107
      %s129 = sphi 0, %s131
      %s132 = sphi 0, %s129
      %s133 = sphi 0, %s132
      %s149 = sphi 0, %s133
      %s153 = sphi 0, %s153
      %s155 = sphi 0, %s153
      %s156 = sphi 0, %s155
      %s170 = sphi 0, %s156
      %s174 = sphi 0, %s174
      %s176 = sphi 0, %s174
      %s177 = sphi 0, %s176
      %s191 = sphi 0, %s177
      %s197 = sphi 0, %s199
      %s200 = sphi 0, %s197
      %s201 = sphi 0, %s200
      %s217 = sphi 0, %s201
      %s223 = sphi 0, %s225
      %s226 = sphi 0, %s223
      %s227 = sphi 0, %s226
      %s243 = sphi 0, %s227
      %s249 = sphi 0, %s251
      %s252 = sphi 0, %s249
      %s253 = sphi 0, %s252
      %s269 = sphi 0, %s253
      %s275 = sphi 0, %s277
      %s278 = sphi 0, %s275
      %s279 = sphi 0, %s278
      %s295 = sphi 0, %s279
      %s301 = sphi 0, %s303
      %s304 = sphi 0, %s301
      %s305 = sphi 0, %s304
      %s321 = sphi 0, %s305
      %s327 = sphi 0, %s329
      %s330 = sphi 0, %s327
      %s331 = sphi 0, %s330
      %s347 = sphi 0, %s331
      %s353 = sphi 0, %s355
      %s356 = sphi 0, %s353
      %s357 = sphi 0, %s356
      %s373 = sphi 0, %s357
      %s379 = sphi 0, %s381
      %s382 = sphi 0, %s379
      %s383 = sphi 0, %s382
      %s399 = sphi 0, %s383
      %s405 = sphi 0, %s407
      %s408 = sphi 0, %s405
      %s409 = sphi 0, %s408
      %s425 = sphi 0, %s409
      %s431 = sphi 0, %s433
      %s434 = sphi 0, %s431
      %s435 = sphi 0, %s434
      %s451 = sphi 0, %s435
      %s457 = sphi 0, %s459
      %s460 = sphi 0, %s457
      %s461 = sphi 0, %s460
      %s477 = sphi 0, %s461
      %s483 = sphi 0, %s485
      %s486 = sphi 0, %s483
      %s487 = sphi 0, %s486
      %s503 = sphi 0, %s487
      %s509 = sphi 0, %s511
      %s512 = sphi 0, %s509
      %s513 = sphi 0, %s512
      %s529 = sphi 0, %s513
      %s535 = sphi 0, %s537
      %s538 = sphi 0, %s535
      %s539 = sphi 0, %s538
      %s555 = sphi 0, %s539
      %s561 = sphi 0, %s563
      %s564 = sphi 0, %s561
      %s565 = sphi 0, %s564
      %s581 = sphi 0, %s565
    $region4: #{tpu_custom_call.1} parent=1 // loop_header_branch
      %32 = sbr.rel (%p30) target = $region8
    $region5: #{tpu_custom_call.1} parent=1 // loop_body
      %s34 = ssub.s32 %s29, 1
      %s35 = ssub.s32 %s29, 2
      %s42 = sadd.s32 1, %s37
      %p43 = scmp.ge.s32.totalorder %s42, 2
      %s44 = scalar_select %p43, 0, %s42
      %s45 = sadd.s32 1, %s36
      %s46 = scalar_select %p43, %s45, %s36
      %p47 = scmp.ge.s32.totalorder %s46, 2
      %s48 = scalar_select %p47, 0, %s46
      %s49 = ssub.s32 %s37, %s44
      %p50 = scmp.eq.s32.totalorder %s49, 0
      %s52 = sadd.s32 %s51, 1
      %s53 = scalar_select %p50, %s51, %s52
      %p56 = pneg %p50
      %p57 = scmp.eq.s32.totalorder %s29, 3
      %p58 = por %p56, %p57
      %p59 = scmp.ne.s32.totalorder %s51, %s54
      %p60 = scmp.eq.s32.totalorder %s29, 0
      %p61 = por %p59, %p60
      %p62 = scmp.ne.s32.totalorder %s51, %s54
      %p63 = scmp.eq.s32.totalorder %s34, 3
      %p64 = por %p62, %p63
      %p65 = scmp.ne.s32.totalorder %s54, %s55
      %p66 = scmp.eq.s32.totalorder %s34, 0
      %p67 = por %p65, %p66
      %p68 = scmp.ne.s32.totalorder %s54, %s55
      %p69 = scmp.eq.s32.totalorder %s35, 3
      %p70 = por %p68, %p69
      %p72 = scmp.ne.s32.totalorder %s55, %s71
      %p73 = scmp.eq.s32.totalorder %s35, 0
      %p74 = por %p72, %p73
      %s75 = ssub.s32 %s37, %s44
      %p76 = scmp.eq.s32.totalorder %s75, 0
      %s78 = sadd.s32 %s77, 1
      %s79 = scalar_select %p76, %s77, %s78
      %p82 = pneg %p76
      %p83 = scmp.eq.s32.totalorder %s29, 3
      %p84 = por %p82, %p83
      %p85 = scmp.ne.s32.totalorder %s77, %s80
      %p86 = scmp.eq.s32.totalorder %s29, 0
      %p87 = por %p85, %p86
      %p88 = scmp.ne.s32.totalorder %s77, %s80
      %p89 = scmp.eq.s32.totalorder %s34, 3
      %p90 = por %p88, %p89
      %p91 = scmp.ne.s32.totalorder %s80, %s81
      %p92 = scmp.eq.s32.totalorder %s34, 0
      %p93 = por %p91, %p92
      %p94 = scmp.ne.s32.totalorder %s80, %s81
      %p95 = scmp.eq.s32.totalorder %s35, 3
      %p96 = por %p94, %p95
      %p98 = scmp.ne.s32.totalorder %s81, %s97
      %p99 = scmp.eq.s32.totalorder %s35, 0
      %p100 = por %p98, %p99
      %s101 = ssub.s32 %s37, %s44
      %p102 = scmp.eq.s32.totalorder %s101, 0
      %s104 = sadd.s32 %s103, 1
      %s105 = scalar_select %p102, %s103, %s104
      %p108 = pneg %p102
      %p109 = scmp.eq.s32.totalorder %s29, 3
      %p110 = por %p108, %p109
      %p111 = scmp.ne.s32.totalorder %s103, %s106
      %p112 = scmp.eq.s32.totalorder %s29, 0
      %p113 = por %p111, %p112
      %p114 = scmp.ne.s32.totalorder %s103, %s106
      %p115 = scmp.eq.s32.totalorder %s34, 3
      %p116 = por %p114, %p115
      %p117 = scmp.ne.s32.totalorder %s106, %s107
      %p118 = scmp.eq.s32.totalorder %s34, 0
      %p119 = por %p117, %p118
      %p120 = scmp.ne.s32.totalorder %s106, %s107
      %p121 = scmp.eq.s32.totalorder %s35, 3
      %p122 = por %p120, %p121
      %p124 = scmp.ne.s32.totalorder %s107, %s123
      %p125 = scmp.eq.s32.totalorder %s35, 0
      %p126 = por %p124, %p125
      %s127 = ssub.s32 %s37, %s44
      %p128 = scmp.eq.s32.totalorder %s127, 0
      %s130 = sadd.s32 %s129, 1
      %s131 = scalar_select %p128, %s129, %s130
      %p134 = pneg %p128
      %p135 = scmp.eq.s32.totalorder %s29, 3
      %p136 = por %p134, %p135
      %p137 = scmp.ne.s32.totalorder %s129, %s132
      %p138 = scmp.eq.s32.totalorder %s29, 0
      %p139 = por %p137, %p138
      %p140 = scmp.ne.s32.totalorder %s129, %s132
      %p141 = scmp.eq.s32.totalorder %s34, 3
      %p142 = por %p140, %p141
      %p143 = scmp.ne.s32.totalorder %s132, %s133
      %p144 = scmp.eq.s32.totalorder %s34, 0
      %p145 = por %p143, %p144
      %p146 = scmp.ne.s32.totalorder %s132, %s133
      %p147 = scmp.eq.s32.totalorder %s35, 3
      %p148 = por %p146, %p147
      %p150 = scmp.ne.s32.totalorder %s133, %s149
      %p151 = scmp.eq.s32.totalorder %s35, 0
      %p152 = por %p150, %p151
      %s154 = sadd.s32 %s153, 1
      %p157 = scmp.eq.s32.totalorder %s29, 3
      %p158 = scmp.ne.s32.totalorder %s153, %s155
      %p159 = scmp.eq.s32.totalorder %s29, 0
      %p160 = por %p158, %p159
      %p161 = scmp.ne.s32.totalorder %s153, %s155
      %p162 = scmp.eq.s32.totalorder %s34, 3
      %p163 = por %p161, %p162
      %p164 = scmp.ne.s32.totalorder %s155, %s156
      %p165 = scmp.eq.s32.totalorder %s34, 0
      %p166 = por %p164, %p165
      %p167 = scmp.ne.s32.totalorder %s155, %s156
      %p168 = scmp.eq.s32.totalorder %s35, 3
      %p169 = por %p167, %p168
      %p171 = scmp.ne.s32.totalorder %s156, %s170
      %p172 = scmp.eq.s32.totalorder %s35, 0
      %p173 = por %p171, %p172
      %s175 = sadd.s32 %s174, 1
      %p178 = scmp.eq.s32.totalorder %s29, 3
      %p179 = scmp.ne.s32.totalorder %s174, %s176
      %p180 = scmp.eq.s32.totalorder %s29, 0
      %p181 = por %p179, %p180
      %p182 = scmp.ne.s32.totalorder %s174, %s176
      %p183 = scmp.eq.s32.totalorder %s34, 3
      %p184 = por %p182, %p183
      %p185 = scmp.ne.s32.totalorder %s176, %s177
      %p186 = scmp.eq.s32.totalorder %s34, 0
      %p187 = por %p185, %p186
      %p188 = scmp.ne.s32.totalorder %s176, %s177
      %p189 = scmp.eq.s32.totalorder %s35, 3
      %p190 = por %p188, %p189
      %p192 = scmp.ne.s32.totalorder %s177, %s191
      %p193 = scmp.eq.s32.totalorder %s35, 0
      %p194 = por %p192, %p193
      %s195 = ssub.s32 %s36, %s48
      %p196 = scmp.eq.s32.totalorder %s195, 0
      %s198 = sadd.s32 %s197, 1
      %s199 = scalar_select %p196, %s197, %s198
      %p202 = pneg %p196
      %p203 = scmp.eq.s32.totalorder %s29, 3
      %p204 = por %p202, %p203
      %p205 = scmp.ne.s32.totalorder %s197, %s200
      %p206 = scmp.eq.s32.totalorder %s29, 0
      %p207 = por %p205, %p206
      %p208 = scmp.ne.s32.totalorder %s197, %s200
      %p209 = scmp.eq.s32.totalorder %s34, 3
      %p210 = por %p208, %p209
      %p211 = scmp.ne.s32.totalorder %s200, %s201
      %p212 = scmp.eq.s32.totalorder %s34, 0
      %p213 = por %p211, %p212
      %p214 = scmp.ne.s32.totalorder %s200, %s201
      %p215 = scmp.eq.s32.totalorder %s35, 3
      %p216 = por %p214, %p215
      %p218 = scmp.ne.s32.totalorder %s201, %s217
      %p219 = scmp.eq.s32.totalorder %s35, 0
      %p220 = por %p218, %p219
      %s221 = ssub.s32 %s36, %s48
      %p222 = scmp.eq.s32.totalorder %s221, 0
      %s224 = sadd.s32 %s223, 1
      %s225 = scalar_select %p222, %s223, %s224
      %p228 = pneg %p222
      %p229 = scmp.eq.s32.totalorder %s29, 3
      %p230 = por %p228, %p229
      %p231 = scmp.ne.s32.totalorder %s223, %s226
      %p232 = scmp.eq.s32.totalorder %s29, 0
      %p233 = por %p231, %p232
      %p234 = scmp.ne.s32.totalorder %s223, %s226
      %p235 = scmp.eq.s32.totalorder %s34, 3
      %p236 = por %p234, %p235
      %p237 = scmp.ne.s32.totalorder %s226, %s227
      %p238 = scmp.eq.s32.totalorder %s34, 0
      %p239 = por %p237, %p238
      %p240 = scmp.ne.s32.totalorder %s226, %s227
      %p241 = scmp.eq.s32.totalorder %s35, 3
      %p242 = por %p240, %p241
      %p244 = scmp.ne.s32.totalorder %s227, %s243
      %p245 = scmp.eq.s32.totalorder %s35, 0
      %p246 = por %p244, %p245
      %s247 = ssub.s32 %s36, %s48
      %p248 = scmp.eq.s32.totalorder %s247, 0
      %s250 = sadd.s32 %s249, 1
      %s251 = scalar_select %p248, %s249, %s250
      %p254 = pneg %p248
      %p255 = scmp.eq.s32.totalorder %s29, 3
      %p256 = por %p254, %p255
      %p257 = scmp.ne.s32.totalorder %s249, %s252
      %p258 = scmp.eq.s32.totalorder %s29, 0
      %p259 = por %p257, %p258
      %p260 = scmp.ne.s32.totalorder %s249, %s252
      %p261 = scmp.eq.s32.totalorder %s34, 3
      %p262 = por %p260, %p261
      %p263 = scmp.ne.s32.totalorder %s252, %s253
      %p264 = scmp.eq.s32.totalorder %s34, 0
      %p265 = por %p263, %p264
      %p266 = scmp.ne.s32.totalorder %s252, %s253
      %p267 = scmp.eq.s32.totalorder %s35, 3
      %p268 = por %p266, %p267
      %p270 = scmp.ne.s32.totalorder %s253, %s269
      %p271 = scmp.eq.s32.totalorder %s35, 0
      %p272 = por %p270, %p271
      %s273 = ssub.s32 %s36, %s48
      %p274 = scmp.eq.s32.totalorder %s273, 0
      %s276 = sadd.s32 %s275, 1
      %s277 = scalar_select %p274, %s275, %s276
      %p280 = pneg %p274
      %p281 = scmp.eq.s32.totalorder %s29, 3
      %p282 = por %p280, %p281
      %p283 = scmp.ne.s32.totalorder %s275, %s278
      %p284 = scmp.eq.s32.totalorder %s29, 0
      %p285 = por %p283, %p284
      %p286 = scmp.ne.s32.totalorder %s275, %s278
      %p287 = scmp.eq.s32.totalorder %s34, 3
      %p288 = por %p286, %p287
      %p289 = scmp.ne.s32.totalorder %s278, %s279
      %p290 = scmp.eq.s32.totalorder %s34, 0
      %p291 = por %p289, %p290
      %p292 = scmp.ne.s32.totalorder %s278, %s279
      %p293 = scmp.eq.s32.totalorder %s35, 3
      %p294 = por %p292, %p293
      %p296 = scmp.ne.s32.totalorder %s279, %s295
      %p297 = scmp.eq.s32.totalorder %s35, 0
      %p298 = por %p296, %p297
      %s299 = ssub.s32 %s36, %s48
      %p300 = scmp.eq.s32.totalorder %s299, 0
      %s302 = sadd.s32 %s301, 1
      %s303 = scalar_select %p300, %s301, %s302
      %p306 = pneg %p300
      %p307 = scmp.eq.s32.totalorder %s29, 3
      %p308 = por %p306, %p307
      %p309 = scmp.ne.s32.totalorder %s301, %s304
      %p310 = scmp.eq.s32.totalorder %s29, 0
      %p311 = por %p309, %p310
      %p312 = scmp.ne.s32.totalorder %s301, %s304
      %p313 = scmp.eq.s32.totalorder %s34, 3
      %p314 = por %p312, %p313
      %p315 = scmp.ne.s32.totalorder %s304, %s305
      %p316 = scmp.eq.s32.totalorder %s34, 0
      %p317 = por %p315, %p316
      %p318 = scmp.ne.s32.totalorder %s304, %s305
      %p319 = scmp.eq.s32.totalorder %s35, 3
      %p320 = por %p318, %p319
      %p322 = scmp.ne.s32.totalorder %s305, %s321
      %p323 = scmp.eq.s32.totalorder %s35, 0
      %p324 = por %p322, %p323
      %s325 = ssub.s32 %s36, %s48
      %p326 = scmp.eq.s32.totalorder %s325, 0
      %s328 = sadd.s32 %s327, 1
      %s329 = scalar_select %p326, %s327, %s328
      %p332 = pneg %p326
      %p333 = scmp.eq.s32.totalorder %s29, 3
      %p334 = por %p332, %p333
      %p335 = scmp.ne.s32.totalorder %s327, %s330
      %p336 = scmp.eq.s32.totalorder %s29, 0
      %p337 = por %p335, %p336
      %p338 = scmp.ne.s32.totalorder %s327, %s330
      %p339 = scmp.eq.s32.totalorder %s34, 3
      %p340 = por %p338, %p339
      %p341 = scmp.ne.s32.totalorder %s330, %s331
      %p342 = scmp.eq.s32.totalorder %s34, 0
      %p343 = por %p341, %p342
      %p344 = scmp.ne.s32.totalorder %s330, %s331
      %p345 = scmp.eq.s32.totalorder %s35, 3
      %p346 = por %p344, %p345
      %p348 = scmp.ne.s32.totalorder %s331, %s347
      %p349 = scmp.eq.s32.totalorder %s35, 0
      %p350 = por %p348, %p349
      %s351 = ssub.s32 %s36, %s48
      %p352 = scmp.eq.s32.totalorder %s351, 0
      %s354 = sadd.s32 %s353, 1
      %s355 = scalar_select %p352, %s353, %s354
      %p358 = pneg %p352
      %p359 = scmp.eq.s32.totalorder %s29, 3
      %p360 = por %p358, %p359
      %p361 = scmp.ne.s32.totalorder %s353, %s356
      %p362 = scmp.eq.s32.totalorder %s29, 0
      %p363 = por %p361, %p362
      %p364 = scmp.ne.s32.totalorder %s353, %s356
      %p365 = scmp.eq.s32.totalorder %s34, 3
      %p366 = por %p364, %p365
      %p367 = scmp.ne.s32.totalorder %s356, %s357
      %p368 = scmp.eq.s32.totalorder %s34, 0
      %p369 = por %p367, %p368
      %p370 = scmp.ne.s32.totalorder %s356, %s357
      %p371 = scmp.eq.s32.totalorder %s35, 3
      %p372 = por %p370, %p371
      %p374 = scmp.ne.s32.totalorder %s357, %s373
      %p375 = scmp.eq.s32.totalorder %s35, 0
      %p376 = por %p374, %p375
      %s377 = ssub.s32 %s36, %s48
      %p378 = scmp.eq.s32.totalorder %s377, 0
      %s380 = sadd.s32 %s379, 1
      %s381 = scalar_select %p378, %s379, %s380
      %p384 = pneg %p378
      %p385 = scmp.eq.s32.totalorder %s29, 3
      %p386 = por %p384, %p385
      %p387 = scmp.ne.s32.totalorder %s379, %s382
      %p388 = scmp.eq.s32.totalorder %s29, 0
      %p389 = por %p387, %p388
      %p390 = scmp.ne.s32.totalorder %s379, %s382
      %p391 = scmp.eq.s32.totalorder %s34, 3
      %p392 = por %p390, %p391
      %p393 = scmp.ne.s32.totalorder %s382, %s383
      %p394 = scmp.eq.s32.totalorder %s34, 0
      %p395 = por %p393, %p394
      %p396 = scmp.ne.s32.totalorder %s382, %s383
      %p397 = scmp.eq.s32.totalorder %s35, 3
      %p398 = por %p396, %p397
      %p400 = scmp.ne.s32.totalorder %s383, %s399
      %p401 = scmp.eq.s32.totalorder %s35, 0
      %p402 = por %p400, %p401
      %s403 = ssub.s32 %s36, %s48
      %p404 = scmp.eq.s32.totalorder %s403, 0
      %s406 = sadd.s32 %s405, 1
      %s407 = scalar_select %p404, %s405, %s406
      %p410 = pneg %p404
      %p411 = scmp.eq.s32.totalorder %s29, 3
      %p412 = por %p410, %p411
      %p413 = scmp.ne.s32.totalorder %s405, %s408
      %p414 = scmp.eq.s32.totalorder %s29, 0
      %p415 = por %p413, %p414
      %p416 = scmp.ne.s32.totalorder %s405, %s408
      %p417 = scmp.eq.s32.totalorder %s34, 3
      %p418 = por %p416, %p417
      %p419 = scmp.ne.s32.totalorder %s408, %s409
      %p420 = scmp.eq.s32.totalorder %s34, 0
      %p421 = por %p419, %p420
      %p422 = scmp.ne.s32.totalorder %s408, %s409
      %p423 = scmp.eq.s32.totalorder %s35, 3
      %p424 = por %p422, %p423
      %p426 = scmp.ne.s32.totalorder %s409, %s425
      %p427 = scmp.eq.s32.totalorder %s35, 0
      %p428 = por %p426, %p427
      %s429 = ssub.s32 %s36, %s48
      %p430 = scmp.eq.s32.totalorder %s429, 0
      %s432 = sadd.s32 %s431, 1
      %s433 = scalar_select %p430, %s431, %s432
      %p436 = pneg %p430
      %p437 = scmp.eq.s32.totalorder %s29, 3
      %p438 = por %p436, %p437
      %p439 = scmp.ne.s32.totalorder %s431, %s434
      %p440 = scmp.eq.s32.totalorder %s29, 0
      %p441 = por %p439, %p440
      %p442 = scmp.ne.s32.totalorder %s431, %s434
      %p443 = scmp.eq.s32.totalorder %s34, 3
      %p444 = por %p442, %p443
      %p445 = scmp.ne.s32.totalorder %s434, %s435
      %p446 = scmp.eq.s32.totalorder %s34, 0
      %p447 = por %p445, %p446
      %p448 = scmp.ne.s32.totalorder %s434, %s435
      %p449 = scmp.eq.s32.totalorder %s35, 3
      %p450 = por %p448, %p449
      %p452 = scmp.ne.s32.totalorder %s435, %s451
      %p453 = scmp.eq.s32.totalorder %s35, 0
      %p454 = por %p452, %p453
      %s455 = ssub.s32 %s36, %s48
      %p456 = scmp.eq.s32.totalorder %s455, 0
      %s458 = sadd.s32 %s457, 1
      %s459 = scalar_select %p456, %s457, %s458
      %p462 = pneg %p456
      %p463 = scmp.eq.s32.totalorder %s29, 3
      %p464 = por %p462, %p463
      %p465 = scmp.ne.s32.totalorder %s457, %s460
      %p466 = scmp.eq.s32.totalorder %s29, 0
      %p467 = por %p465, %p466
      %p468 = scmp.ne.s32.totalorder %s457, %s460
      %p469 = scmp.eq.s32.totalorder %s34, 3
      %p470 = por %p468, %p469
      %p471 = scmp.ne.s32.totalorder %s460, %s461
      %p472 = scmp.eq.s32.totalorder %s34, 0
      %p473 = por %p471, %p472
      %p474 = scmp.ne.s32.totalorder %s460, %s461
      %p475 = scmp.eq.s32.totalorder %s35, 3
      %p476 = por %p474, %p475
      %p478 = scmp.ne.s32.totalorder %s461, %s477
      %p479 = scmp.eq.s32.totalorder %s35, 0
      %p480 = por %p478, %p479
      %s481 = ssub.s32 %s36, %s48
      %p482 = scmp.eq.s32.totalorder %s481, 0
      %s484 = sadd.s32 %s483, 1
      %s485 = scalar_select %p482, %s483, %s484
      %p488 = pneg %p482
      %p489 = scmp.eq.s32.totalorder %s29, 3
      %p490 = por %p488, %p489
      %p491 = scmp.ne.s32.totalorder %s483, %s486
      %p492 = scmp.eq.s32.totalorder %s29, 0
      %p493 = por %p491, %p492
      %p494 = scmp.ne.s32.totalorder %s483, %s486
      %p495 = scmp.eq.s32.totalorder %s34, 3
      %p496 = por %p494, %p495
      %p497 = scmp.ne.s32.totalorder %s486, %s487
      %p498 = scmp.eq.s32.totalorder %s34, 0
      %p499 = por %p497, %p498
      %p500 = scmp.ne.s32.totalorder %s486, %s487
      %p501 = scmp.eq.s32.totalorder %s35, 3
      %p502 = por %p500, %p501
      %p504 = scmp.ne.s32.totalorder %s487, %s503
      %p505 = scmp.eq.s32.totalorder %s35, 0
      %p506 = por %p504, %p505
      %s507 = ssub.s32 %s36, %s48
      %p508 = scmp.eq.s32.totalorder %s507, 0
      %s510 = sadd.s32 %s509, 1
      %s511 = scalar_select %p508, %s509, %s510
      %p514 = pneg %p508
      %p515 = scmp.eq.s32.totalorder %s29, 3
      %p516 = por %p514, %p515
      %p517 = scmp.ne.s32.totalorder %s509, %s512
      %p518 = scmp.eq.s32.totalorder %s29, 0
      %p519 = por %p517, %p518
      %p520 = scmp.ne.s32.totalorder %s509, %s512
      %p521 = scmp.eq.s32.totalorder %s34, 3
      %p522 = por %p520, %p521
      %p523 = scmp.ne.s32.totalorder %s512, %s513
      %p524 = scmp.eq.s32.totalorder %s34, 0
      %p525 = por %p523, %p524
      %p526 = scmp.ne.s32.totalorder %s512, %s513
      %p527 = scmp.eq.s32.totalorder %s35, 3
      %p528 = por %p526, %p527
      %p530 = scmp.ne.s32.totalorder %s513, %s529
      %p531 = scmp.eq.s32.totalorder %s35, 0
      %p532 = por %p530, %p531
      %s533 = ssub.s32 %s36, %s48
      %p534 = scmp.eq.s32.totalorder %s533, 0
      %s536 = sadd.s32 %s535, 1
      %s537 = scalar_select %p534, %s535, %s536
      %p540 = pneg %p534
      %p541 = scmp.eq.s32.totalorder %s29, 3
      %p542 = por %p540, %p541
      %p543 = scmp.ne.s32.totalorder %s535, %s538
      %p544 = scmp.eq.s32.totalorder %s29, 0
      %p545 = por %p543, %p544
      %p546 = scmp.ne.s32.totalorder %s535, %s538
      %p547 = scmp.eq.s32.totalorder %s34, 3
      %p548 = por %p546, %p547
      %p549 = scmp.ne.s32.totalorder %s538, %s539
      %p550 = scmp.eq.s32.totalorder %s34, 0
      %p551 = por %p549, %p550
      %p552 = scmp.ne.s32.totalorder %s538, %s539
      %p553 = scmp.eq.s32.totalorder %s35, 3
      %p554 = por %p552, %p553
      %p556 = scmp.ne.s32.totalorder %s539, %s555
      %p557 = scmp.eq.s32.totalorder %s35, 0
      %p558 = por %p556, %p557
      %s559 = ssub.s32 %s37, %s44
      %p560 = scmp.eq.s32.totalorder %s559, 0
      %s562 = sadd.s32 %s561, 1
      %s563 = scalar_select %p560, %s561, %s562
      %p566 = pneg %p560
      %p567 = scmp.eq.s32.totalorder %s29, 3
      %p568 = por %p566, %p567
      %p569 = scmp.ne.s32.totalorder %s561, %s564
      %p570 = scmp.eq.s32.totalorder %s29, 0
      %p571 = por %p569, %p570
      %p572 = scmp.ne.s32.totalorder %s561, %s564
      %p573 = scmp.eq.s32.totalorder %s34, 3
      %p574 = por %p572, %p573
      %p575 = scmp.ne.s32.totalorder %s564, %s565
      %p576 = scmp.eq.s32.totalorder %s34, 0
      %p577 = por %p575, %p576
      %p578 = scmp.ne.s32.totalorder %s564, %s565
      %p579 = scmp.eq.s32.totalorder %s35, 3
      %p580 = por %p578, %p579
      %p582 = scmp.ne.s32.totalorder %s565, %s581
      %p583 = scmp.eq.s32.totalorder %s35, 0
      %p584 = por %p582, %p583
      %p585 = scmp.le.s32.totalorder 1, %s29
      %p586 = scmp.lt.s32.totalorder %s29, 5
      %p587 = pnand %p585, %p586
      %p588 = pneg %p587
      // Predicated region
      $region9: #{tpu_custom_call.1} parent=5 // pred_check
        _
      $region10: #{tpu_custom_call.1} parent=5 // pred_check_branch
        %590 = sbr.rel (%p587) target = $region12
      $region11: #{tpu_custom_call.1} parent=5 // pred_region
        %s591 = ssub.s32 %s29, 1
        // Predicated region
        $region13: #{tpu_custom_call.1} parent=11 // pred_check
          %p592 = pneg %p166
        $region14: #{tpu_custom_call.1} parent=11 // pred_check_branch
          %594 = sbr.rel (%p592) target = $region16
        $region15: #{tpu_custom_call.1} parent=11 // pred_region
          _
        $region16: #{tpu_custom_call.1} parent=11 // pred_fallthru
          _
        // Predicated region
        $region17: #{tpu_custom_call.1} parent=11 // pred_check
          %p595 = pneg %p187
        $region18: #{tpu_custom_call.1} parent=11 // pred_check_branch
          %597 = sbr.rel (%p595) target = $region20
        $region19: #{tpu_custom_call.1} parent=11 // pred_region
          _
        $region20: #{tpu_custom_call.1} parent=11 // pred_fallthru
          _
      $region12: #{tpu_custom_call.1} parent=5 // pred_fallthru
        _
      %p598 = scmp.lt.s32.totalorder %s29, 4
      // Predicated region
      $region21: #{tpu_custom_call.1} parent=5 // pred_check
        %p599 = pneg %p598
      $region22: #{tpu_custom_call.1} parent=5 // pred_check_branch
        %601 = sbr.rel (%p599) target = $region24
      $region23: #{tpu_custom_call.1} parent=5 // pred_region
        // Predicated region
        $region25: #{tpu_custom_call.1} parent=23 // pred_check
          %p602 = pneg %p61
        $region26: #{tpu_custom_call.1} parent=23 // pred_check_branch
          %604 = sbr.rel (%p602) target = $region28
        $region27: #{tpu_custom_call.1} parent=23 // pred_region
          %p605 = scmp.lt.s32.totalorder %s37, 1
          %s606 = scalar_select %p605, %s37, 1
          %s607 = smul.addr %s606, 8
          %s608 = scalar_lea.vmem %s0, %s607
        $region28: #{tpu_custom_call.1} parent=23 // pred_fallthru
          _
        // Predicated region
        $region29: #{tpu_custom_call.1} parent=23 // pred_check
          %p609 = pneg %p87
        $region30: #{tpu_custom_call.1} parent=23 // pred_check_branch
          %611 = sbr.rel (%p609) target = $region32
        $region31: #{tpu_custom_call.1} parent=23 // pred_region
          %p612 = scmp.lt.s32.totalorder %s37, 1
          %s613 = scalar_select %p612, %s37, 1
          %s614 = scalar_lea.vmem %s1, %s613
        $region32: #{tpu_custom_call.1} parent=23 // pred_fallthru
          _
        // Predicated region
        $region33: #{tpu_custom_call.1} parent=23 // pred_check
          %p615 = pneg %p113
        $region34: #{tpu_custom_call.1} parent=23 // pred_check_branch
          %617 = sbr.rel (%p615) target = $region36
        $region35: #{tpu_custom_call.1} parent=23 // pred_region
          %p618 = scmp.lt.s32.totalorder %s37, 1
          %s619 = scalar_select %p618, %s37, 1
          %s620 = scalar_lea.vmem %s2, %s619
        $region36: #{tpu_custom_call.1} parent=23 // pred_fallthru
          _
        // Predicated region
        $region37: #{tpu_custom_call.1} parent=23 // pred_check
          %p621 = pneg %p139
        $region38: #{tpu_custom_call.1} parent=23 // pred_check_branch
          %623 = sbr.rel (%p621) target = $region40
        $region39: #{tpu_custom_call.1} parent=23 // pred_region
          %p624 = scmp.lt.s32.totalorder %s37, 1
          %s625 = scalar_select %p624, %s37, 1
          %s626 = smul.addr %s625, 8
          %s627 = scalar_lea.vmem %s3, %s626
        $region40: #{tpu_custom_call.1} parent=23 // pred_fallthru
          _
        // Predicated region
        $region41: #{tpu_custom_call.1} parent=23 // pred_check
          %p628 = pneg %p207
        $region42: #{tpu_custom_call.1} parent=23 // pred_check_branch
          %630 = sbr.rel (%p628) target = $region44
        $region43: #{tpu_custom_call.1} parent=23 // pred_region
          %p631 = scmp.lt.s32.totalorder %s36, 1
          %s632 = scalar_select %p631, %s36, 1
          %s633 = scalar_lea.vmem %s6, %s632
        $region44: #{tpu_custom_call.1} parent=23 // pred_fallthru
          _
        // Predicated region
        $region45: #{tpu_custom_call.1} parent=23 // pred_check
          %p634 = pneg %p233
        $region46: #{tpu_custom_call.1} parent=23 // pred_check_branch
          %636 = sbr.rel (%p634) target = $region48
        $region47: #{tpu_custom_call.1} parent=23 // pred_region
          %p637 = scmp.lt.s32.totalorder %s36, 1
          %s638 = scalar_select %p637, %s36, 1
          %s639 = scalar_lea.vmem %s7, %s638
        $region48: #{tpu_custom_call.1} parent=23 // pred_fallthru
          _
        // Predicated region
        $region49: #{tpu_custom_call.1} parent=23 // pred_check
          %p640 = pneg %p259
        $region50: #{tpu_custom_call.1} parent=23 // pred_check_branch
          %642 = sbr.rel (%p640) target = $region52
        $region51: #{tpu_custom_call.1} parent=23 // pred_region
          %p643 = scmp.lt.s32.totalorder %s36, 1
          %s644 = scalar_select %p643, %s36, 1
          %s645 = smul.addr %s644, 4
          %s646 = smul.addr %s645, 4
          %s647 = scalar_lea.vmem %s8, %s646
        $region52: #{tpu_custom_call.1} parent=23 // pred_fallthru
          _
        // Predicated region
        $region53: #{tpu_custom_call.1} parent=23 // pred_check
          %p648 = pneg %p285
        $region54: #{tpu_custom_call.1} parent=23 // pred_check_branch
          %650 = sbr.rel (%p648) target = $region56
        $region55: #{tpu_custom_call.1} parent=23 // pred_region
          %p651 = scmp.lt.s32.totalorder %s36, 1
          %s652 = scalar_select %p651, %s36, 1
          %s653 = scalar_lea.vmem %s9, %s652
        $region56: #{tpu_custom_call.1} parent=23 // pred_fallthru
          _
        // Predicated region
        $region57: #{tpu_custom_call.1} parent=23 // pred_check
          %p654 = pneg %p311
        $region58: #{tpu_custom_call.1} parent=23 // pred_check_branch
          %656 = sbr.rel (%p654) target = $region60
        $region59: #{tpu_custom_call.1} parent=23 // pred_region
          %p657 = scmp.lt.s32.totalorder %s36, 1
          %s658 = scalar_select %p657, %s36, 1
          %s659 = smul.addr %s658, 4
          %s660 = smul.addr %s659, 4
          %s661 = scalar_lea.vmem %s10, %s660
        $region60: #{tpu_custom_call.1} parent=23 // pred_fallthru
          _
        // Predicated region
        $region61: #{tpu_custom_call.1} parent=23 // pred_check
          %p662 = pneg %p337
        $region62: #{tpu_custom_call.1} parent=23 // pred_check_branch
          %664 = sbr.rel (%p662) target = $region64
        $region63: #{tpu_custom_call.1} parent=23 // pred_region
          %p665 = scmp.lt.s32.totalorder %s36, 1
          %s666 = scalar_select %p665, %s36, 1
          %s667 = scalar_lea.vmem %s11, %s666
        $region64: #{tpu_custom_call.1} parent=23 // pred_fallthru
          _
        // Predicated region
        $region65: #{tpu_custom_call.1} parent=23 // pred_check
          %p668 = pneg %p363
        $region66: #{tpu_custom_call.1} parent=23 // pred_check_branch
          %670 = sbr.rel (%p668) target = $region68
        $region67: #{tpu_custom_call.1} parent=23 // pred_region
          %p671 = scmp.lt.s32.totalorder %s36, 1
          %s672 = scalar_select %p671, %s36, 1
          %s673 = scalar_lea.vmem %s12, %s672
        $region68: #{tpu_custom_call.1} parent=23 // pred_fallthru
          _
        // Predicated region
        $region69: #{tpu_custom_call.1} parent=23 // pred_check
          %p674 = pneg %p389
        $region70: #{tpu_custom_call.1} parent=23 // pred_check_branch
          %676 = sbr.rel (%p674) target = $region72
        $region71: #{tpu_custom_call.1} parent=23 // pred_region
          %p677 = scmp.lt.s32.totalorder %s36, 1
          %s678 = scalar_select %p677, %s36, 1
          %s679 = scalar_lea.vmem %s13, %s678
        $region72: #{tpu_custom_call.1} parent=23 // pred_fallthru
          _
        // Predicated region
        $region73: #{tpu_custom_call.1} parent=23 // pred_check
          %p680 = pneg %p415
        $region74: #{tpu_custom_call.1} parent=23 // pred_check_branch
          %682 = sbr.rel (%p680) target = $region76
        $region75: #{tpu_custom_call.1} parent=23 // pred_region
          %p683 = scmp.lt.s32.totalorder %s36, 1
          %s684 = scalar_select %p683, %s36, 1
          %s685 = smul.addr %s684, 4
          %s686 = smul.addr %s685, 4
          %s687 = scalar_lea.vmem %s14, %s686
        $region76: #{tpu_custom_call.1} parent=23 // pred_fallthru
          _
        // Predicated region
        $region77: #{tpu_custom_call.1} parent=23 // pred_check
          %p688 = pneg %p441
        $region78: #{tpu_custom_call.1} parent=23 // pred_check_branch
          %690 = sbr.rel (%p688) target = $region80
        $region79: #{tpu_custom_call.1} parent=23 // pred_region
          %p691 = scmp.lt.s32.totalorder %s36, 1
          %s692 = scalar_select %p691, %s36, 1
          %s693 = scalar_lea.vmem %s15, %s692
        $region80: #{tpu_custom_call.1} parent=23 // pred_fallthru
          _
        // Predicated region
        $region81: #{tpu_custom_call.1} parent=23 // pred_check
          %p694 = pneg %p467
        $region82: #{tpu_custom_call.1} parent=23 // pred_check_branch
          %696 = sbr.rel (%p694) target = $region84
        $region83: #{tpu_custom_call.1} parent=23 // pred_region
          %p697 = scmp.lt.s32.totalorder %s36, 1
          %s698 = scalar_select %p697, %s36, 1
          %s699 = smul.addr %s698, 16
          %s700 = smul.addr %s699, 4
          %s701 = scalar_lea.vmem %s16, %s700
        $region84: #{tpu_custom_call.1} parent=23 // pred_fallthru
          _
        // Predicated region
        $region85: #{tpu_custom_call.1} parent=23 // pred_check
          %p702 = pneg %p493
        $region86: #{tpu_custom_call.1} parent=23 // pred_check_branch
          %704 = sbr.rel (%p702) target = $region88
        $region87: #{tpu_custom_call.1} parent=23 // pred_region
          %p705 = scmp.lt.s32.totalorder %s36, 1
          %s706 = scalar_select %p705, %s36, 1
          %s707 = scalar_lea.vmem %s17, %s706
        $region88: #{tpu_custom_call.1} parent=23 // pred_fallthru
          _
        // Predicated region
        $region89: #{tpu_custom_call.1} parent=23 // pred_check
          %p708 = pneg %p519
        $region90: #{tpu_custom_call.1} parent=23 // pred_check_branch
          %710 = sbr.rel (%p708) target = $region92
        $region91: #{tpu_custom_call.1} parent=23 // pred_region
          %p711 = scmp.lt.s32.totalorder %s36, 1
          %s712 = scalar_select %p711, %s36, 1
          %s713 = smul.addr %s712, 4
          %s714 = smul.addr %s713, 4
          %s715 = scalar_lea.vmem %s18, %s714
        $region92: #{tpu_custom_call.1} parent=23 // pred_fallthru
          _
        // Predicated region
        $region93: #{tpu_custom_call.1} parent=23 // pred_check
          %p716 = pneg %p545
        $region94: #{tpu_custom_call.1} parent=23 // pred_check_branch
          %718 = sbr.rel (%p716) target = $region96
        $region95: #{tpu_custom_call.1} parent=23 // pred_region
          %p719 = scmp.lt.s32.totalorder %s36, 1
          %s720 = scalar_select %p719, %s36, 1
          %s721 = scalar_lea.vmem %s19, %s720
        $region96: #{tpu_custom_call.1} parent=23 // pred_fallthru
          _
      $region24: #{tpu_custom_call.1} parent=5 // pred_fallthru
        _
      %p722 = scmp.le.s32.totalorder 1, %s29
      %p723 = scmp.lt.s32.totalorder %s29, 5
      %p724 = pnand %p722, %p723
      %p725 = pneg %p724
      // Predicated region
      $region97: #{tpu_custom_call.1} parent=5 // pred_check
        _
      $region98: #{tpu_custom_call.1} parent=5 // pred_check_branch
        %727 = sbr.rel (%p724) target = $region100
      $region99: #{tpu_custom_call.1} parent=5 // pred_region
        %s728 = ssub.s32 %s29, 1
        %p729 = scmp.lt.s32.totalorder %s39, 1
        %s730 = scalar_select %p729, %s39, 1
        %s731 = smul.addr %s730, 8
        %s732 = scalar_lea.vmem %s0, %s731
        %p733 = pneg %p67
        %p734 = pneg %p64
        %p735 = scmp.lt.s32.totalorder %s39, 1
        %s736 = scalar_select %p735, %s39, 1
        %s737 = scalar_lea.vmem %s1, %s736
        %p738 = pneg %p93
        %p739 = pneg %p90
        %p740 = scmp.lt.s32.totalorder %s39, 1
        %s741 = scalar_select %p740, %s39, 1
        %s742 = scalar_lea.vmem %s2, %s741
        %p743 = pneg %p119
        %p744 = pneg %p116
        %p745 = scmp.lt.s32.totalorder %s39, 1
        %s746 = scalar_select %p745, %s39, 1
        %s747 = smul.addr %s746, 8
        %s748 = scalar_lea.vmem %s3, %s747
        %p749 = pneg %p145
        %p750 = pneg %p142
        %p751 = pneg %p166
        %p752 = pneg %p163
        %p753 = pneg %p187
        %p754 = pneg %p184
        %p755 = scmp.lt.s32.totalorder %s38, 1
        %s756 = scalar_select %p755, %s38, 1
        %s757 = scalar_lea.vmem %s6, %s756
        %p758 = pneg %p213
        %p759 = pneg %p210
        %p760 = scmp.lt.s32.totalorder %s38, 1
        %s761 = scalar_select %p760, %s38, 1
        %s762 = scalar_lea.vmem %s7, %s761
        %p763 = pneg %p239
        %p764 = pneg %p236
        %p765 = scmp.lt.s32.totalorder %s38, 1
        %s766 = scalar_select %p765, %s38, 1
        %s767 = smul.addr %s766, 4
        %s768 = smul.addr %s767, 4
        %s769 = scalar_lea.vmem %s8, %s768
        %p770 = pneg %p265
        %p771 = pneg %p262
        %p772 = scmp.lt.s32.totalorder %s38, 1
        %s773 = scalar_select %p772, %s38, 1
        %s774 = scalar_lea.vmem %s9, %s773
        %p775 = pneg %p291
        %p776 = pneg %p288
        %p777 = scmp.lt.s32.totalorder %s38, 1
        %s778 = scalar_select %p777, %s38, 1
        %s779 = smul.addr %s778, 4
        %s780 = smul.addr %s779, 4
        %s781 = scalar_lea.vmem %s10, %s780
        %p782 = pneg %p317
        %p783 = pneg %p314
        %p784 = scmp.lt.s32.totalorder %s38, 1
        %s785 = scalar_select %p784, %s38, 1
        %s786 = scalar_lea.vmem %s11, %s785
        %p787 = pneg %p343
        %p788 = pneg %p340
        %p789 = scmp.lt.s32.totalorder %s38, 1
        %s790 = scalar_select %p789, %s38, 1
        %s791 = scalar_lea.vmem %s12, %s790
        %p792 = pneg %p369
        %p793 = pneg %p366
        %p794 = scmp.lt.s32.totalorder %s38, 1
        %s795 = scalar_select %p794, %s38, 1
        %s796 = scalar_lea.vmem %s13, %s795
        %p797 = pneg %p395
        %p798 = pneg %p392
        %p799 = scmp.lt.s32.totalorder %s38, 1
        %s800 = scalar_select %p799, %s38, 1
        %s801 = smul.addr %s800, 4
        %s802 = smul.addr %s801, 4
        %s803 = scalar_lea.vmem %s14, %s802
        %p804 = pneg %p421
        %p805 = pneg %p418
        %p806 = scmp.lt.s32.totalorder %s38, 1
        %s807 = scalar_select %p806, %s38, 1
        %s808 = scalar_lea.vmem %s15, %s807
        %p809 = pneg %p447
        %p810 = pneg %p444
        %p811 = scmp.lt.s32.totalorder %s38, 1
        %s812 = scalar_select %p811, %s38, 1
        %s813 = smul.addr %s812, 16
        %s814 = smul.addr %s813, 4
        %s815 = scalar_lea.vmem %s16, %s814
        %p816 = pneg %p473
        %p817 = pneg %p470
        %p818 = scmp.lt.s32.totalorder %s38, 1
        %s819 = scalar_select %p818, %s38, 1
        %s820 = scalar_lea.vmem %s17, %s819
        %p821 = pneg %p499
        %p822 = pneg %p496
        %p823 = scmp.lt.s32.totalorder %s38, 1
        %s824 = scalar_select %p823, %s38, 1
        %s825 = smul.addr %s824, 4
        %s826 = smul.addr %s825, 4
        %s827 = scalar_lea.vmem %s18, %s826
        %p828 = pneg %p525
        %p829 = pneg %p522
        %p830 = scmp.lt.s32.totalorder %s38, 1
        %s831 = scalar_select %p830, %s38, 1
        %s832 = scalar_lea.vmem %s19, %s831
        %p833 = pneg %p551
        %p834 = pneg %p548
        %p835 = pneg %p577
        %p836 = pneg %p574
        %s837 = sand.u32 %s564, 1
        %s838 = scalar_lea.sflag [#allocation9], %s837
        %s839 = sand.u32 %s564, 1
        %s840 = smul.addr %s839, 8
        %s841 = scalar_lea.vmem [#allocation8], %s840
        %p842 = scmp.lt.s32.totalorder %s39, 1
        %s843 = scalar_select %p842, %s39, 1
        %s844 = smul.addr %s843, 8
        %s845 = scalar_lea.vmem %s0, %s844
        %p846 = scmp.lt.s32.totalorder %s39, 1
        %s847 = scalar_select %p846, %s39, 1
        %s848 = scalar_lea.vmem %s1, %s847
        %p849 = scmp.lt.s32.totalorder %s39, 1
        %s850 = scalar_select %p849, %s39, 1
        %s851 = scalar_lea.vmem %s2, %s850
        %p852 = scmp.lt.s32.totalorder %s39, 1
        %s853 = scalar_select %p852, %s39, 1
        %s854 = smul.addr %s853, 8
        %s855 = scalar_lea.vmem %s3, %s854
        %p856 = scmp.lt.s32.totalorder %s38, 1
        %s857 = scalar_select %p856, %s38, 1
        %s858 = scalar_lea.vmem %s6, %s857
        %p859 = scmp.lt.s32.totalorder %s38, 1
        %s860 = scalar_select %p859, %s38, 1
        %s861 = scalar_lea.vmem %s7, %s860
        %p862 = scmp.lt.s32.totalorder %s38, 1
        %s863 = scalar_select %p862, %s38, 1
        %s864 = smul.addr %s863, 4
        %s865 = smul.addr %s864, 4
        %s866 = scalar_lea.vmem %s8, %s865
        %p867 = scmp.lt.s32.totalorder %s38, 1
        %s868 = scalar_select %p867, %s38, 1
        %s869 = scalar_lea.vmem %s9, %s868
        %p870 = scmp.lt.s32.totalorder %s38, 1
        %s871 = scalar_select %p870, %s38, 1
        %s872 = smul.addr %s871, 4
        %s873 = smul.addr %s872, 4
        %s874 = scalar_lea.vmem %s10, %s873
        %p875 = scmp.lt.s32.totalorder %s38, 1
        %s876 = scalar_select %p875, %s38, 1
        %s877 = scalar_lea.vmem %s11, %s876
        %p878 = scmp.lt.s32.totalorder %s38, 1
        %s879 = scalar_select %p878, %s38, 1
        %s880 = scalar_lea.vmem %s12, %s879
        %p881 = scmp.lt.s32.totalorder %s38, 1
        %s882 = scalar_select %p881, %s38, 1
        %s883 = scalar_lea.vmem %s13, %s882
        %p884 = scmp.lt.s32.totalorder %s38, 1
        %s885 = scalar_select %p884, %s38, 1
        %s886 = smul.addr %s885, 4
        %s887 = smul.addr %s886, 4
        %s888 = scalar_lea.vmem %s14, %s887
        %p889 = scmp.lt.s32.totalorder %s38, 1
        %s890 = scalar_select %p889, %s38, 1
        %s891 = scalar_lea.vmem %s15, %s890
        %p892 = scmp.lt.s32.totalorder %s38, 1
        %s893 = scalar_select %p892, %s38, 1
        %s894 = smul.addr %s893, 16
        %s895 = smul.addr %s894, 4
        %s896 = scalar_lea.vmem %s16, %s895
        %p897 = scmp.lt.s32.totalorder %s38, 1
        %s898 = scalar_select %p897, %s38, 1
        %s899 = scalar_lea.vmem %s17, %s898
        %p900 = scmp.lt.s32.totalorder %s38, 1
        %s901 = scalar_select %p900, %s38, 1
        %s902 = smul.addr %s901, 4
        %s903 = smul.addr %s902, 4
        %s904 = scalar_lea.vmem %s18, %s903
        %p905 = scmp.lt.s32.totalorder %s38, 1
        %s906 = scalar_select %p905, %s38, 1
        %s907 = scalar_lea.vmem %s19, %s906
        %p909 = scmp.eq.s32.totalorder %s38, 0
        // Predicated region
        $region101: #{tpu_custom_call.1} parent=99 // pred_check
          %p910 = pneg %p909
        $region102: #{tpu_custom_call.1} parent=99 // pred_check_branch
          %912 = sbr.rel (%p910) target = $region104
        $region103: #{tpu_custom_call.1} parent=99 // pred_region
          %v913 = vld [vmem:[%s845] sm:$0xff]
          %v914 = vpack.c.bf16 %v913, %v913
          %v915 = vld [vmem:[%s4] sm:$0xf]
          %v916 = vld [vmem:[%s4 + $0x4] sm:$0xf]
          %v917 = vld [vmem:[%s5] sm:$0x1]
          %v919 = vlaneseq
          %v920 = vshrl.u32 %v919, 7
          %v921 = vsub.s32 0, %v920
          %v922 = vrot.slane %v917, %v921
          %v926 = vunpack.c.l.b16 %v915
          %v927 = vunpack.c.l.b16 %v916
          %v928 = vpack.c.b16 %v927, %v926
          %vm930 = vcmask 130048
          %v932 = vsel %vm930, %v914, 0
          %934 = vmatprep.subr.bf16.mxu0 0
          %935 = vmatpush1.bf16.msra.mxu0 0
          %936 = vmatprep.subr.bf16.mxu0 0
          %937 = vmatpush1.bf16.msra.mxu0 0
          %938 = vmatprep.subr.bf16.mxu0 0
          %939 = vmatpush1.bf16.msra.mxu0 0
          %940 = vmatprep.subr.bf16.mxu0 0
          %941 = vmatpush1.bf16.msra.mxu0 0
          %942 = vmatprep.subr.bf16.mxu0 0
          %943 = vmatpush1.bf16.msra.mxu0 0
          %944 = vmatprep.subr.bf16.mxu0 0
          %945 = vmatpush1.bf16.msra.mxu0 0
          %946 = vmatprep.subr.bf16.mxu0 0
          %947 = vmatpush1.bf16.msra.mxu0 0
          %948 = vmatprep.subr.bf16.mxu0 0
          %949 = vmatpush1.bf16.msra.mxu0 %v928
          %950 = vmatprep.subr.bf16.mxu0 0
          %951 = vmatpush2.bf16.msra.mxu0 0
          %952 = vmatprep.subr.bf16.mxu0 0
          %953 = vmatpush2.bf16.msra.mxu0 0
          %954 = vmatprep.subr.bf16.mxu0 0
          %955 = vmatpush2.bf16.msra.mxu0 0
          %956 = vmatprep.subr.bf16.mxu0 0
          %957 = vmatpush2.bf16.msra.mxu0 0
          %958 = vmatprep.subr.bf16.mxu0 0
          %959 = vmatpush2.bf16.msra.mxu0 0
          %960 = vmatprep.subr.bf16.mxu0 0
          %961 = vmatpush2.bf16.msra.mxu0 0
          %962 = vmatprep.subr.bf16.mxu0 0
          %963 = vmatpush2.bf16.msra.mxu0 0
          %964 = vmatprep.subr.bf16.mxu0 0
          %965 = vmatpush2.bf16.msra.mxu0 0
          %966 = vmatprep.mubr.bf16.mxu0 0
          %967 = vmatmul.mubr.bf16.gmra.mxu0 %v932
          %v968 = vpop.f32.mrf.mxu0
          %v969 = vadd.f32 %v922, %v968
          %v970 = vpop.f32.mrf.mxu0
          %v971 = vpop.f32.mrf.mxu0
          %v972 = vpop.f32.mrf.mxu0
          %973 = vdwg.mxu0
          %s974 = smul.u32 %s39, 8
          %s975 = scalar_lea.vmem [#allocation2], %s974
          %vm976 = vcmask 261120
          %977 = vst.msk [vmem:[%s975] sm:$0xff] %vm976, %v969
          %v978 = vld [vmem:[%s851] sm:$0x1]
          %v979 = vld [vmem:[%s855] sm:$0xff]
          %v980 = vlaneseq
          %v981 = vand.u32 %v980, 127
          %vm982 = vcmp.gt.f32.partialorder %v979, 0.5
          %vm983 = vcmp.gt.f32.partialorder %v978, 0.5
          %v984 = vsel %vm982, 1, 0
          %985 = vset.pattern.permute.xlu0 0
          %986 = vperm.xlu0 %985, %v984
          %v987 = vpop.permute.xlu0 %986
          %vm988 = vcmp.eq.s32.totalorder %v987, 1
          %v989 = vsel %vm983, 1, 0
          %v990 = vlaneseq
          %v991 = vshrl.u32 %v990, 7
          %v992 = vsub.s32 0, %v991
          %v993 = vrot.slane %v989, %v992
          %vm994 = vcmp.eq.s32.totalorder %v993, 1
          %vm995 = vmand %vm988, %vm994
          %vm996 = vcmp.eq.s32.totalorder %v981, 0
          %v997 = vsel %vm996, 1, 0
          %vm998 = vcmp.eq.s32.totalorder %v997, 1
          %vm999 = vmor %vm995, %vm998
          %v1000 = vsel %vm999, 0.0, -1e+30
          %s1001 = scalar_lea.vmem [#allocation3], %s974
          %vm1002 = vcmask 64512
          %1003 = vst.msk [vmem:[%s1001] sm:$0xff] %vm1002, %v1000
        $region104: #{tpu_custom_call.1} parent=99 // pred_fallthru
          _
        %s1004 = smul.u32 %s39, 8
        %s1005 = scalar_lea.vmem [#allocation2], %s1004
        %v1006 = vld [vmem:[%s1005] sm:$0xff]
        %s1007 = scalar_lea.vmem [#allocation3], %s1004
        %v1008 = vld [vmem:[%s1007] sm:$0xff]
        %v1009 = vld [vmem:[%s848] sm:$0x1]
        %v1010 = vxor.u32 %v1009, 2147483648
        %v1011 = vmul.f32 %v1010, 1.442695
        %v1012 = vpow.pop %v1011
        %v1013 = vadd.f32 %v1012, 1.0
        %v1014 = vrcp.pop %v1013
        %v1015 = vmul.f32 1.0, %v1014
        %v1016 = vmul.f32 %v1009, %v1015
        %v1017 = vpack.c.bf16 %v1016, %v1016
        %v1018 = vld [vmem:[%s904] sm:$0xf]
        %v1019 = vld [vmem:[%s904 + $0x4] sm:$0xf]
        %v1020 = vld [vmem:[%s904 + $0x8] sm:$0xf]
        %v1021 = vld [vmem:[%s904 + $0xc] sm:$0xf]
        %v1022 = vld [vmem:[%s907] sm:$0x1]
        %v1027 = vunpack.c.l.b16 %v1018
        %v1028 = vunpack.c.l.b16 %v1019
        %v1029 = vunpack.c.l.b16 %v1020
        %v1030 = vunpack.c.l.b16 %v1021
        %v1031 = vpack.c.b16 %v1028, %v1027
        %v1032 = vpack.c.b16 %v1030, %v1029
        %vm1035 = vcmask 261120
        %v1037 = vsel %vm1035, %v1017, 0
        %1039 = vmatprep.subr.bf16.mxu0 0
        %1040 = vmatpush1.bf16.msra.mxu0 0
        %1041 = vmatprep.subr.bf16.mxu0 0
        %1042 = vmatpush1.bf16.msra.mxu0 0
        %1043 = vmatprep.subr.bf16.mxu0 0
        %1044 = vmatpush1.bf16.msra.mxu0 0
        %1045 = vmatprep.subr.bf16.mxu0 0
        %1046 = vmatpush1.bf16.msra.mxu0 0
        %1047 = vmatprep.subr.bf16.mxu0 0
        %1048 = vmatpush1.bf16.msra.mxu0 0
        %1049 = vmatprep.subr.bf16.mxu0 0
        %1050 = vmatpush1.bf16.msra.mxu0 0
        %1051 = vmatprep.subr.bf16.mxu0 0
        %1052 = vmatpush1.bf16.msra.mxu0 %v1032
        %1053 = vmatprep.subr.bf16.mxu0 0
        %1054 = vmatpush1.bf16.msra.mxu0 %v1031
        %1055 = vmatprep.subr.bf16.mxu0 0
        %1056 = vmatpush2.bf16.msra.mxu0 0
        %1057 = vmatprep.subr.bf16.mxu0 0
        %1058 = vmatpush2.bf16.msra.mxu0 0
        %1059 = vmatprep.subr.bf16.mxu0 0
        %1060 = vmatpush2.bf16.msra.mxu0 0
        %1061 = vmatprep.subr.bf16.mxu0 0
        %1062 = vmatpush2.bf16.msra.mxu0 0
        %1063 = vmatprep.subr.bf16.mxu0 0
        %1064 = vmatpush2.bf16.msra.mxu0 0
        %1065 = vmatprep.subr.bf16.mxu0 0
        %1066 = vmatpush2.bf16.msra.mxu0 0
        %1067 = vmatprep.subr.bf16.mxu0 0
        %1068 = vmatpush2.bf16.msra.mxu0 0
        %1069 = vmatprep.subr.bf16.mxu0 0
        %1070 = vmatpush2.bf16.msra.mxu0 0
        %1071 = vmatprep.mubr.bf16.mxu0 0
        %1072 = vmatmul.mubr.bf16.gmra.mxu0 %v1037
        %v1073 = vpop.f32.mrf.mxu0
        %v1074 = vadd.f32 %v1022, %v1073
        %v1075 = vpop.f32.mrf.mxu0
        %v1076 = vpop.f32.mrf.mxu0
        %v1077 = vpop.f32.mrf.mxu0
        %1078 = vdwg.mxu0
        %v1079 = vld [vmem:[%s858] sm:$0x1]
        %v1080 = vld [vmem:[%s861] sm:$0x1]
        %v1081 = vsel %vm1035, %v1006, 0.0
        %1082 = vadd.xlane.f32.xlu0 %v1081
        %v1083 = vpop.xlane.xlu0 %1082
        %v1084 = vrcp.pop 32.0
        %v1085 = vmul.f32 %v1083, %v1084
        %v1086 = vsub.f32 %v1006, %v1085
        %v1087 = vmul.f32 %v1086, %v1086
        %v1088 = vsel %vm1035, %v1087, 0.0
        %1089 = vadd.xlane.f32.xlu0 %v1088
        %v1090 = vpop.xlane.xlu0 %1089
        %v1091 = vmul.f32 %v1090, %v1084
        %v1092 = vadd.f32 %v1091, 1e-06
        %v1093 = vrsqrt.pop %v1092
        %v1094 = vmul.f32 %v1086, %v1093
        %v1096 = vlaneseq
        %v1097 = vshrl.u32 %v1096, 7
        %v1098 = vsub.s32 0, %v1097
        %v1099 = vrot.slane %v1079, %v1098
        %v1101 = vmul.f32 %v1094, %v1099
        %v1103 = vlaneseq
        %v1104 = vshrl.u32 %v1103, 7
        %v1105 = vsub.s32 0, %v1104
        %v1106 = vrot.slane %v1080, %v1105
        %v1108 = vadd.f32 %v1101, %v1106
        %v1109 = vpack.c.bf16 %v1108, %v1108
        %v1110 = vld [vmem:[%s866] sm:$0xf]
        %v1111 = vld [vmem:[%s866 + $0x4] sm:$0xf]
        %v1112 = vld [vmem:[%s866 + $0x8] sm:$0xf]
        %v1113 = vld [vmem:[%s866 + $0xc] sm:$0xf]
        %v1114 = vld [vmem:[%s869] sm:$0x1]
        %v1116 = vlaneseq
        %v1117 = vshrl.u32 %v1116, 7
        %v1118 = vsub.s32 0, %v1117
        %v1119 = vrot.slane %v1114, %v1118
        %v1125 = vunpack.c.l.b16 %v1110
        %v1126 = vunpack.c.l.b16 %v1111
        %v1127 = vunpack.c.l.b16 %v1112
        %v1128 = vunpack.c.l.b16 %v1113
        %v1129 = vpack.c.b16 %v1126, %v1125
        %v1130 = vpack.c.b16 %v1128, %v1127
        %v1134 = vsel %vm1035, %v1109, 0
        %1136 = vmatprep.subr.bf16.mxu0 0
        %1137 = vmatpush1.bf16.msra.mxu0 0
        %1138 = vmatprep.subr.bf16.mxu0 0
        %1139 = vmatpush1.bf16.msra.mxu0 0
        %1140 = vmatprep.subr.bf16.mxu0 0
        %1141 = vmatpush1.bf16.msra.mxu0 0
        %1142 = vmatprep.subr.bf16.mxu0 0
        %1143 = vmatpush1.bf16.msra.mxu0 0
        %1144 = vmatprep.subr.bf16.mxu0 0
        %1145 = vmatpush1.bf16.msra.mxu0 0
        %1146 = vmatprep.subr.bf16.mxu0 0
        %1147 = vmatpush1.bf16.msra.mxu0 0
        %1148 = vmatprep.subr.bf16.mxu0 0
        %1149 = vmatpush1.bf16.msra.mxu0 %v1130
        %1150 = vmatprep.subr.bf16.mxu0 0
        %1151 = vmatpush1.bf16.msra.mxu0 %v1129
        %1152 = vmatprep.subr.bf16.mxu0 0
        %1153 = vmatpush2.bf16.msra.mxu0 0
        %1154 = vmatprep.subr.bf16.mxu0 0
        %1155 = vmatpush2.bf16.msra.mxu0 0
        %1156 = vmatprep.subr.bf16.mxu0 0
        %1157 = vmatpush2.bf16.msra.mxu0 0
        %1158 = vmatprep.subr.bf16.mxu0 0
        %1159 = vmatpush2.bf16.msra.mxu0 0
        %1160 = vmatprep.subr.bf16.mxu0 0
        %1161 = vmatpush2.bf16.msra.mxu0 0
        %1162 = vmatprep.subr.bf16.mxu0 0
        %1163 = vmatpush2.bf16.msra.mxu0 0
        %1164 = vmatprep.subr.bf16.mxu0 0
        %1165 = vmatpush2.bf16.msra.mxu0 0
        %1166 = vmatprep.subr.bf16.mxu0 0
        %1167 = vmatpush2.bf16.msra.mxu0 0
        %1168 = vmatprep.mubr.bf16.mxu0 0
        %1169 = vmatmul.mubr.bf16.gmra.mxu0 %v1134
        %v1170 = vpop.f32.mrf.mxu0
        %v1171 = vadd.f32 %v1119, %v1170
        %v1172 = vpop.f32.mrf.mxu0
        %v1173 = vpop.f32.mrf.mxu0
        %v1174 = vpop.f32.mrf.mxu0
        %1175 = vdwg.mxu0
        %v1176 = vpack.c.bf16 %v1171, %v1171
        %vm1177 = vcmask 60416
        %1178 = vst.msk [vmem:[#allocation4] sm:$0xf] %vm1177, %v1176
        %v1180 = vunpack.c.l.b16 %v1176
        %v1181 = vpack.c.b16 %v1180, %v1180
        %1182 = vrot.lane.b32.xlu0 %v1181, 120
        %v1183 = vpop.permute.xlu0 %1182
        %s1185 = scalar_lea.vmem [#allocation4], 4
        %1186 = vst.msk [vmem:[%s1185] sm:$0xf] %vm1177, %v1183
        %1187 = vrot.lane.b32.xlu0 %v1181, 112
        %v1188 = vpop.permute.xlu0 %1187
        %s1190 = scalar_lea.vmem [#allocation4], 8
        %1191 = vst.msk [vmem:[%s1190] sm:$0xf] %vm1177, %v1188
        %1192 = vrot.lane.b32.xlu0 %v1181, 104
        %v1193 = vpop.permute.xlu0 %1192
        %s1195 = scalar_lea.vmem [#allocation4], 12
        %1196 = vst.msk [vmem:[%s1195] sm:$0xf] %vm1177, %v1193
        %v1197 = vld [vmem:[%s866] sm:$0xf]
        %v1198 = vld [vmem:[%s866 + $0x4] sm:$0xf]
        %v1199 = vld [vmem:[%s866 + $0x8] sm:$0xf]
        %v1200 = vld [vmem:[%s866 + $0xc] sm:$0xf]
        %v1201 = vld [vmem:[%s869] sm:$0x1]
        %v1203 = vlaneseq
        %v1204 = vshrl.u32 %v1203, 7
        %v1205 = vsub.s32 0, %v1204
        %v1206 = vrot.slane %v1201, %v1205
        %v1211 = vunpack.c.l.b16 %v1197
        %v1212 = vunpack.c.l.b16 %v1198
        %v1213 = vunpack.c.l.b16 %v1199
        %v1214 = vunpack.c.l.b16 %v1200
        %v1215 = vpack.c.b16 %v1212, %v1211
        %v1216 = vpack.c.b16 %v1214, %v1213
        %1217 = vrot.lane.b32.xlu0 %v1215, 96
        %v1218 = vpop.permute.xlu0 %1217
        %1219 = vrot.lane.b32.xlu0 %v1216, 96
        %v1220 = vpop.permute.xlu0 %1219
        %1223 = vrot.lane.b32.xlu0 %v1206, 96
        %v1224 = vpop.permute.xlu0 %1223
        %1226 = vmatprep.subr.bf16.mxu0 0
        %1227 = vmatpush1.bf16.msra.mxu0 0
        %1228 = vmatprep.subr.bf16.mxu0 0
        %1229 = vmatpush1.bf16.msra.mxu0 0
        %1230 = vmatprep.subr.bf16.mxu0 0
        %1231 = vmatpush1.bf16.msra.mxu0 0
        %1232 = vmatprep.subr.bf16.mxu0 0
        %1233 = vmatpush1.bf16.msra.mxu0 0
        %1234 = vmatprep.subr.bf16.mxu0 0
        %1235 = vmatpush1.bf16.msra.mxu0 0
        %1236 = vmatprep.subr.bf16.mxu0 0
        %1237 = vmatpush1.bf16.msra.mxu0 0
        %1238 = vmatprep.subr.bf16.mxu0 0
        %1239 = vmatpush1.bf16.msra.mxu0 %v1220
        %1240 = vmatprep.subr.bf16.mxu0 0
        %1241 = vmatpush1.bf16.msra.mxu0 %v1218
        %1242 = vmatprep.subr.bf16.mxu0 0
        %1243 = vmatpush2.bf16.msra.mxu0 0
        %1244 = vmatprep.subr.bf16.mxu0 0
        %1245 = vmatpush2.bf16.msra.mxu0 0
        %1246 = vmatprep.subr.bf16.mxu0 0
        %1247 = vmatpush2.bf16.msra.mxu0 0
        %1248 = vmatprep.subr.bf16.mxu0 0
        %1249 = vmatpush2.bf16.msra.mxu0 0
        %1250 = vmatprep.subr.bf16.mxu0 0
        %1251 = vmatpush2.bf16.msra.mxu0 0
        %1252 = vmatprep.subr.bf16.mxu0 0
        %1253 = vmatpush2.bf16.msra.mxu0 0
        %1254 = vmatprep.subr.bf16.mxu0 0
        %1255 = vmatpush2.bf16.msra.mxu0 0
        %1256 = vmatprep.subr.bf16.mxu0 0
        %1257 = vmatpush2.bf16.msra.mxu0 0
        %1258 = vmatprep.mubr.bf16.mxu0 0
        %1259 = vmatmul.mubr.bf16.gmra.mxu0 %v1134
        %v1260 = vpop.f32.mrf.mxu0
        %v1261 = vadd.f32 %v1224, %v1260
        %v1262 = vpop.f32.mrf.mxu0
        %v1263 = vpop.f32.mrf.mxu0
        %v1264 = vpop.f32.mrf.mxu0
        %1265 = vdwg.mxu0
        %v1266 = vpack.c.bf16 %v1261, %v1261
        %1267 = vst.msk [vmem:[#allocation5] sm:$0xf] %vm1177, %v1266
        %v1269 = vunpack.c.l.b16 %v1266
        %v1270 = vpack.c.b16 %v1269, %v1269
        %1271 = vrot.lane.b32.xlu0 %v1270, 120
        %v1272 = vpop.permute.xlu0 %1271
        %s1274 = scalar_lea.vmem [#allocation5], 4
        %1275 = vst.msk [vmem:[%s1274] sm:$0xf] %vm1177, %v1272
        %1276 = vrot.lane.b32.xlu0 %v1270, 112
        %v1277 = vpop.permute.xlu0 %1276
        %s1279 = scalar_lea.vmem [#allocation5], 8
        %1280 = vst.msk [vmem:[%s1279] sm:$0xf] %vm1177, %v1277
        %1281 = vrot.lane.b32.xlu0 %v1270, 104
        %v1282 = vpop.permute.xlu0 %1281
        %s1284 = scalar_lea.vmem [#allocation5], 12
        %1285 = vst.msk [vmem:[%s1284] sm:$0xf] %vm1177, %v1282
        %v1286 = vld [vmem:[%s866] sm:$0xf]
        %v1287 = vld [vmem:[%s866 + $0x4] sm:$0xf]
        %v1288 = vld [vmem:[%s866 + $0x8] sm:$0xf]
        %v1289 = vld [vmem:[%s866 + $0xc] sm:$0xf]
        %v1290 = vld [vmem:[%s869] sm:$0x1]
        %v1292 = vlaneseq
        %v1293 = vshrl.u32 %v1292, 7
        %v1294 = vsub.s32 0, %v1293
        %v1295 = vrot.slane %v1290, %v1294
        %v1300 = vunpack.c.l.b16 %v1286
        %v1301 = vunpack.c.l.b16 %v1287
        %v1302 = vunpack.c.l.b16 %v1288
        %v1303 = vunpack.c.l.b16 %v1289
        %v1304 = vpack.c.b16 %v1301, %v1300
        %v1305 = vpack.c.b16 %v1303, %v1302
        %1306 = vrot.lane.b32.xlu0 %v1304, 64
        %v1307 = vpop.permute.xlu0 %1306
        %1308 = vrot.lane.b32.xlu0 %v1305, 64
        %v1309 = vpop.permute.xlu0 %1308
        %1312 = vrot.lane.b32.xlu0 %v1295, 64
        %v1313 = vpop.permute.xlu0 %1312
        %1315 = vmatprep.subr.bf16.mxu0 0
        %1316 = vmatpush1.bf16.msra.mxu0 0
        %1317 = vmatprep.subr.bf16.mxu0 0
        %1318 = vmatpush1.bf16.msra.mxu0 0
        %1319 = vmatprep.subr.bf16.mxu0 0
        %1320 = vmatpush1.bf16.msra.mxu0 0
        %1321 = vmatprep.subr.bf16.mxu0 0
        %1322 = vmatpush1.bf16.msra.mxu0 0
        %1323 = vmatprep.subr.bf16.mxu0 0
        %1324 = vmatpush1.bf16.msra.mxu0 0
        %1325 = vmatprep.subr.bf16.mxu0 0
        %1326 = vmatpush1.bf16.msra.mxu0 0
        %1327 = vmatprep.subr.bf16.mxu0 0
        %1328 = vmatpush1.bf16.msra.mxu0 %v1309
        %1329 = vmatprep.subr.bf16.mxu0 0
        %1330 = vmatpush1.bf16.msra.mxu0 %v1307
        %1331 = vmatprep.subr.bf16.mxu0 0
        %1332 = vmatpush2.bf16.msra.mxu0 0
        %1333 = vmatprep.subr.bf16.mxu0 0
        %1334 = vmatpush2.bf16.msra.mxu0 0
        %1335 = vmatprep.subr.bf16.mxu0 0
        %1336 = vmatpush2.bf16.msra.mxu0 0
        %1337 = vmatprep.subr.bf16.mxu0 0
        %1338 = vmatpush2.bf16.msra.mxu0 0
        %1339 = vmatprep.subr.bf16.mxu0 0
        %1340 = vmatpush2.bf16.msra.mxu0 0
        %1341 = vmatprep.subr.bf16.mxu0 0
        %1342 = vmatpush2.bf16.msra.mxu0 0
        %1343 = vmatprep.subr.bf16.mxu0 0
        %1344 = vmatpush2.bf16.msra.mxu0 0
        %1345 = vmatprep.subr.bf16.mxu0 0
        %1346 = vmatpush2.bf16.msra.mxu0 0
        %1347 = vmatprep.mubr.bf16.mxu0 0
        %1348 = vmatmul.mubr.bf16.gmra.mxu0 %v1134
        %v1349 = vpop.f32.mrf.mxu0
        %v1350 = vadd.f32 %v1313, %v1349
        %v1351 = vpop.f32.mrf.mxu0
        %v1352 = vpop.f32.mrf.mxu0
        %v1353 = vpop.f32.mrf.mxu0
        %1354 = vdwg.mxu0
        %v1355 = vpack.c.bf16 %v1350, %v1350
        %1356 = vst.msk [vmem:[#allocation6] sm:$0xf] %vm1177, %v1355
        %v1358 = vunpack.c.l.b16 %v1355
        %v1359 = vpack.c.b16 %v1358, %v1358
        %1360 = vrot.lane.b32.xlu0 %v1359, 120
        %v1361 = vpop.permute.xlu0 %1360
        %s1363 = scalar_lea.vmem [#allocation6], 4
        %1364 = vst.msk [vmem:[%s1363] sm:$0xf] %vm1177, %v1361
        %1365 = vrot.lane.b32.xlu0 %v1359, 112
        %v1366 = vpop.permute.xlu0 %1365
        %s1368 = scalar_lea.vmem [#allocation6], 8
        %1369 = vst.msk [vmem:[%s1368] sm:$0xf] %vm1177, %v1366
        %1370 = vrot.lane.b32.xlu0 %v1359, 104
        %v1371 = vpop.permute.xlu0 %1370
        %s1373 = scalar_lea.vmem [#allocation6], 12
        %1374 = vst.msk [vmem:[%s1373] sm:$0xf] %vm1177, %v1371
        %v1375 = vld [vmem:[#allocation4] sm:$0xf]
        %v1376 = vld [vmem:[#allocation4 + $0x4] sm:$0xf]
        %v1377 = vld [vmem:[#allocation4 + $0x8] sm:$0xf]
        %v1378 = vld [vmem:[#allocation4 + $0xc] sm:$0xf]
        %v1379 = vld [vmem:[#allocation5] sm:$0xf]
        %v1380 = vld [vmem:[#allocation5 + $0x4] sm:$0xf]
        %v1381 = vld [vmem:[#allocation5 + $0x8] sm:$0xf]
        %v1382 = vld [vmem:[#allocation5 + $0xc] sm:$0xf]
        %vm1383 = vcmask 64512
        %v1385 = vsel %vm1383, %v1375, 0
        %v1388 = vsel %vm1383, %v1379, 0
        %1390 = vmatprep.subr.bf16.mxu0 0
        %1391 = vmatpush1.bf16.xpose.msra.mxu0 0
        %1392 = vmatprep.subr.bf16.mxu0 0
        %1393 = vmatpush1.bf16.xpose.msra.mxu0 0
        %1394 = vmatprep.subr.bf16.mxu0 0
        %1395 = vmatpush1.bf16.xpose.msra.mxu0 0
        %1396 = vmatprep.subr.bf16.mxu0 0
        %1397 = vmatpush1.bf16.xpose.msra.mxu0 0
        %1398 = vmatprep.subr.bf16.mxu0 0
        %1399 = vmatpush1.bf16.xpose.msra.mxu0 0
        %1400 = vmatprep.subr.bf16.mxu0 0
        %1401 = vmatpush1.bf16.xpose.msra.mxu0 0
        %1402 = vmatprep.subr.bf16.mxu0 0
        %1403 = vmatpush1.bf16.xpose.msra.mxu0 0
        %1404 = vmatprep.subr.bf16.mxu0 0
        %1405 = vmatpush1.bf16.xpose.msra.mxu0 %v1388
        %1406 = vmatprep.subr.bf16.mxu0 0
        %1407 = vmatpush2.bf16.xpose.msra.mxu0 0
        %1408 = vmatprep.subr.bf16.mxu0 0
        %1409 = vmatpush2.bf16.xpose.msra.mxu0 0
        %1410 = vmatprep.subr.bf16.mxu0 0
        %1411 = vmatpush2.bf16.xpose.msra.mxu0 0
        %1412 = vmatprep.subr.bf16.mxu0 0
        %1413 = vmatpush2.bf16.xpose.msra.mxu0 0
        %1414 = vmatprep.subr.bf16.mxu0 0
        %1415 = vmatpush2.bf16.xpose.msra.mxu0 0
        %1416 = vmatprep.subr.bf16.mxu0 0
        %1417 = vmatpush2.bf16.xpose.msra.mxu0 0
        %1418 = vmatprep.subr.bf16.mxu0 0
        %1419 = vmatpush2.bf16.xpose.msra.mxu0 0
        %1420 = vmatprep.subr.bf16.mxu0 0
        %1421 = vmatpush2.bf16.xpose.msra.mxu0 0
        %1422 = vmatprep.mubr.bf16.mxu0 0
        %1423 = vmatmul.mubr.bf16.gmra.mxu0 %v1385
        %v1424 = vpop.f32.mrf.mxu0
        %v1425 = vadd.f32 0.0, %v1424
        %v1426 = vpop.f32.mrf.mxu0
        %v1427 = vpop.f32.mrf.mxu0
        %v1428 = vpop.f32.mrf.mxu0
        %1429 = vdwg.mxu0
        %v1431 = vsel %vm1383, %v1376, 0
        %v1434 = vsel %vm1383, %v1380, 0
        %1436 = vmatprep.subr.bf16.mxu0 0
        %1437 = vmatpush1.bf16.xpose.msra.mxu0 0
        %1438 = vmatprep.subr.bf16.mxu0 0
        %1439 = vmatpush1.bf16.xpose.msra.mxu0 0
        %1440 = vmatprep.subr.bf16.mxu0 0
        %1441 = vmatpush1.bf16.xpose.msra.mxu0 0
        %1442 = vmatprep.subr.bf16.mxu0 0
        %1443 = vmatpush1.bf16.xpose.msra.mxu0 0
        %1444 = vmatprep.subr.bf16.mxu0 0
        %1445 = vmatpush1.bf16.xpose.msra.mxu0 0
        %1446 = vmatprep.subr.bf16.mxu0 0
        %1447 = vmatpush1.bf16.xpose.msra.mxu0 0
        %1448 = vmatprep.subr.bf16.mxu0 0
        %1449 = vmatpush1.bf16.xpose.msra.mxu0 0
        %1450 = vmatprep.subr.bf16.mxu0 0
        %1451 = vmatpush1.bf16.xpose.msra.mxu0 %v1434
        %1452 = vmatprep.subr.bf16.mxu0 0
        %1453 = vmatpush2.bf16.xpose.msra.mxu0 0
        %1454 = vmatprep.subr.bf16.mxu0 0
        %1455 = vmatpush2.bf16.xpose.msra.mxu0 0
        %1456 = vmatprep.subr.bf16.mxu0 0
        %1457 = vmatpush2.bf16.xpose.msra.mxu0 0
        %1458 = vmatprep.subr.bf16.mxu0 0
        %1459 = vmatpush2.bf16.xpose.msra.mxu0 0
        %1460 = vmatprep.subr.bf16.mxu0 0
        %1461 = vmatpush2.bf16.xpose.msra.mxu0 0
        %1462 = vmatprep.subr.bf16.mxu0 0
        %1463 = vmatpush2.bf16.xpose.msra.mxu0 0
        %1464 = vmatprep.subr.bf16.mxu0 0
        %1465 = vmatpush2.bf16.xpose.msra.mxu0 0
        %1466 = vmatprep.subr.bf16.mxu0 0
        %1467 = vmatpush2.bf16.xpose.msra.mxu0 0
        %1468 = vmatprep.mubr.bf16.mxu0 0
        %1469 = vmatmul.mubr.bf16.gmra.mxu0 %v1431
        %v1470 = vpop.f32.mrf.mxu0
        %v1471 = vadd.f32 0.0, %v1470
        %v1472 = vpop.f32.mrf.mxu0
        %v1473 = vpop.f32.mrf.mxu0
        %v1474 = vpop.f32.mrf.mxu0
        %1475 = vdwg.mxu0
        %v1477 = vsel %vm1383, %v1377, 0
        %v1480 = vsel %vm1383, %v1381, 0
        %1482 = vmatprep.subr.bf16.mxu0 0
        %1483 = vmatpush1.bf16.xpose.msra.mxu0 0
        %1484 = vmatprep.subr.bf16.mxu0 0
        %1485 = vmatpush1.bf16.xpose.msra.mxu0 0
        %1486 = vmatprep.subr.bf16.mxu0 0
        %1487 = vmatpush1.bf16.xpose.msra.mxu0 0
        %1488 = vmatprep.subr.bf16.mxu0 0
        %1489 = vmatpush1.bf16.xpose.msra.mxu0 0
        %1490 = vmatprep.subr.bf16.mxu0 0
        %1491 = vmatpush1.bf16.xpose.msra.mxu0 0
        %1492 = vmatprep.subr.bf16.mxu0 0
        %1493 = vmatpush1.bf16.xpose.msra.mxu0 0
        %1494 = vmatprep.subr.bf16.mxu0 0
        %1495 = vmatpush1.bf16.xpose.msra.mxu0 0
        %1496 = vmatprep.subr.bf16.mxu0 0
        %1497 = vmatpush1.bf16.xpose.msra.mxu0 %v1480
        %1498 = vmatprep.subr.bf16.mxu0 0
        %1499 = vmatpush2.bf16.xpose.msra.mxu0 0
        %1500 = vmatprep.subr.bf16.mxu0 0
        %1501 = vmatpush2.bf16.xpose.msra.mxu0 0
        %1502 = vmatprep.subr.bf16.mxu0 0
        %1503 = vmatpush2.bf16.xpose.msra.mxu0 0
        %1504 = vmatprep.subr.bf16.mxu0 0
        %1505 = vmatpush2.bf16.xpose.msra.mxu0 0
        %1506 = vmatprep.subr.bf16.mxu0 0
        %1507 = vmatpush2.bf16.xpose.msra.mxu0 0
        %1508 = vmatprep.subr.bf16.mxu0 0
        %1509 = vmatpush2.bf16.xpose.msra.mxu0 0
        %1510 = vmatprep.subr.bf16.mxu0 0
        %1511 = vmatpush2.bf16.xpose.msra.mxu0 0
        %1512 = vmatprep.subr.bf16.mxu0 0
        %1513 = vmatpush2.bf16.xpose.msra.mxu0 0
        %1514 = vmatprep.mubr.bf16.mxu0 0
        %1515 = vmatmul.mubr.bf16.gmra.mxu0 %v1477
        %v1516 = vpop.f32.mrf.mxu0
        %v1517 = vadd.f32 0.0, %v1516
        %v1518 = vpop.f32.mrf.mxu0
        %v1519 = vpop.f32.mrf.mxu0
        %v1520 = vpop.f32.mrf.mxu0
        %1521 = vdwg.mxu0
        %v1523 = vsel %vm1383, %v1378, 0
        %v1526 = vsel %vm1383, %v1382, 0
        %1528 = vmatprep.subr.bf16.mxu0 0
        %1529 = vmatpush1.bf16.xpose.msra.mxu0 0
        %1530 = vmatprep.subr.bf16.mxu0 0
        %1531 = vmatpush1.bf16.xpose.msra.mxu0 0
        %1532 = vmatprep.subr.bf16.mxu0 0
        %1533 = vmatpush1.bf16.xpose.msra.mxu0 0
        %1534 = vmatprep.subr.bf16.mxu0 0
        %1535 = vmatpush1.bf16.xpose.msra.mxu0 0
        %1536 = vmatprep.subr.bf16.mxu0 0
        %1537 = vmatpush1.bf16.xpose.msra.mxu0 0
        %1538 = vmatprep.subr.bf16.mxu0 0
        %1539 = vmatpush1.bf16.xpose.msra.mxu0 0
        %1540 = vmatprep.subr.bf16.mxu0 0
        %1541 = vmatpush1.bf16.xpose.msra.mxu0 0
        %1542 = vmatprep.subr.bf16.mxu0 0
        %1543 = vmatpush1.bf16.xpose.msra.mxu0 %v1526
        %1544 = vmatprep.subr.bf16.mxu0 0
        %1545 = vmatpush2.bf16.xpose.msra.mxu0 0
        %1546 = vmatprep.subr.bf16.mxu0 0
        %1547 = vmatpush2.bf16.xpose.msra.mxu0 0
        %1548 = vmatprep.subr.bf16.mxu0 0
        %1549 = vmatpush2.bf16.xpose.msra.mxu0 0
        %1550 = vmatprep.subr.bf16.mxu0 0
        %1551 = vmatpush2.bf16.xpose.msra.mxu0 0
        %1552 = vmatprep.subr.bf16.mxu0 0
        %1553 = vmatpush2.bf16.xpose.msra.mxu0 0
        %1554 = vmatprep.subr.bf16.mxu0 0
        %1555 = vmatpush2.bf16.xpose.msra.mxu0 0
        %1556 = vmatprep.subr.bf16.mxu0 0
        %1557 = vmatpush2.bf16.xpose.msra.mxu0 0
        %1558 = vmatprep.subr.bf16.mxu0 0
        %1559 = vmatpush2.bf16.xpose.msra.mxu0 0
        %1560 = vmatprep.mubr.bf16.mxu0 0
        %1561 = vmatmul.mubr.bf16.gmra.mxu0 %v1523
        %v1562 = vpop.f32.mrf.mxu0
        %v1563 = vadd.f32 0.0, %v1562
        %v1564 = vpop.f32.mrf.mxu0
        %v1565 = vpop.f32.mrf.mxu0
        %v1566 = vpop.f32.mrf.mxu0
        %1567 = vdwg.mxu0
        %v1568 = vmul.f32 %v1425, 0.35355338
        %v1569 = vmul.f32 %v1471, 0.35355338
        %v1570 = vmul.f32 %v1517, 0.35355338
        %v1571 = vmul.f32 %v1563, 0.35355338
        %v1572 = vadd.f32 %v1568, %v1008
        %v1573 = vadd.f32 %v1569, %v1008
        %v1574 = vadd.f32 %v1570, %v1008
        %v1575 = vadd.f32 %v1571, %v1008
        %v1576 = vsel %vm1383, %v1572, -inf
        %1577 = vmax.xlane.f32.xlu0 %v1576
        %v1578 = vpop.xlane.xlu0 %1577
        %v1579 = vsel %vm1383, %v1573, -inf
        %1580 = vmax.xlane.f32.xlu0 %v1579
        %v1581 = vpop.xlane.xlu0 %1580
        %v1582 = vsel %vm1383, %v1574, -inf
        %1583 = vmax.xlane.f32.xlu0 %v1582
        %v1584 = vpop.xlane.xlu0 %1583
        %v1585 = vsel %vm1383, %v1575, -inf
        %1586 = vmax.xlane.f32.xlu0 %v1585
        %v1587 = vpop.xlane.xlu0 %1586
        %v1588 = vsub.f32 %v1572, %v1578
        %v1589 = vsub.f32 %v1573, %v1581
        %v1590 = vsub.f32 %v1574, %v1584
        %v1591 = vsub.f32 %v1575, %v1587
        %v1592 = vmul.f32 %v1588, 1.442695
        %v1593 = vpow.pop %v1592
        %v1594 = vmul.f32 %v1589, 1.442695
        %v1595 = vpow.pop %v1594
        %v1596 = vmul.f32 %v1590, 1.442695
        %v1597 = vpow.pop %v1596
        %v1598 = vmul.f32 %v1591, 1.442695
        %v1599 = vpow.pop %v1598
        %v1600 = vsel %vm1383, %v1593, 0.0
        %1601 = vadd.xlane.f32.xlu0 %v1600
        %v1602 = vpop.xlane.xlu0 %1601
        %v1603 = vsel %vm1383, %v1595, 0.0
        %1604 = vadd.xlane.f32.xlu0 %v1603
        %v1605 = vpop.xlane.xlu0 %1604
        %v1606 = vsel %vm1383, %v1597, 0.0
        %1607 = vadd.xlane.f32.xlu0 %v1606
        %v1608 = vpop.xlane.xlu0 %1607
        %v1609 = vsel %vm1383, %v1599, 0.0
        %1610 = vadd.xlane.f32.xlu0 %v1609
        %v1611 = vpop.xlane.xlu0 %1610
        %v1612 = vrcp.pop %v1602
        %v1613 = vrcp.pop %v1605
        %v1614 = vrcp.pop %v1608
        %v1615 = vrcp.pop %v1611
        %v1616 = vmul.f32 %v1593, %v1612
        %v1617 = vmul.f32 %v1595, %v1613
        %v1618 = vmul.f32 %v1597, %v1614
        %v1619 = vmul.f32 %v1599, %v1615
        %v1620 = vpack.c.bf16 %v1616, %v1616
        %v1621 = vpack.c.bf16 %v1617, %v1617
        %v1622 = vpack.c.bf16 %v1618, %v1618
        %v1623 = vpack.c.bf16 %v1619, %v1619
        %v1624 = vld [vmem:[#allocation6] sm:$0xf]
        %v1625 = vld [vmem:[#allocation6 + $0x4] sm:$0xf]
        %v1626 = vld [vmem:[#allocation6 + $0x8] sm:$0xf]
        %v1627 = vld [vmem:[#allocation6 + $0xc] sm:$0xf]
        %v1629 = vsel %vm1383, %v1620, 0
        %vm1631 = vcmask 1043456
        %v1633 = vsel %vm1631, %v1624, 0
        %1635 = vmatprep.subr.bf16.mxu0 0
        %1636 = vmatpush1.bf16.msra.mxu0 0
        %1637 = vmatprep.subr.bf16.mxu0 0
        %1638 = vmatpush1.bf16.msra.mxu0 0
        %1639 = vmatprep.subr.bf16.mxu0 0
        %1640 = vmatpush1.bf16.msra.mxu0 0
        %1641 = vmatprep.subr.bf16.mxu0 0
        %1642 = vmatpush1.bf16.msra.mxu0 0
        %1643 = vmatprep.subr.bf16.mxu0 0
        %1644 = vmatpush1.bf16.msra.mxu0 0
        %1645 = vmatprep.subr.bf16.mxu0 0
        %1646 = vmatpush1.bf16.msra.mxu0 0
        %1647 = vmatprep.subr.bf16.mxu0 0
        %1648 = vmatpush1.bf16.msra.mxu0 0
        %1649 = vmatprep.subr.bf16.mxu0 0
        %1650 = vmatpush1.bf16.msra.mxu0 %v1633
        %1651 = vmatprep.subr.bf16.mxu0 0
        %1652 = vmatpush2.bf16.msra.mxu0 0
        %1653 = vmatprep.subr.bf16.mxu0 0
        %1654 = vmatpush2.bf16.msra.mxu0 0
        %1655 = vmatprep.subr.bf16.mxu0 0
        %1656 = vmatpush2.bf16.msra.mxu0 0
        %1657 = vmatprep.subr.bf16.mxu0 0
        %1658 = vmatpush2.bf16.msra.mxu0 0
        %1659 = vmatprep.subr.bf16.mxu0 0
        %1660 = vmatpush2.bf16.msra.mxu0 0
        %1661 = vmatprep.subr.bf16.mxu0 0
        %1662 = vmatpush2.bf16.msra.mxu0 0
        %1663 = vmatprep.subr.bf16.mxu0 0
        %1664 = vmatpush2.bf16.msra.mxu0 0
        %1665 = vmatprep.subr.bf16.mxu0 0
        %1666 = vmatpush2.bf16.msra.mxu0 0
        %1667 = vmatprep.mubr.bf16.mxu0 0
        %1668 = vmatmul.mubr.bf16.gmra.mxu0 %v1629
        %v1669 = vpop.f32.mrf.mxu0
        %v1670 = vadd.f32 0.0, %v1669
        %v1671 = vpop.f32.mrf.mxu0
        %v1672 = vpop.f32.mrf.mxu0
        %v1673 = vpop.f32.mrf.mxu0
        %1674 = vdwg.mxu0
        %v1676 = vsel %vm1383, %v1621, 0
        %v1679 = vsel %vm1631, %v1625, 0
        %1681 = vmatprep.subr.bf16.mxu0 0
        %1682 = vmatpush1.bf16.msra.mxu0 0
        %1683 = vmatprep.subr.bf16.mxu0 0
        %1684 = vmatpush1.bf16.msra.mxu0 0
        %1685 = vmatprep.subr.bf16.mxu0 0
        %1686 = vmatpush1.bf16.msra.mxu0 0
        %1687 = vmatprep.subr.bf16.mxu0 0
        %1688 = vmatpush1.bf16.msra.mxu0 0
        %1689 = vmatprep.subr.bf16.mxu0 0
        %1690 = vmatpush1.bf16.msra.mxu0 0
        %1691 = vmatprep.subr.bf16.mxu0 0
        %1692 = vmatpush1.bf16.msra.mxu0 0
        %1693 = vmatprep.subr.bf16.mxu0 0
        %1694 = vmatpush1.bf16.msra.mxu0 0
        %1695 = vmatprep.subr.bf16.mxu0 0
        %1696 = vmatpush1.bf16.msra.mxu0 %v1679
        %1697 = vmatprep.subr.bf16.mxu0 0
        %1698 = vmatpush2.bf16.msra.mxu0 0
        %1699 = vmatprep.subr.bf16.mxu0 0
        %1700 = vmatpush2.bf16.msra.mxu0 0
        %1701 = vmatprep.subr.bf16.mxu0 0
        %1702 = vmatpush2.bf16.msra.mxu0 0
        %1703 = vmatprep.subr.bf16.mxu0 0
        %1704 = vmatpush2.bf16.msra.mxu0 0
        %1705 = vmatprep.subr.bf16.mxu0 0
        %1706 = vmatpush2.bf16.msra.mxu0 0
        %1707 = vmatprep.subr.bf16.mxu0 0
        %1708 = vmatpush2.bf16.msra.mxu0 0
        %1709 = vmatprep.subr.bf16.mxu0 0
        %1710 = vmatpush2.bf16.msra.mxu0 0
        %1711 = vmatprep.subr.bf16.mxu0 0
        %1712 = vmatpush2.bf16.msra.mxu0 0
        %1713 = vmatprep.mubr.bf16.mxu0 0
        %1714 = vmatmul.mubr.bf16.gmra.mxu0 %v1676
        %v1715 = vpop.f32.mrf.mxu0
        %v1716 = vadd.f32 0.0, %v1715
        %v1717 = vpop.f32.mrf.mxu0
        %v1718 = vpop.f32.mrf.mxu0
        %v1719 = vpop.f32.mrf.mxu0
        %1720 = vdwg.mxu0
        %v1722 = vsel %vm1383, %v1622, 0
        %v1725 = vsel %vm1631, %v1626, 0
        %1727 = vmatprep.subr.bf16.mxu0 0
        %1728 = vmatpush1.bf16.msra.mxu0 0
        %1729 = vmatprep.subr.bf16.mxu0 0
        %1730 = vmatpush1.bf16.msra.mxu0 0
        %1731 = vmatprep.subr.bf16.mxu0 0
        %1732 = vmatpush1.bf16.msra.mxu0 0
        %1733 = vmatprep.subr.bf16.mxu0 0
        %1734 = vmatpush1.bf16.msra.mxu0 0
        %1735 = vmatprep.subr.bf16.mxu0 0
        %1736 = vmatpush1.bf16.msra.mxu0 0
        %1737 = vmatprep.subr.bf16.mxu0 0
        %1738 = vmatpush1.bf16.msra.mxu0 0
        %1739 = vmatprep.subr.bf16.mxu0 0
        %1740 = vmatpush1.bf16.msra.mxu0 0
        %1741 = vmatprep.subr.bf16.mxu0 0
        %1742 = vmatpush1.bf16.msra.mxu0 %v1725
        %1743 = vmatprep.subr.bf16.mxu0 0
        %1744 = vmatpush2.bf16.msra.mxu0 0
        %1745 = vmatprep.subr.bf16.mxu0 0
        %1746 = vmatpush2.bf16.msra.mxu0 0
        %1747 = vmatprep.subr.bf16.mxu0 0
        %1748 = vmatpush2.bf16.msra.mxu0 0
        %1749 = vmatprep.subr.bf16.mxu0 0
        %1750 = vmatpush2.bf16.msra.mxu0 0
        %1751 = vmatprep.subr.bf16.mxu0 0
        %1752 = vmatpush2.bf16.msra.mxu0 0
        %1753 = vmatprep.subr.bf16.mxu0 0
        %1754 = vmatpush2.bf16.msra.mxu0 0
        %1755 = vmatprep.subr.bf16.mxu0 0
        %1756 = vmatpush2.bf16.msra.mxu0 0
        %1757 = vmatprep.subr.bf16.mxu0 0
        %1758 = vmatpush2.bf16.msra.mxu0 0
        %1759 = vmatprep.mubr.bf16.mxu0 0
        %1760 = vmatmul.mubr.bf16.gmra.mxu0 %v1722
        %v1761 = vpop.f32.mrf.mxu0
        %v1762 = vadd.f32 0.0, %v1761
        %v1763 = vpop.f32.mrf.mxu0
        %v1764 = vpop.f32.mrf.mxu0
        %v1765 = vpop.f32.mrf.mxu0
        %1766 = vdwg.mxu0
        %v1768 = vsel %vm1383, %v1623, 0
        %v1771 = vsel %vm1631, %v1627, 0
        %1773 = vmatprep.subr.bf16.mxu0 0
        %1774 = vmatpush1.bf16.msra.mxu0 0
        %1775 = vmatprep.subr.bf16.mxu0 0
        %1776 = vmatpush1.bf16.msra.mxu0 0
        %1777 = vmatprep.subr.bf16.mxu0 0
        %1778 = vmatpush1.bf16.msra.mxu0 0
        %1779 = vmatprep.subr.bf16.mxu0 0
        %1780 = vmatpush1.bf16.msra.mxu0 0
        %1781 = vmatprep.subr.bf16.mxu0 0
        %1782 = vmatpush1.bf16.msra.mxu0 0
        %1783 = vmatprep.subr.bf16.mxu0 0
        %1784 = vmatpush1.bf16.msra.mxu0 0
        %1785 = vmatprep.subr.bf16.mxu0 0
        %1786 = vmatpush1.bf16.msra.mxu0 0
        %1787 = vmatprep.subr.bf16.mxu0 0
        %1788 = vmatpush1.bf16.msra.mxu0 %v1771
        %1789 = vmatprep.subr.bf16.mxu0 0
        %1790 = vmatpush2.bf16.msra.mxu0 0
        %1791 = vmatprep.subr.bf16.mxu0 0
        %1792 = vmatpush2.bf16.msra.mxu0 0
        %1793 = vmatprep.subr.bf16.mxu0 0
        %1794 = vmatpush2.bf16.msra.mxu0 0
        %1795 = vmatprep.subr.bf16.mxu0 0
        %1796 = vmatpush2.bf16.msra.mxu0 0
        %1797 = vmatprep.subr.bf16.mxu0 0
        %1798 = vmatpush2.bf16.msra.mxu0 0
        %1799 = vmatprep.subr.bf16.mxu0 0
        %1800 = vmatpush2.bf16.msra.mxu0 0
        %1801 = vmatprep.subr.bf16.mxu0 0
        %1802 = vmatpush2.bf16.msra.mxu0 0
        %1803 = vmatprep.subr.bf16.mxu0 0
        %1804 = vmatpush2.bf16.msra.mxu0 0
        %1805 = vmatprep.mubr.bf16.mxu0 0
        %1806 = vmatmul.mubr.bf16.gmra.mxu0 %v1768
        %v1807 = vpop.f32.mrf.mxu0
        %v1808 = vadd.f32 0.0, %v1807
        %v1809 = vpop.f32.mrf.mxu0
        %v1810 = vpop.f32.mrf.mxu0
        %v1811 = vpop.f32.mrf.mxu0
        %1812 = vdwg.mxu0
        %v1813 = vpack.c.bf16 %v1670, %v1670
        %1814 = vst.msk [vmem:[#allocation7] sm:$0xf] %vm1177, %v1813
        %v1815 = vpack.c.bf16 %v1716, %v1716
        %v1817 = vunpack.c.l.b16 %v1815
        %v1818 = vpack.c.b16 %v1817, %v1817
        %1819 = vrot.lane.b32.xlu0 %v1818, 8
        %v1820 = vpop.permute.xlu0 %1819
        %vm1822 = vcmask 126016
        %1823 = vst.msk [vmem:[#allocation7] sm:$0xf] %vm1822, %v1820
        %v1824 = vpack.c.bf16 %v1762, %v1762
        %v1826 = vunpack.c.l.b16 %v1824
        %v1827 = vpack.c.b16 %v1826, %v1826
        %1828 = vrot.lane.b32.xlu0 %v1827, 16
        %v1829 = vpop.permute.xlu0 %1828
        %vm1831 = vcmask 191616
        %1832 = vst.msk [vmem:[#allocation7] sm:$0xf] %vm1831, %v1829
        %v1833 = vpack.c.bf16 %v1808, %v1808
        %v1835 = vunpack.c.l.b16 %v1833
        %v1836 = vpack.c.b16 %v1835, %v1835
        %1837 = vrot.lane.b32.xlu0 %v1836, 24
        %v1838 = vpop.permute.xlu0 %1837
        %vm1840 = vcmask 257216
        %1841 = vst.msk [vmem:[#allocation7] sm:$0xf] %vm1840, %v1838
        %v1842 = vld [vmem:[#allocation7] sm:$0xf]
        %v1843 = vld [vmem:[%s874] sm:$0xf]
        %v1844 = vld [vmem:[%s874 + $0x4] sm:$0xf]
        %v1845 = vld [vmem:[%s874 + $0x8] sm:$0xf]
        %v1846 = vld [vmem:[%s874 + $0xc] sm:$0xf]
        %v1847 = vld [vmem:[%s877] sm:$0x1]
        %v1849 = vlaneseq
        %v1850 = vshrl.u32 %v1849, 7
        %v1851 = vsub.s32 0, %v1850
        %v1852 = vrot.slane %v1847, %v1851
        %v1858 = vunpack.c.l.b16 %v1843
        %v1859 = vunpack.c.l.b16 %v1844
        %v1860 = vunpack.c.l.b16 %v1845
        %v1861 = vunpack.c.l.b16 %v1846
        %v1862 = vpack.c.b16 %v1859, %v1858
        %v1863 = vpack.c.b16 %v1861, %v1860
        %v1867 = vsel %vm1035, %v1842, 0
        %1869 = vmatprep.subr.bf16.mxu0 0
        %1870 = vmatpush1.bf16.msra.mxu0 0
        %1871 = vmatprep.subr.bf16.mxu0 0
        %1872 = vmatpush1.bf16.msra.mxu0 0
        %1873 = vmatprep.subr.bf16.mxu0 0
        %1874 = vmatpush1.bf16.msra.mxu0 0
        %1875 = vmatprep.subr.bf16.mxu0 0
        %1876 = vmatpush1.bf16.msra.mxu0 0
        %1877 = vmatprep.subr.bf16.mxu0 0
        %1878 = vmatpush1.bf16.msra.mxu0 0
        %1879 = vmatprep.subr.bf16.mxu0 0
        %1880 = vmatpush1.bf16.msra.mxu0 0
        %1881 = vmatprep.subr.bf16.mxu0 0
        %1882 = vmatpush1.bf16.msra.mxu0 %v1863
        %1883 = vmatprep.subr.bf16.mxu0 0
        %1884 = vmatpush1.bf16.msra.mxu0 %v1862
        %1885 = vmatprep.subr.bf16.mxu0 0
        %1886 = vmatpush2.bf16.msra.mxu0 0
        %1887 = vmatprep.subr.bf16.mxu0 0
        %1888 = vmatpush2.bf16.msra.mxu0 0
        %1889 = vmatprep.subr.bf16.mxu0 0
        %1890 = vmatpush2.bf16.msra.mxu0 0
        %1891 = vmatprep.subr.bf16.mxu0 0
        %1892 = vmatpush2.bf16.msra.mxu0 0
        %1893 = vmatprep.subr.bf16.mxu0 0
        %1894 = vmatpush2.bf16.msra.mxu0 0
        %1895 = vmatprep.subr.bf16.mxu0 0
        %1896 = vmatpush2.bf16.msra.mxu0 0
        %1897 = vmatprep.subr.bf16.mxu0 0
        %1898 = vmatpush2.bf16.msra.mxu0 0
        %1899 = vmatprep.subr.bf16.mxu0 0
        %1900 = vmatpush2.bf16.msra.mxu0 0
        %1901 = vmatprep.mubr.bf16.mxu0 0
        %1902 = vmatmul.mubr.bf16.gmra.mxu0 %v1867
        %v1903 = vpop.f32.mrf.mxu0
        %v1904 = vadd.f32 %v1852, %v1903
        %v1905 = vpop.f32.mrf.mxu0
        %v1906 = vpop.f32.mrf.mxu0
        %v1907 = vpop.f32.mrf.mxu0
        %1908 = vdwg.mxu0
        %v1909 = vlaneseq
        %v1910 = vshrl.u32 %v1909, 7
        %v1911 = vsub.s32 0, %v1910
        %v1912 = vrot.slane %v1074, %v1911
        %v1913 = vmul.f32 %v1904, %v1912
        %v1914 = vadd.f32 %v1006, %v1913
        %v1915 = vld [vmem:[%s880] sm:$0x1]
        %v1916 = vld [vmem:[%s883] sm:$0x1]
        %v1917 = vsel %vm1035, %v1914, 0.0
        %1918 = vadd.xlane.f32.xlu0 %v1917
        %v1919 = vpop.xlane.xlu0 %1918
        %v1920 = vmul.f32 %v1919, %v1084
        %v1921 = vsub.f32 %v1914, %v1920
        %v1922 = vmul.f32 %v1921, %v1921
        %v1923 = vsel %vm1035, %v1922, 0.0
        %1924 = vadd.xlane.f32.xlu0 %v1923
        %v1925 = vpop.xlane.xlu0 %1924
        %v1926 = vmul.f32 %v1925, %v1084
        %v1927 = vadd.f32 %v1926, 1e-06
        %v1928 = vrsqrt.pop %v1927
        %v1929 = vmul.f32 %v1921, %v1928
        %v1931 = vlaneseq
        %v1932 = vshrl.u32 %v1931, 7
        %v1933 = vsub.s32 0, %v1932
        %v1934 = vrot.slane %v1915, %v1933
        %v1936 = vmul.f32 %v1929, %v1934
        %v1938 = vlaneseq
        %v1939 = vshrl.u32 %v1938, 7
        %v1940 = vsub.s32 0, %v1939
        %v1941 = vrot.slane %v1916, %v1940
        %v1943 = vadd.f32 %v1936, %v1941
        %v1944 = vpack.c.bf16 %v1943, %v1943
        %v1945 = vld [vmem:[%s888] sm:$0xf]
        %v1946 = vld [vmem:[%s888 + $0x4] sm:$0xf]
        %v1947 = vld [vmem:[%s888 + $0x8] sm:$0xf]
        %v1948 = vld [vmem:[%s888 + $0xc] sm:$0xf]
        %v1949 = vld [vmem:[%s891] sm:$0x1]
        %v1951 = vlaneseq
        %v1952 = vshrl.u32 %v1951, 7
        %v1953 = vsub.s32 0, %v1952
        %v1954 = vrot.slane %v1949, %v1953
        %v1960 = vunpack.c.l.b16 %v1945
        %v1961 = vunpack.c.l.b16 %v1946
        %v1962 = vunpack.c.l.b16 %v1947
        %v1963 = vunpack.c.l.b16 %v1948
        %v1964 = vpack.c.b16 %v1961, %v1960
        %v1965 = vpack.c.b16 %v1963, %v1962
        %v1969 = vsel %vm1035, %v1944, 0
        %1971 = vmatprep.subr.bf16.mxu0 0
        %1972 = vmatpush1.bf16.msra.mxu0 0
        %1973 = vmatprep.subr.bf16.mxu0 0
        %1974 = vmatpush1.bf16.msra.mxu0 0
        %1975 = vmatprep.subr.bf16.mxu0 0
        %1976 = vmatpush1.bf16.msra.mxu0 0
        %1977 = vmatprep.subr.bf16.mxu0 0
        %1978 = vmatpush1.bf16.msra.mxu0 0
        %1979 = vmatprep.subr.bf16.mxu0 0
        %1980 = vmatpush1.bf16.msra.mxu0 0
        %1981 = vmatprep.subr.bf16.mxu0 0
        %1982 = vmatpush1.bf16.msra.mxu0 0
        %1983 = vmatprep.subr.bf16.mxu0 0
        %1984 = vmatpush1.bf16.msra.mxu0 %v1965
        %1985 = vmatprep.subr.bf16.mxu0 0
        %1986 = vmatpush1.bf16.msra.mxu0 %v1964
        %1987 = vmatprep.subr.bf16.mxu0 0
        %1988 = vmatpush2.bf16.msra.mxu0 0
        %1989 = vmatprep.subr.bf16.mxu0 0
        %1990 = vmatpush2.bf16.msra.mxu0 0
        %1991 = vmatprep.subr.bf16.mxu0 0
        %1992 = vmatpush2.bf16.msra.mxu0 0
        %1993 = vmatprep.subr.bf16.mxu0 0
        %1994 = vmatpush2.bf16.msra.mxu0 0
        %1995 = vmatprep.subr.bf16.mxu0 0
        %1996 = vmatpush2.bf16.msra.mxu0 0
        %1997 = vmatprep.subr.bf16.mxu0 0
        %1998 = vmatpush2.bf16.msra.mxu0 0
        %1999 = vmatprep.subr.bf16.mxu0 0
        %2000 = vmatpush2.bf16.msra.mxu0 0
        %2001 = vmatprep.subr.bf16.mxu0 0
        %2002 = vmatpush2.bf16.msra.mxu0 0
        %2003 = vmatprep.mubr.bf16.mxu0 0
        %2004 = vmatmul.mubr.bf16.gmra.mxu0 %v1969
        %v2005 = vpop.f32.mrf.mxu0
        %v2006 = vadd.f32 %v1954, %v2005
        %v2007 = vpop.f32.mrf.mxu0
        %v2008 = vpop.f32.mrf.mxu0
        %v2009 = vpop.f32.mrf.mxu0
        %2010 = vdwg.mxu0
        %v2011 = vxor.u32 %v2006, 2147483648
        %v2012 = vmul.f32 %v2011, 1.442695
        %v2013 = vpow.pop %v2012
        %v2014 = vadd.f32 %v2013, 1.0
        %v2015 = vrcp.pop %v2014
        %v2016 = vmul.f32 1.0, %v2015
        %v2017 = vmul.f32 %v2006, %v2016
        %v2018 = vpack.c.bf16 %v2017, %v2017
        %v2019 = vld [vmem:[%s896] sm:$0xf]
        %v2020 = vld [vmem:[%s896 + $0x4] sm:$0xf]
        %v2021 = vld [vmem:[%s896 + $0x8] sm:$0xf]
        %v2022 = vld [vmem:[%s896 + $0xc] sm:$0xf]
        %v2023 = vld [vmem:[%s896 + $0x10] sm:$0xf]
        %v2024 = vld [vmem:[%s896 + $0x14] sm:$0xf]
        %v2025 = vld [vmem:[%s896 + $0x18] sm:$0xf]
        %v2026 = vld [vmem:[%s896 + $0x1c] sm:$0xf]
        %v2027 = vld [vmem:[%s896 + $0x20] sm:$0xf]
        %v2028 = vld [vmem:[%s896 + $0x24] sm:$0xf]
        %v2029 = vld [vmem:[%s896 + $0x28] sm:$0xf]
        %v2030 = vld [vmem:[%s896 + $0x2c] sm:$0xf]
        %v2031 = vld [vmem:[%s896 + $0x30] sm:$0xf]
        %v2032 = vld [vmem:[%s896 + $0x34] sm:$0xf]
        %v2033 = vld [vmem:[%s896 + $0x38] sm:$0xf]
        %v2034 = vld [vmem:[%s896 + $0x3c] sm:$0xf]
        %v2035 = vld [vmem:[%s899] sm:$0x1]
        %v2037 = vlaneseq
        %v2038 = vshrl.u32 %v2037, 7
        %v2039 = vsub.s32 0, %v2038
        %v2040 = vrot.slane %v2035, %v2039
        %v2058 = vunpack.c.l.b16 %v2019
        %v2059 = vunpack.c.l.b16 %v2020
        %v2060 = vunpack.c.l.b16 %v2021
        %v2061 = vunpack.c.l.b16 %v2022
        %v2062 = vunpack.c.l.b16 %v2023
        %v2063 = vunpack.c.l.b16 %v2024
        %v2064 = vunpack.c.l.b16 %v2025
        %v2065 = vunpack.c.l.b16 %v2026
        %v2066 = vunpack.c.l.b16 %v2027
        %v2067 = vunpack.c.l.b16 %v2028
        %v2068 = vunpack.c.l.b16 %v2029
        %v2069 = vunpack.c.l.b16 %v2030
        %v2070 = vunpack.c.l.b16 %v2031
        %v2071 = vunpack.c.l.b16 %v2032
        %v2072 = vunpack.c.l.b16 %v2033
        %v2073 = vunpack.c.l.b16 %v2034
        %v2074 = vpack.c.b16 %v2059, %v2058
        %v2075 = vpack.c.b16 %v2061, %v2060
        %v2076 = vpack.c.b16 %v2063, %v2062
        %v2077 = vpack.c.b16 %v2065, %v2064
        %v2078 = vpack.c.b16 %v2067, %v2066
        %v2079 = vpack.c.b16 %v2069, %v2068
        %v2080 = vpack.c.b16 %v2071, %v2070
        %v2081 = vpack.c.b16 %v2073, %v2072
        %2090 = vmatprep.subr.bf16.mxu0 0
        %2091 = vmatpush1.bf16.msra.mxu0 %v2081
        %2092 = vmatprep.subr.bf16.mxu0 0
        %2093 = vmatpush1.bf16.msra.mxu0 %v2080
        %2094 = vmatprep.subr.bf16.mxu0 0
        %2095 = vmatpush1.bf16.msra.mxu0 %v2079
        %2096 = vmatprep.subr.bf16.mxu0 0
        %2097 = vmatpush1.bf16.msra.mxu0 %v2078
        %2098 = vmatprep.subr.bf16.mxu0 0
        %2099 = vmatpush1.bf16.msra.mxu0 %v2077
        %2100 = vmatprep.subr.bf16.mxu0 0
        %2101 = vmatpush1.bf16.msra.mxu0 %v2076
        %2102 = vmatprep.subr.bf16.mxu0 0
        %2103 = vmatpush1.bf16.msra.mxu0 %v2075
        %2104 = vmatprep.subr.bf16.mxu0 0
        %2105 = vmatpush1.bf16.msra.mxu0 %v2074
        %2106 = vmatprep.subr.bf16.mxu0 0
        %2107 = vmatpush2.bf16.msra.mxu0 0
        %2108 = vmatprep.subr.bf16.mxu0 0
        %2109 = vmatpush2.bf16.msra.mxu0 0
        %2110 = vmatprep.subr.bf16.mxu0 0
        %2111 = vmatpush2.bf16.msra.mxu0 0
        %2112 = vmatprep.subr.bf16.mxu0 0
        %2113 = vmatpush2.bf16.msra.mxu0 0
        %2114 = vmatprep.subr.bf16.mxu0 0
        %2115 = vmatpush2.bf16.msra.mxu0 0
        %2116 = vmatprep.subr.bf16.mxu0 0
        %2117 = vmatpush2.bf16.msra.mxu0 0
        %2118 = vmatprep.subr.bf16.mxu0 0
        %2119 = vmatpush2.bf16.msra.mxu0 0
        %2120 = vmatprep.subr.bf16.mxu0 0
        %2121 = vmatpush2.bf16.msra.mxu0 0
        %2122 = vmatprep.mubr.bf16.mxu0 0
        %2123 = vmatmul.mubr.bf16.gmra.mxu0 %v2018
        %v2124 = vpop.f32.mrf.mxu0
        %v2125 = vadd.f32 %v2040, %v2124
        %v2126 = vpop.f32.mrf.mxu0
        %v2127 = vpop.f32.mrf.mxu0
        %v2128 = vpop.f32.mrf.mxu0
        %2129 = vdwg.mxu0
        %2131 = vrot.lane.b32.xlu0 %v1912, 96
        %v2132 = vpop.permute.xlu0 %2131
        %v2134 = vmul.f32 %v2125, %v2132
        %v2135 = vadd.f32 %v1914, %v2134
        %2136 = vst.msk [vmem:[%s1005] sm:$0xff] %vm1035, %v2135
        %2137 = vst.msk [vmem:[%s841] sm:$0xff] %vm1035, %v2135
        %s2138 = sand.u32 %s564, 1
        %s2139 = scalar_lea.sflag [#allocation9], %s2138
        %s2140 = sand.u32 %s564, 1
        %s2141 = smul.addr %s2140, 8
        %s2142 = scalar_lea.vmem [#allocation8], %s2141
        // Predicated region
        $region105: #{tpu_custom_call.1} parent=99 // pred_check
          %p2143 = pneg %p574
        $region106: #{tpu_custom_call.1} parent=99 // pred_check_branch
          %2145 = sbr.rel (%p2143) target = $region108
        $region107: #{tpu_custom_call.1} parent=99 // pred_region
          %s2147 = ssub.s32 128, 128
          %2148 = vsyncadd %s2139, %s2147
          %s2149 = smul.addr %s39, 128
          %s2150 = scalar_lea.hbm %s20, %s2149
          %s2152 = sshll.u32 %s2142, 4
          %s2153 = int_to_ptr.vmem [resolvable:$true] %s2152
          %2155 = dma.vmem_to_hbm [thread:$0]  %s2153, 128, %s2150, %s2139
        $region108: #{tpu_custom_call.1} parent=99 // pred_fallthru
          _
      $region100: #{tpu_custom_call.1} parent=5 // pred_fallthru
        _
      %p2156 = scmp.le.s32.totalorder 2, %s29
      // Predicated region
      $region109: #{tpu_custom_call.1} parent=5 // pred_check
        %p2157 = pneg %p2156
      $region110: #{tpu_custom_call.1} parent=5 // pred_check_branch
        %2159 = sbr.rel (%p2157) target = $region112
      $region111: #{tpu_custom_call.1} parent=5 // pred_region
        %s2160 = ssub.s32 %s29, 2
        // Predicated region
        $region113: #{tpu_custom_call.1} parent=111 // pred_check
          %p2161 = pneg %p580
        $region114: #{tpu_custom_call.1} parent=111 // pred_check_branch
          %2163 = sbr.rel (%p2161) target = $region116
        $region115: #{tpu_custom_call.1} parent=111 // pred_region
          %s2164 = sand.u32 %s565, 1
          %s2165 = scalar_lea.sflag [#allocation9], %s2164
          %s2166 = sand.u32 %s565, 1
          %s2167 = smul.addr %s2166, 8
          %s2168 = scalar_lea.vmem [#allocation8], %s2167
          %2169 = dma.done %s2165, 128
        $region116: #{tpu_custom_call.1} parent=111 // pred_fallthru
          _
      $region112: #{tpu_custom_call.1} parent=5 // pred_fallthru
        _
    $region6: #{tpu_custom_call.1} parent=1 // loop_footer
      %s33 = sadd.s32 1, %s29
    $region7: #{tpu_custom_call.1} parent=1 // loop_footer_branch
      %28 = sbr.rel target = $region3
    $region8: #{tpu_custom_call.1} parent=1 // loop_exit
      _
    %2170 = vsyncpa [#allocation9], 1
    %s2171 = scalar_lea.sflag [#allocation9], 1
    %2172 = vsyncpa %s2171, 1

// kernel: tpu_custom_call.1
$region0: #{tpu_custom_call.1}
  #allocation0 [shape = 'u32[]', space=smem, size = 0x4, offset = 0x4, fixed_abs, tag = 'smem constant byte address 0x4 - core index']
  #allocation1 [shape = 'u32[144,128]{1,0:T(1,128)}', space=vmem, size = 0x12000, scoped, tag = 'internal scratch']
  #allocation2 [shape = 'f32[2,8,32]{2,1,0:T(8,128)}', space=vmem, size = 0x2000, scoped, tag = 'scratch operand']
  #allocation3 [shape = 'f32[2,8,8]{2,1,0:T(8,128)}', space=vmem, size = 0x2000, scoped, tag = 'scratch operand']
  #allocation4 [shape = 'bf16[4,8,8]{2,1,0:T(8,128)(2,1)}', space=vmem, size = 0x2000, scoped, tag = 'scratch operand']
  #allocation5 [shape = 'bf16[4,8,8]{2,1,0:T(8,128)(2,1)}', space=vmem, size = 0x2000, scoped, tag = 'scratch operand']
  #allocation6 [shape = 'bf16[4,8,8]{2,1,0:T(8,128)(2,1)}', space=vmem, size = 0x2000, scoped, tag = 'scratch operand']
  #allocation7 [shape = 'bf16[8,32]{1,0:T(8,128)(2,1)}', space=vmem, size = 0x800, scoped, tag = 'scratch operand']
  %s0 = inlined_call_operand.vmem [shape: f32[2,8,16], index: 0, kind: input, shape index: {}]
  %s1 = inlined_call_operand.vmem [shape: f32[2,1,32], index: 1, kind: input, shape index: {}]
  %s2 = inlined_call_operand.vmem [shape: f32[2,1,8], index: 2, kind: input, shape index: {}]
  %s3 = inlined_call_operand.vmem [shape: f32[2,8,1], index: 3, kind: input, shape index: {}]
  %s4 = inlined_call_operand.vmem [shape: bf16[16,32], index: 4, kind: input, shape index: {}]
  %s5 = inlined_call_operand.vmem [shape: f32[1,32], index: 5, kind: input, shape index: {}]
  %s6 = inlined_call_operand.vmem [shape: f32[2,1,32], index: 6, kind: input, shape index: {}]
  %s7 = inlined_call_operand.vmem [shape: f32[2,1,32], index: 7, kind: input, shape index: {}]
  %s8 = inlined_call_operand.vmem [shape: bf16[2,32,96], index: 8, kind: input, shape index: {}]
  %s9 = inlined_call_operand.vmem [shape: f32[2,1,96], index: 9, kind: input, shape index: {}]
  %s10 = inlined_call_operand.vmem [shape: bf16[2,32,32], index: 10, kind: input, shape index: {}]
  %s11 = inlined_call_operand.vmem [shape: f32[2,1,32], index: 11, kind: input, shape index: {}]
  %s12 = inlined_call_operand.vmem [shape: f32[2,1,32], index: 12, kind: input, shape index: {}]
  %s13 = inlined_call_operand.vmem [shape: f32[2,1,32], index: 13, kind: input, shape index: {}]
  %s14 = inlined_call_operand.vmem [shape: bf16[2,32,128], index: 14, kind: input, shape index: {}]
  %s15 = inlined_call_operand.vmem [shape: f32[2,1,128], index: 15, kind: input, shape index: {}]
  %s16 = inlined_call_operand.vmem [shape: bf16[2,128,32], index: 16, kind: input, shape index: {}]
  %s17 = inlined_call_operand.vmem [shape: f32[2,1,32], index: 17, kind: input, shape index: {}]
  %s18 = inlined_call_operand.vmem [shape: bf16[2,32,64], index: 18, kind: input, shape index: {}]
  %s19 = inlined_call_operand.vmem [shape: f32[2,1,64], index: 19, kind: input, shape index: {}]
  %s20 = inlined_call_operand.hbm [shape: f32[2,8,32], index: 20, kind: output, shape index: {}]
  %s21 = sld [smem:[#allocation0]]
  $region117: #{tpu_custom_call.1} parent=0
    _
  %s23 = ssub.s32 1, %s21
  %s24 = scalar_select 0, %s23, %s21
  $region1: #{tpu_custom_call.1} parent=0
    #allocation8 [shape = 'u8[8192]{0}', space=vmem, size = 0x2000, scoped, tag = 'output window, operand 0']
    #allocation9 [shape = 's32[2]{0}', space=sflag, size = 0x8, scoped, tag = 'scoped memory for tpu_custom_call.1']
    %25 = vsyncpa [#allocation9], 0
    %s26 = scalar_lea.sflag [#allocation9], 1
    %27 = vsyncpa %s26, 0
    loop: start=0, step=1, limit=6
    $region2: #{tpu_custom_call.1} parent=1 // loop_pre_header
      _
    $region3: #{tpu_custom_call.1} parent=1 // loop_header
      %s29 = sphi 0, %s33
      %p30 = scmp.ge.s32.totalorder %s29, 6
      %s36 = sphi 0, %s48
      %s37 = sphi 0, %s44
      %s38 = sphi 0, %s36
      %s39 = sphi 0, %s37
      %s40 = sphi 0, %s38
      %s41 = sphi 0, %s39
      %s51 = sphi 0, %s53
      %s54 = sphi 0, %s51
      %s55 = sphi 0, %s54
      %s71 = sphi 0, %s55
      %s77 = sphi 0, %s79
      %s80 = sphi 0, %s77
      %s81 = sphi 0, %s80
      %s97 = sphi 0, %s81
      %s103 = sphi 0, %s105
      %s106 = sphi 0, %s103
      %s107 = sphi 0, %s106
      %s123 = sphi 0, %s107
      %s129 = sphi 0, %s131
      %s132 = sphi 0, %s129
      %s133 = sphi 0, %s132
      %s149 = sphi 0, %s133
      %s153 = sphi 0, %s153
      %s155 = sphi 0, %s153
      %s156 = sphi 0, %s155
      %s170 = sphi 0, %s156
      %s174 = sphi 0, %s174
      %s176 = sphi 0, %s174
      %s177 = sphi 0, %s176
      %s191 = sphi 0, %s177
      %s197 = sphi 0, %s199
      %s200 = sphi 0, %s197
      %s201 = sphi 0, %s200
      %s217 = sphi 0, %s201
      %s223 = sphi 0, %s225
      %s226 = sphi 0, %s223
      %s227 = sphi 0, %s226
      %s243 = sphi 0, %s227
      %s249 = sphi 0, %s251
      %s252 = sphi 0, %s249
      %s253 = sphi 0, %s252
      %s269 = sphi 0, %s253
      %s275 = sphi 0, %s277
      %s278 = sphi 0, %s275
      %s279 = sphi 0, %s278
      %s295 = sphi 0, %s279
      %s301 = sphi 0, %s303
      %s304 = sphi 0, %s301
      %s305 = sphi 0, %s304
      %s321 = sphi 0, %s305
      %s327 = sphi 0, %s329
      %s330 = sphi 0, %s327
      %s331 = sphi 0, %s330
      %s347 = sphi 0, %s331
      %s353 = sphi 0, %s355
      %s356 = sphi 0, %s353
      %s357 = sphi 0, %s356
      %s373 = sphi 0, %s357
      %s379 = sphi 0, %s381
      %s382 = sphi 0, %s379
      %s383 = sphi 0, %s382
      %s399 = sphi 0, %s383
      %s405 = sphi 0, %s407
      %s408 = sphi 0, %s405
      %s409 = sphi 0, %s408
      %s425 = sphi 0, %s409
      %s431 = sphi 0, %s433
      %s434 = sphi 0, %s431
      %s435 = sphi 0, %s434
      %s451 = sphi 0, %s435
      %s457 = sphi 0, %s459
      %s460 = sphi 0, %s457
      %s461 = sphi 0, %s460
      %s477 = sphi 0, %s461
      %s483 = sphi 0, %s485
      %s486 = sphi 0, %s483
      %s487 = sphi 0, %s486
      %s503 = sphi 0, %s487
      %s509 = sphi 0, %s511
      %s512 = sphi 0, %s509
      %s513 = sphi 0, %s512
      %s529 = sphi 0, %s513
      %s535 = sphi 0, %s537
      %s538 = sphi 0, %s535
      %s539 = sphi 0, %s538
      %s555 = sphi 0, %s539
      %s561 = sphi 0, %s563
      %s564 = sphi 0, %s561
      %s565 = sphi 0, %s564
      %s581 = sphi 0, %s565
    $region4: #{tpu_custom_call.1} parent=1 // loop_header_branch
      %32 = sbr.rel (%p30) target = $region8
    $region5: #{tpu_custom_call.1} parent=1 // loop_body
      %s34 = ssub.s32 %s29, 1
      %s35 = ssub.s32 %s29, 2
      %s42 = sadd.s32 1, %s37
      %p43 = scmp.ge.s32.totalorder %s42, 2
      %s44 = scalar_select %p43, 0, %s42
      %s45 = sadd.s32 1, %s36
      %s46 = scalar_select %p43, %s45, %s36
      %p47 = scmp.ge.s32.totalorder %s46, 2
      %s48 = scalar_select %p47, 0, %s46
      %s49 = ssub.s32 %s37, %s44
      %p50 = scmp.eq.s32.totalorder %s49, 0
      %s52 = sadd.s32 %s51, 1
      %s53 = scalar_select %p50, %s51, %s52
      %p56 = pneg %p50
      %p57 = scmp.eq.s32.totalorder %s29, 3
      %p58 = por %p56, %p57
      %p59 = scmp.ne.s32.totalorder %s51, %s54
      %p60 = scmp.eq.s32.totalorder %s29, 0
      %p61 = por %p59, %p60
      %p62 = scmp.ne.s32.totalorder %s51, %s54
      %p63 = scmp.eq.s32.totalorder %s34, 3
      %p64 = por %p62, %p63
      %p65 = scmp.ne.s32.totalorder %s54, %s55
      %p66 = scmp.eq.s32.totalorder %s34, 0
      %p67 = por %p65, %p66
      %p68 = scmp.ne.s32.totalorder %s54, %s55
      %p69 = scmp.eq.s32.totalorder %s35, 3
      %p70 = por %p68, %p69
      %p72 = scmp.ne.s32.totalorder %s55, %s71
      %p73 = scmp.eq.s32.totalorder %s35, 0
      %p74 = por %p72, %p73
      %s75 = ssub.s32 %s37, %s44
      %p76 = scmp.eq.s32.totalorder %s75, 0
      %s78 = sadd.s32 %s77, 1
      %s79 = scalar_select %p76, %s77, %s78
      %p82 = pneg %p76
      %p83 = scmp.eq.s32.totalorder %s29, 3
      %p84 = por %p82, %p83
      %p85 = scmp.ne.s32.totalorder %s77, %s80
      %p86 = scmp.eq.s32.totalorder %s29, 0
      %p87 = por %p85, %p86
      %p88 = scmp.ne.s32.totalorder %s77, %s80
      %p89 = scmp.eq.s32.totalorder %s34, 3
      %p90 = por %p88, %p89
      %p91 = scmp.ne.s32.totalorder %s80, %s81
      %p92 = scmp.eq.s32.totalorder %s34, 0
      %p93 = por %p91, %p92
      %p94 = scmp.ne.s32.totalorder %s80, %s81
      %p95 = scmp.eq.s32.totalorder %s35, 3
      %p96 = por %p94, %p95
      %p98 = scmp.ne.s32.totalorder %s81, %s97
      %p99 = scmp.eq.s32.totalorder %s35, 0
      %p100 = por %p98, %p99
      %s101 = ssub.s32 %s37, %s44
      %p102 = scmp.eq.s32.totalorder %s101, 0
      %s104 = sadd.s32 %s103, 1
      %s105 = scalar_select %p102, %s103, %s104
      %p108 = pneg %p102
      %p109 = scmp.eq.s32.totalorder %s29, 3
      %p110 = por %p108, %p109
      %p111 = scmp.ne.s32.totalorder %s103, %s106
      %p112 = scmp.eq.s32.totalorder %s29, 0
      %p113 = por %p111, %p112
      %p114 = scmp.ne.s32.totalorder %s103, %s106
      %p115 = scmp.eq.s32.totalorder %s34, 3
      %p116 = por %p114, %p115
      %p117 = scmp.ne.s32.totalorder %s106, %s107
      %p118 = scmp.eq.s32.totalorder %s34, 0
      %p119 = por %p117, %p118
      %p120 = scmp.ne.s32.totalorder %s106, %s107
      %p121 = scmp.eq.s32.totalorder %s35, 3
      %p122 = por %p120, %p121
      %p124 = scmp.ne.s32.totalorder %s107, %s123
      %p125 = scmp.eq.s32.totalorder %s35, 0
      %p126 = por %p124, %p125
      %s127 = ssub.s32 %s37, %s44
      %p128 = scmp.eq.s32.totalorder %s127, 0
      %s130 = sadd.s32 %s129, 1
      %s131 = scalar_select %p128, %s129, %s130
      %p134 = pneg %p128
      %p135 = scmp.eq.s32.totalorder %s29, 3
      %p136 = por %p134, %p135
      %p137 = scmp.ne.s32.totalorder %s129, %s132
      %p138 = scmp.eq.s32.totalorder %s29, 0
      %p139 = por %p137, %p138
      %p140 = scmp.ne.s32.totalorder %s129, %s132
      %p141 = scmp.eq.s32.totalorder %s34, 3
      %p142 = por %p140, %p141
      %p143 = scmp.ne.s32.totalorder %s132, %s133
      %p144 = scmp.eq.s32.totalorder %s34, 0
      %p145 = por %p143, %p144
      %p146 = scmp.ne.s32.totalorder %s132, %s133
      %p147 = scmp.eq.s32.totalorder %s35, 3
      %p148 = por %p146, %p147
      %p150 = scmp.ne.s32.totalorder %s133, %s149
      %p151 = scmp.eq.s32.totalorder %s35, 0
      %p152 = por %p150, %p151
      %s154 = sadd.s32 %s153, 1
      %p157 = scmp.eq.s32.totalorder %s29, 3
      %p158 = scmp.ne.s32.totalorder %s153, %s155
      %p159 = scmp.eq.s32.totalorder %s29, 0
      %p160 = por %p158, %p159
      %p161 = scmp.ne.s32.totalorder %s153, %s155
      %p162 = scmp.eq.s32.totalorder %s34, 3
      %p163 = por %p161, %p162
      %p164 = scmp.ne.s32.totalorder %s155, %s156
      %p165 = scmp.eq.s32.totalorder %s34, 0
      %p166 = por %p164, %p165
      %p167 = scmp.ne.s32.totalorder %s155, %s156
      %p168 = scmp.eq.s32.totalorder %s35, 3
      %p169 = por %p167, %p168
      %p171 = scmp.ne.s32.totalorder %s156, %s170
      %p172 = scmp.eq.s32.totalorder %s35, 0
      %p173 = por %p171, %p172
      %s175 = sadd.s32 %s174, 1
      %p178 = scmp.eq.s32.totalorder %s29, 3
      %p179 = scmp.ne.s32.totalorder %s174, %s176
      %p180 = scmp.eq.s32.totalorder %s29, 0
      %p181 = por %p179, %p180
      %p182 = scmp.ne.s32.totalorder %s174, %s176
      %p183 = scmp.eq.s32.totalorder %s34, 3
      %p184 = por %p182, %p183
      %p185 = scmp.ne.s32.totalorder %s176, %s177
      %p186 = scmp.eq.s32.totalorder %s34, 0
      %p187 = por %p185, %p186
      %p188 = scmp.ne.s32.totalorder %s176, %s177
      %p189 = scmp.eq.s32.totalorder %s35, 3
      %p190 = por %p188, %p189
      %p192 = scmp.ne.s32.totalorder %s177, %s191
      %p193 = scmp.eq.s32.totalorder %s35, 0
      %p194 = por %p192, %p193
      %s195 = ssub.s32 %s36, %s48
      %p196 = scmp.eq.s32.totalorder %s195, 0
      %s198 = sadd.s32 %s197, 1
      %s199 = scalar_select %p196, %s197, %s198
      %p202 = pneg %p196
      %p203 = scmp.eq.s32.totalorder %s29, 3
      %p204 = por %p202, %p203
      %p205 = scmp.ne.s32.totalorder %s197, %s200
      %p206 = scmp.eq.s32.totalorder %s29, 0
      %p207 = por %p205, %p206
      %p208 = scmp.ne.s32.totalorder %s197, %s200
      %p209 = scmp.eq.s32.totalorder %s34, 3
      %p210 = por %p208, %p209
      %p211 = scmp.ne.s32.totalorder %s200, %s201
      %p212 = scmp.eq.s32.totalorder %s34, 0
      %p213 = por %p211, %p212
      %p214 = scmp.ne.s32.totalorder %s200, %s201
      %p215 = scmp.eq.s32.totalorder %s35, 3
      %p216 = por %p214, %p215
      %p218 = scmp.ne.s32.totalorder %s201, %s217
      %p219 = scmp.eq.s32.totalorder %s35, 0
      %p220 = por %p218, %p219
      %s221 = ssub.s32 %s36, %s48
      %p222 = scmp.eq.s32.totalorder %s221, 0
      %s224 = sadd.s32 %s223, 1
      %s225 = scalar_select %p222, %s223, %s224
      %p228 = pneg %p222
      %p229 = scmp.eq.s32.totalorder %s29, 3
      %p230 = por %p228, %p229
      %p231 = scmp.ne.s32.totalorder %s223, %s226
      %p232 = scmp.eq.s32.totalorder %s29, 0
      %p233 = por %p231, %p232
      %p234 = scmp.ne.s32.totalorder %s223, %s226
      %p235 = scmp.eq.s32.totalorder %s34, 3
      %p236 = por %p234, %p235
      %p237 = scmp.ne.s32.totalorder %s226, %s227
      %p238 = scmp.eq.s32.totalorder %s34, 0
      %p239 = por %p237, %p238
      %p240 = scmp.ne.s32.totalorder %s226, %s227
      %p241 = scmp.eq.s32.totalorder %s35, 3
      %p242 = por %p240, %p241
      %p244 = scmp.ne.s32.totalorder %s227, %s243
      %p245 = scmp.eq.s32.totalorder %s35, 0
      %p246 = por %p244, %p245
      %s247 = ssub.s32 %s36, %s48
      %p248 = scmp.eq.s32.totalorder %s247, 0
      %s250 = sadd.s32 %s249, 1
      %s251 = scalar_select %p248, %s249, %s250
      %p254 = pneg %p248
      %p255 = scmp.eq.s32.totalorder %s29, 3
      %p256 = por %p254, %p255
      %p257 = scmp.ne.s32.totalorder %s249, %s252
      %p258 = scmp.eq.s32.totalorder %s29, 0
      %p259 = por %p257, %p258
      %p260 = scmp.ne.s32.totalorder %s249, %s252
      %p261 = scmp.eq.s32.totalorder %s34, 3
      %p262 = por %p260, %p261
      %p263 = scmp.ne.s32.totalorder %s252, %s253
      %p264 = scmp.eq.s32.totalorder %s34, 0
      %p265 = por %p263, %p264
      %p266 = scmp.ne.s32.totalorder %s252, %s253
      %p267 = scmp.eq.s32.totalorder %s35, 3
      %p268 = por %p266, %p267
      %p270 = scmp.ne.s32.totalorder %s253, %s269
      %p271 = scmp.eq.s32.totalorder %s35, 0
      %p272 = por %p270, %p271
      %s273 = ssub.s32 %s36, %s48
      %p274 = scmp.eq.s32.totalorder %s273, 0
      %s276 = sadd.s32 %s275, 1
      %s277 = scalar_select %p274, %s275, %s276
      %p280 = pneg %p274
      %p281 = scmp.eq.s32.totalorder %s29, 3
      %p282 = por %p280, %p281
      %p283 = scmp.ne.s32.totalorder %s275, %s278
      %p284 = scmp.eq.s32.totalorder %s29, 0
      %p285 = por %p283, %p284
      %p286 = scmp.ne.s32.totalorder %s275, %s278
      %p287 = scmp.eq.s32.totalorder %s34, 3
      %p288 = por %p286, %p287
      %p289 = scmp.ne.s32.totalorder %s278, %s279
      %p290 = scmp.eq.s32.totalorder %s34, 0
      %p291 = por %p289, %p290
      %p292 = scmp.ne.s32.totalorder %s278, %s279
      %p293 = scmp.eq.s32.totalorder %s35, 3
      %p294 = por %p292, %p293
      %p296 = scmp.ne.s32.totalorder %s279, %s295
      %p297 = scmp.eq.s32.totalorder %s35, 0
      %p298 = por %p296, %p297
      %s299 = ssub.s32 %s36, %s48
      %p300 = scmp.eq.s32.totalorder %s299, 0
      %s302 = sadd.s32 %s301, 1
      %s303 = scalar_select %p300, %s301, %s302
      %p306 = pneg %p300
      %p307 = scmp.eq.s32.totalorder %s29, 3
      %p308 = por %p306, %p307
      %p309 = scmp.ne.s32.totalorder %s301, %s304
      %p310 = scmp.eq.s32.totalorder %s29, 0
      %p311 = por %p309, %p310
      %p312 = scmp.ne.s32.totalorder %s301, %s304
      %p313 = scmp.eq.s32.totalorder %s34, 3
      %p314 = por %p312, %p313
      %p315 = scmp.ne.s32.totalorder %s304, %s305
      %p316 = scmp.eq.s32.totalorder %s34, 0
      %p317 = por %p315, %p316
      %p318 = scmp.ne.s32.totalorder %s304, %s305
      %p319 = scmp.eq.s32.totalorder %s35, 3
      %p320 = por %p318, %p319
      %p322 = scmp.ne.s32.totalorder %s305, %s321
      %p323 = scmp.eq.s32.totalorder %s35, 0
      %p324 = por %p322, %p323
      %s325 = ssub.s32 %s36, %s48
      %p326 = scmp.eq.s32.totalorder %s325, 0
      %s328 = sadd.s32 %s327, 1
      %s329 = scalar_select %p326, %s327, %s328
      %p332 = pneg %p326
      %p333 = scmp.eq.s32.totalorder %s29, 3
      %p334 = por %p332, %p333
      %p335 = scmp.ne.s32.totalorder %s327, %s330
      %p336 = scmp.eq.s32.totalorder %s29, 0
      %p337 = por %p335, %p336
      %p338 = scmp.ne.s32.totalorder %s327, %s330
      %p339 = scmp.eq.s32.totalorder %s34, 3
      %p340 = por %p338, %p339
      %p341 = scmp.ne.s32.totalorder %s330, %s331
      %p342 = scmp.eq.s32.totalorder %s34, 0
      %p343 = por %p341, %p342
      %p344 = scmp.ne.s32.totalorder %s330, %s331
      %p345 = scmp.eq.s32.totalorder %s35, 3
      %p346 = por %p344, %p345
      %p348 = scmp.ne.s32.totalorder %s331, %s347
      %p349 = scmp.eq.s32.totalorder %s35, 0
      %p350 = por %p348, %p349
      %s351 = ssub.s32 %s36, %s48
      %p352 = scmp.eq.s32.totalorder %s351, 0
      %s354 = sadd.s32 %s353, 1
      %s355 = scalar_select %p352, %s353, %s354
      %p358 = pneg %p352
      %p359 = scmp.eq.s32.totalorder %s29, 3
      %p360 = por %p358, %p359
      %p361 = scmp.ne.s32.totalorder %s353, %s356
      %p362 = scmp.eq.s32.totalorder %s29, 0
      %p363 = por %p361, %p362
      %p364 = scmp.ne.s32.totalorder %s353, %s356
      %p365 = scmp.eq.s32.totalorder %s34, 3
      %p366 = por %p364, %p365
      %p367 = scmp.ne.s32.totalorder %s356, %s357
      %p368 = scmp.eq.s32.totalorder %s34, 0
      %p369 = por %p367, %p368
      %p370 = scmp.ne.s32.totalorder %s356, %s357
      %p371 = scmp.eq.s32.totalorder %s35, 3
      %p372 = por %p370, %p371
      %p374 = scmp.ne.s32.totalorder %s357, %s373
      %p375 = scmp.eq.s32.totalorder %s35, 0
      %p376 = por %p374, %p375
      %s377 = ssub.s32 %s36, %s48
      %p378 = scmp.eq.s32.totalorder %s377, 0
      %s380 = sadd.s32 %s379, 1
      %s381 = scalar_select %p378, %s379, %s380
      %p384 = pneg %p378
      %p385 = scmp.eq.s32.totalorder %s29, 3
      %p386 = por %p384, %p385
      %p387 = scmp.ne.s32.totalorder %s379, %s382
      %p388 = scmp.eq.s32.totalorder %s29, 0
      %p389 = por %p387, %p388
      %p390 = scmp.ne.s32.totalorder %s379, %s382
      %p391 = scmp.eq.s32.totalorder %s34, 3
      %p392 = por %p390, %p391
      %p393 = scmp.ne.s32.totalorder %s382, %s383
      %p394 = scmp.eq.s32.totalorder %s34, 0
      %p395 = por %p393, %p394
      %p396 = scmp.ne.s32.totalorder %s382, %s383
      %p397 = scmp.eq.s32.totalorder %s35, 3
      %p398 = por %p396, %p397
      %p400 = scmp.ne.s32.totalorder %s383, %s399
      %p401 = scmp.eq.s32.totalorder %s35, 0
      %p402 = por %p400, %p401
      %s403 = ssub.s32 %s36, %s48
      %p404 = scmp.eq.s32.totalorder %s403, 0
      %s406 = sadd.s32 %s405, 1
      %s407 = scalar_select %p404, %s405, %s406
      %p410 = pneg %p404
      %p411 = scmp.eq.s32.totalorder %s29, 3
      %p412 = por %p410, %p411
      %p413 = scmp.ne.s32.totalorder %s405, %s408
      %p414 = scmp.eq.s32.totalorder %s29, 0
      %p415 = por %p413, %p414
      %p416 = scmp.ne.s32.totalorder %s405, %s408
      %p417 = scmp.eq.s32.totalorder %s34, 3
      %p418 = por %p416, %p417
      %p419 = scmp.ne.s32.totalorder %s408, %s409
      %p420 = scmp.eq.s32.totalorder %s34, 0
      %p421 = por %p419, %p420
      %p422 = scmp.ne.s32.totalorder %s408, %s409
      %p423 = scmp.eq.s32.totalorder %s35, 3
      %p424 = por %p422, %p423
      %p426 = scmp.ne.s32.totalorder %s409, %s425
      %p427 = scmp.eq.s32.totalorder %s35, 0
      %p428 = por %p426, %p427
      %s429 = ssub.s32 %s36, %s48
      %p430 = scmp.eq.s32.totalorder %s429, 0
      %s432 = sadd.s32 %s431, 1
      %s433 = scalar_select %p430, %s431, %s432
      %p436 = pneg %p430
      %p437 = scmp.eq.s32.totalorder %s29, 3
      %p438 = por %p436, %p437
      %p439 = scmp.ne.s32.totalorder %s431, %s434
      %p440 = scmp.eq.s32.totalorder %s29, 0
      %p441 = por %p439, %p440
      %p442 = scmp.ne.s32.totalorder %s431, %s434
      %p443 = scmp.eq.s32.totalorder %s34, 3
      %p444 = por %p442, %p443
      %p445 = scmp.ne.s32.totalorder %s434, %s435
      %p446 = scmp.eq.s32.totalorder %s34, 0
      %p447 = por %p445, %p446
      %p448 = scmp.ne.s32.totalorder %s434, %s435
      %p449 = scmp.eq.s32.totalorder %s35, 3
      %p450 = por %p448, %p449
      %p452 = scmp.ne.s32.totalorder %s435, %s451
      %p453 = scmp.eq.s32.totalorder %s35, 0
      %p454 = por %p452, %p453
      %s455 = ssub.s32 %s36, %s48
      %p456 = scmp.eq.s32.totalorder %s455, 0
      %s458 = sadd.s32 %s457, 1
      %s459 = scalar_select %p456, %s457, %s458
      %p462 = pneg %p456
      %p463 = scmp.eq.s32.totalorder %s29, 3
      %p464 = por %p462, %p463
      %p465 = scmp.ne.s32.totalorder %s457, %s460
      %p466 = scmp.eq.s32.totalorder %s29, 0
      %p467 = por %p465, %p466
      %p468 = scmp.ne.s32.totalorder %s457, %s460
      %p469 = scmp.eq.s32.totalorder %s34, 3
      %p470 = por %p468, %p469
      %p471 = scmp.ne.s32.totalorder %s460, %s461
      %p472 = scmp.eq.s32.totalorder %s34, 0
      %p473 = por %p471, %p472
      %p474 = scmp.ne.s32.totalorder %s460, %s461
      %p475 = scmp.eq.s32.totalorder %s35, 3
      %p476 = por %p474, %p475
      %p478 = scmp.ne.s32.totalorder %s461, %s477
      %p479 = scmp.eq.s32.totalorder %s35, 0
      %p480 = por %p478, %p479
      %s481 = ssub.s32 %s36, %s48
      %p482 = scmp.eq.s32.totalorder %s481, 0
      %s484 = sadd.s32 %s483, 1
      %s485 = scalar_select %p482, %s483, %s484
      %p488 = pneg %p482
      %p489 = scmp.eq.s32.totalorder %s29, 3
      %p490 = por %p488, %p489
      %p491 = scmp.ne.s32.totalorder %s483, %s486
      %p492 = scmp.eq.s32.totalorder %s29, 0
      %p493 = por %p491, %p492
      %p494 = scmp.ne.s32.totalorder %s483, %s486
      %p495 = scmp.eq.s32.totalorder %s34, 3
      %p496 = por %p494, %p495
      %p497 = scmp.ne.s32.totalorder %s486, %s487
      %p498 = scmp.eq.s32.totalorder %s34, 0
      %p499 = por %p497, %p498
      %p500 = scmp.ne.s32.totalorder %s486, %s487
      %p501 = scmp.eq.s32.totalorder %s35, 3
      %p502 = por %p500, %p501
      %p504 = scmp.ne.s32.totalorder %s487, %s503
      %p505 = scmp.eq.s32.totalorder %s35, 0
      %p506 = por %p504, %p505
      %s507 = ssub.s32 %s36, %s48
      %p508 = scmp.eq.s32.totalorder %s507, 0
      %s510 = sadd.s32 %s509, 1
      %s511 = scalar_select %p508, %s509, %s510
      %p514 = pneg %p508
      %p515 = scmp.eq.s32.totalorder %s29, 3
      %p516 = por %p514, %p515
      %p517 = scmp.ne.s32.totalorder %s509, %s512
      %p518 = scmp.eq.s32.totalorder %s29, 0
      %p519 = por %p517, %p518
      %p520 = scmp.ne.s32.totalorder %s509, %s512
      %p521 = scmp.eq.s32.totalorder %s34, 3
      %p522 = por %p520, %p521
      %p523 = scmp.ne.s32.totalorder %s512, %s513
      %p524 = scmp.eq.s32.totalorder %s34, 0
      %p525 = por %p523, %p524
      %p526 = scmp.ne.s32.totalorder %s512, %s513
      %p527 = scmp.eq.s32.totalorder %s35, 3
      %p528 = por %p526, %p527
      %p530 = scmp.ne.s32.totalorder %s513, %s529
      %p531 = scmp.eq.s32.totalorder %s35, 0
      %p532 = por %p530, %p531
      %s533 = ssub.s32 %s36, %s48
      %p534 = scmp.eq.s32.totalorder %s533, 0
      %s536 = sadd.s32 %s535, 1
      %s537 = scalar_select %p534, %s535, %s536
      %p540 = pneg %p534
      %p541 = scmp.eq.s32.totalorder %s29, 3
      %p542 = por %p540, %p541
      %p543 = scmp.ne.s32.totalorder %s535, %s538
      %p544 = scmp.eq.s32.totalorder %s29, 0
      %p545 = por %p543, %p544
      %p546 = scmp.ne.s32.totalorder %s535, %s538
      %p547 = scmp.eq.s32.totalorder %s34, 3
      %p548 = por %p546, %p547
      %p549 = scmp.ne.s32.totalorder %s538, %s539
      %p550 = scmp.eq.s32.totalorder %s34, 0
      %p551 = por %p549, %p550
      %p552 = scmp.ne.s32.totalorder %s538, %s539
      %p553 = scmp.eq.s32.totalorder %s35, 3
      %p554 = por %p552, %p553
      %p556 = scmp.ne.s32.totalorder %s539, %s555
      %p557 = scmp.eq.s32.totalorder %s35, 0
      %p558 = por %p556, %p557
      %s559 = ssub.s32 %s37, %s44
      %p560 = scmp.eq.s32.totalorder %s559, 0
      %s562 = sadd.s32 %s561, 1
      %s563 = scalar_select %p560, %s561, %s562
      %p566 = pneg %p560
      %p567 = scmp.eq.s32.totalorder %s29, 3
      %p568 = por %p566, %p567
      %p569 = scmp.ne.s32.totalorder %s561, %s564
      %p570 = scmp.eq.s32.totalorder %s29, 0
      %p571 = por %p569, %p570
      %p572 = scmp.ne.s32.totalorder %s561, %s564
      %p573 = scmp.eq.s32.totalorder %s34, 3
      %p574 = por %p572, %p573
      %p575 = scmp.ne.s32.totalorder %s564, %s565
      %p576 = scmp.eq.s32.totalorder %s34, 0
      %p577 = por %p575, %p576
      %p578 = scmp.ne.s32.totalorder %s564, %s565
      %p579 = scmp.eq.s32.totalorder %s35, 3
      %p580 = por %p578, %p579
      %p582 = scmp.ne.s32.totalorder %s565, %s581
      %p583 = scmp.eq.s32.totalorder %s35, 0
      %p584 = por %p582, %p583
      %p585 = scmp.le.s32.totalorder 1, %s29
      %p586 = scmp.lt.s32.totalorder %s29, 5
      %p587 = pnand %p585, %p586
      %p588 = pneg %p587
      // Predicated region
      $region9: #{tpu_custom_call.1} parent=5 // pred_check
        _
      $region10: #{tpu_custom_call.1} parent=5 // pred_check_branch
        %590 = sbr.rel (%p587) target = $region12
      $region11: #{tpu_custom_call.1} parent=5 // pred_region
        %s591 = ssub.s32 %s29, 1
        // Predicated region
        $region13: #{tpu_custom_call.1} parent=11 // pred_check
          %p592 = pneg %p166
        $region14: #{tpu_custom_call.1} parent=11 // pred_check_branch
          %594 = sbr.rel (%p592) target = $region16
        $region15: #{tpu_custom_call.1} parent=11 // pred_region
          _
        $region16: #{tpu_custom_call.1} parent=11 // pred_fallthru
          _
        // Predicated region
        $region17: #{tpu_custom_call.1} parent=11 // pred_check
          %p595 = pneg %p187
        $region18: #{tpu_custom_call.1} parent=11 // pred_check_branch
          %597 = sbr.rel (%p595) target = $region20
        $region19: #{tpu_custom_call.1} parent=11 // pred_region
          _
        $region20: #{tpu_custom_call.1} parent=11 // pred_fallthru
          _
      $region12: #{tpu_custom_call.1} parent=5 // pred_fallthru
        _
      %p598 = scmp.lt.s32.totalorder %s29, 4
      // Predicated region
      $region21: #{tpu_custom_call.1} parent=5 // pred_check
        %p599 = pneg %p598
      $region22: #{tpu_custom_call.1} parent=5 // pred_check_branch
        %601 = sbr.rel (%p599) target = $region24
      $region23: #{tpu_custom_call.1} parent=5 // pred_region
        // Predicated region
        $region25: #{tpu_custom_call.1} parent=23 // pred_check
          %p602 = pneg %p61
        $region26: #{tpu_custom_call.1} parent=23 // pred_check_branch
          %604 = sbr.rel (%p602) target = $region28
        $region27: #{tpu_custom_call.1} parent=23 // pred_region
          %p605 = scmp.lt.s32.totalorder %s37, 1
          %s606 = scalar_select %p605, %s37, 1
          %s607 = smul.addr %s606, 8
          %s608 = scalar_lea.vmem %s0, %s607
        $region28: #{tpu_custom_call.1} parent=23 // pred_fallthru
          _
        // Predicated region
        $region29: #{tpu_custom_call.1} parent=23 // pred_check
          %p609 = pneg %p87
        $region30: #{tpu_custom_call.1} parent=23 // pred_check_branch
          %611 = sbr.rel (%p609) target = $region32
        $region31: #{tpu_custom_call.1} parent=23 // pred_region
          %p612 = scmp.lt.s32.totalorder %s37, 1
          %s613 = scalar_select %p612, %s37, 1
          %s614 = scalar_lea.vmem %s1, %s613
        $region32: #{tpu_custom_call.1} parent=23 // pred_fallthru
          _
        // Predicated region
        $region33: #{tpu_custom_call.1} parent=23 // pred_check
          %p615 = pneg %p113
        $region34: #{tpu_custom_call.1} parent=23 // pred_check_branch
          %617 = sbr.rel (%p615) target = $region36
        $region35: #{tpu_custom_call.1} parent=23 // pred_region
          %p618 = scmp.lt.s32.totalorder %s37, 1
          %s619 = scalar_select %p618, %s37, 1
          %s620 = scalar_lea.vmem %s2, %s619
        $region36: #{tpu_custom_call.1} parent=23 // pred_fallthru
          _
        // Predicated region
        $region37: #{tpu_custom_call.1} parent=23 // pred_check
          %p621 = pneg %p139
        $region38: #{tpu_custom_call.1} parent=23 // pred_check_branch
          %623 = sbr.rel (%p621) target = $region40
        $region39: #{tpu_custom_call.1} parent=23 // pred_region
          %p624 = scmp.lt.s32.totalorder %s37, 1
          %s625 = scalar_select %p624, %s37, 1
          %s626 = smul.addr %s625, 8
          %s627 = scalar_lea.vmem %s3, %s626
        $region40: #{tpu_custom_call.1} parent=23 // pred_fallthru
          _
        // Predicated region
        $region41: #{tpu_custom_call.1} parent=23 // pred_check
          %p628 = pneg %p207
        $region42: #{tpu_custom_call.1} parent=23 // pred_check_branch
          %630 = sbr.rel (%p628) target = $region44
        $region43: #{tpu_custom_call.1} parent=23 // pred_region
          %p631 = scmp.lt.s32.totalorder %s36, 1
          %s632 = scalar_select %p631, %s36, 1
          %s633 = scalar_lea.vmem %s6, %s632
        $region44: #{tpu_custom_call.1} parent=23 // pred_fallthru
          _
        // Predicated region
        $region45: #{tpu_custom_call.1} parent=23 // pred_check
          %p634 = pneg %p233
        $region46: #{tpu_custom_call.1} parent=23 // pred_check_branch
          %636 = sbr.rel (%p634) target = $region48
        $region47: #{tpu_custom_call.1} parent=23 // pred_region
          %p637 = scmp.lt.s32.totalorder %s36, 1
          %s638 = scalar_select %p637, %s36, 1
          %s639 = scalar_lea.vmem %s7, %s638
        $region48: #{tpu_custom_call.1} parent=23 // pred_fallthru
          _
        // Predicated region
        $region49: #{tpu_custom_call.1} parent=23 // pred_check
          %p640 = pneg %p259
        $region50: #{tpu_custom_call.1} parent=23 // pred_check_branch
          %642 = sbr.rel (%p640) target = $region52
        $region51: #{tpu_custom_call.1} parent=23 // pred_region
          %p643 = scmp.lt.s32.totalorder %s36, 1
          %s644 = scalar_select %p643, %s36, 1
          %s645 = smul.addr %s644, 4
          %s646 = smul.addr %s645, 4
          %s647 = scalar_lea.vmem %s8, %s646
        $region52: #{tpu_custom_call.1} parent=23 // pred_fallthru
          _
        // Predicated region
        $region53: #{tpu_custom_call.1} parent=23 // pred_check
          %p648 = pneg %p285
        $region54: #{tpu_custom_call.1} parent=23 // pred_check_branch
          %650 = sbr.rel (%p648) target = $region56
        $region55: #{tpu_custom_call.1} parent=23 // pred_region
          %p651 = scmp.lt.s32.totalorder %s36, 1
          %s652 = scalar_select %p651, %s36, 1
          %s653 = scalar_lea.vmem %s9, %s652
        $region56: #{tpu_custom_call.1} parent=23 // pred_fallthru
          _
        // Predicated region
        $region57: #{tpu_custom_call.1} parent=23 // pred_check
          %p654 = pneg %p311
        $region58: #{tpu_custom_call.1} parent=23 // pred_check_branch
          %656 = sbr.rel (%p654) target = $region60
        $region59: #{tpu_custom_call.1} parent=23 // pred_region
          %p657 = scmp.lt.s32.totalorder %s36, 1
          %s658 = scalar_select %p657, %s36, 1
          %s659 = smul.addr %s658, 4
          %s660 = smul.addr %s659, 4
          %s661 = scalar_lea.vmem %s10, %s660
        $region60: #{tpu_custom_call.1} parent=23 // pred_fallthru
          _
        // Predicated region
        $region61: #{tpu_custom_call.1} parent=23 // pred_check
          %p662 = pneg %p337
        $region62: #{tpu_custom_call.1} parent=23 // pred_check_branch
          %664 = sbr.rel (%p662) target = $region64
        $region63: #{tpu_custom_call.1} parent=23 // pred_region
          %p665 = scmp.lt.s32.totalorder %s36, 1
          %s666 = scalar_select %p665, %s36, 1
          %s667 = scalar_lea.vmem %s11, %s666
        $region64: #{tpu_custom_call.1} parent=23 // pred_fallthru
          _
        // Predicated region
        $region65: #{tpu_custom_call.1} parent=23 // pred_check
          %p668 = pneg %p363
        $region66: #{tpu_custom_call.1} parent=23 // pred_check_branch
          %670 = sbr.rel (%p668) target = $region68
        $region67: #{tpu_custom_call.1} parent=23 // pred_region
          %p671 = scmp.lt.s32.totalorder %s36, 1
          %s672 = scalar_select %p671, %s36, 1
          %s673 = scalar_lea.vmem %s12, %s672
        $region68: #{tpu_custom_call.1} parent=23 // pred_fallthru
          _
        // Predicated region
        $region69: #{tpu_custom_call.1} parent=23 // pred_check
          %p674 = pneg %p389
        $region70: #{tpu_custom_call.1} parent=23 // pred_check_branch
          %676 = sbr.rel (%p674) target = $region72
        $region71: #{tpu_custom_call.1} parent=23 // pred_region
          %p677 = scmp.lt.s32.totalorder %s36, 1
          %s678 = scalar_select %p677, %s36, 1
          %s679 = scalar_lea.vmem %s13, %s678
        $region72: #{tpu_custom_call.1} parent=23 // pred_fallthru
          _
        // Predicated region
        $region73: #{tpu_custom_call.1} parent=23 // pred_check
          %p680 = pneg %p415
        $region74: #{tpu_custom_call.1} parent=23 // pred_check_branch
          %682 = sbr.rel (%p680) target = $region76
        $region75: #{tpu_custom_call.1} parent=23 // pred_region
          %p683 = scmp.lt.s32.totalorder %s36, 1
          %s684 = scalar_select %p683, %s36, 1
          %s685 = smul.addr %s684, 4
          %s686 = smul.addr %s685, 4
          %s687 = scalar_lea.vmem %s14, %s686
        $region76: #{tpu_custom_call.1} parent=23 // pred_fallthru
          _
        // Predicated region
        $region77: #{tpu_custom_call.1} parent=23 // pred_check
          %p688 = pneg %p441
        $region78: #{tpu_custom_call.1} parent=23 // pred_check_branch
          %690 = sbr.rel (%p688) target = $region80
        $region79: #{tpu_custom_call.1} parent=23 // pred_region
          %p691 = scmp.lt.s32.totalorder %s36, 1
          %s692 = scalar_select %p691, %s36, 1
          %s693 = scalar_lea.vmem %s15, %s692
        $region80: #{tpu_custom_call.1} parent=23 // pred_fallthru
          _
        // Predicated region
        $region81: #{tpu_custom_call.1} parent=23 // pred_check
          %p694 = pneg %p467
        $region82: #{tpu_custom_call.1} parent=23 // pred_check_branch
          %696 = sbr.rel (%p694) target = $region84
        $region83: #{tpu_custom_call.1} parent=23 // pred_region
          %p697 = scmp.lt.s32.totalorder %s36, 1
          %s698 = scalar_select %p697, %s36, 1
          %s699 = smul.addr %s698, 16
          %s700 = smul.addr %s699, 4
          %s701 = scalar_lea.vmem %s16, %s700
        $region84: #{tpu_custom_call.1} parent=23 // pred_fallthru
          _
        // Predicated region
        $region85: #{tpu_custom_call.1} parent=23 // pred_check
          %p702 = pneg %p493
        $region86: #{tpu_custom_call.1} parent=23 // pred_check_branch
          %704 = sbr.rel (%p702) target = $region88
        $region87: #{tpu_custom_call.1} parent=23 // pred_region
          %p705 = scmp.lt.s32.totalorder %s36, 1
          %s706 = scalar_select %p705, %s36, 1
          %s707 = scalar_lea.vmem %s17, %s706
        $region88: #{tpu_custom_call.1} parent=23 // pred_fallthru
          _
        // Predicated region
        $region89: #{tpu_custom_call.1} parent=23 // pred_check
          %p708 = pneg %p519
        $region90: #{tpu_custom_call.1} parent=23 // pred_check_branch
          %710 = sbr.rel (%p708) target = $region92
        $region91: #{tpu_custom_call.1} parent=23 // pred_region
          %p711 = scmp.lt.s32.totalorder %s36, 1
          %s712 = scalar_select %p711, %s36, 1
          %s713 = smul.addr %s712, 4
          %s714 = smul.addr %s713, 4
          %s715 = scalar_lea.vmem %s18, %s714
        $region92: #{tpu_custom_call.1} parent=23 // pred_fallthru
          _
        // Predicated region
        $region93: #{tpu_custom_call.1} parent=23 // pred_check
          %p716 = pneg %p545
        $region94: #{tpu_custom_call.1} parent=23 // pred_check_branch
          %718 = sbr.rel (%p716) target = $region96
        $region95: #{tpu_custom_call.1} parent=23 // pred_region
          %p719 = scmp.lt.s32.totalorder %s36, 1
          %s720 = scalar_select %p719, %s36, 1
          %s721 = scalar_lea.vmem %s19, %s720
        $region96: #{tpu_custom_call.1} parent=23 // pred_fallthru
          _
      $region24: #{tpu_custom_call.1} parent=5 // pred_fallthru
        _
      %p722 = scmp.le.s32.totalorder 1, %s29
      %p723 = scmp.lt.s32.totalorder %s29, 5
      %p724 = pnand %p722, %p723
      %p725 = pneg %p724
      // Predicated region
      $region97: #{tpu_custom_call.1} parent=5 // pred_check
        _
      $region98: #{tpu_custom_call.1} parent=5 // pred_check_branch
        %727 = sbr.rel (%p724) target = $region100
      $region99: #{tpu_custom_call.1} parent=5 // pred_region
        %s728 = ssub.s32 %s29, 1
        %p729 = scmp.lt.s32.totalorder %s39, 1
        %s730 = scalar_select %p729, %s39, 1
        %s731 = smul.addr %s730, 8
        %s732 = scalar_lea.vmem %s0, %s731
        %p733 = pneg %p67
        %p734 = pneg %p64
        %p735 = scmp.lt.s32.totalorder %s39, 1
        %s736 = scalar_select %p735, %s39, 1
        %s737 = scalar_lea.vmem %s1, %s736
        %p738 = pneg %p93
        %p739 = pneg %p90
        %p740 = scmp.lt.s32.totalorder %s39, 1
        %s741 = scalar_select %p740, %s39, 1
        %s742 = scalar_lea.vmem %s2, %s741
        %p743 = pneg %p119
        %p744 = pneg %p116
        %p745 = scmp.lt.s32.totalorder %s39, 1
        %s746 = scalar_select %p745, %s39, 1
        %s747 = smul.addr %s746, 8
        %s748 = scalar_lea.vmem %s3, %s747
        %p749 = pneg %p145
        %p750 = pneg %p142
        %p751 = pneg %p166
        %p752 = pneg %p163
        %p753 = pneg %p187
        %p754 = pneg %p184
        %p755 = scmp.lt.s32.totalorder %s38, 1
        %s756 = scalar_select %p755, %s38, 1
        %s757 = scalar_lea.vmem %s6, %s756
        %p758 = pneg %p213
        %p759 = pneg %p210
        %p760 = scmp.lt.s32.totalorder %s38, 1
        %s761 = scalar_select %p760, %s38, 1
        %s762 = scalar_lea.vmem %s7, %s761
        %p763 = pneg %p239
        %p764 = pneg %p236
        %p765 = scmp.lt.s32.totalorder %s38, 1
        %s766 = scalar_select %p765, %s38, 1
        %s767 = smul.addr %s766, 4
        %s768 = smul.addr %s767, 4
        %s769 = scalar_lea.vmem %s8, %s768
        %p770 = pneg %p265
        %p771 = pneg %p262
        %p772 = scmp.lt.s32.totalorder %s38, 1
        %s773 = scalar_select %p772, %s38, 1
        %s774 = scalar_lea.vmem %s9, %s773
        %p775 = pneg %p291
        %p776 = pneg %p288
        %p777 = scmp.lt.s32.totalorder %s38, 1
        %s778 = scalar_select %p777, %s38, 1
        %s779 = smul.addr %s778, 4
        %s780 = smul.addr %s779, 4
        %s781 = scalar_lea.vmem %s10, %s780
        %p782 = pneg %p317
        %p783 = pneg %p314
        %p784 = scmp.lt.s32.totalorder %s38, 1
        %s785 = scalar_select %p784, %s38, 1
        %s786 = scalar_lea.vmem %s11, %s785
        %p787 = pneg %p343
        %p788 = pneg %p340
        %p789 = scmp.lt.s32.totalorder %s38, 1
        %s790 = scalar_select %p789, %s38, 1
        %s791 = scalar_lea.vmem %s12, %s790
        %p792 = pneg %p369
        %p793 = pneg %p366
        %p794 = scmp.lt.s32.totalorder %s38, 1
        %s795 = scalar_select %p794, %s38, 1
        %s796 = scalar_lea.vmem %s13, %s795
        %p797 = pneg %p395
        %p798 = pneg %p392
        %p799 = scmp.lt.s32.totalorder %s38, 1
        %s800 = scalar_select %p799, %s38, 1
        %s801 = smul.addr %s800, 4
        %s802 = smul.addr %s801, 4
        %s803 = scalar_lea.vmem %s14, %s802
        %p804 = pneg %p421
        %p805 = pneg %p418
        %p806 = scmp.lt.s32.totalorder %s38, 1
        %s807 = scalar_select %p806, %s38, 1
        %s808 = scalar_lea.vmem %s15, %s807
        %p809 = pneg %p447
        %p810 = pneg %p444
        %p811 = scmp.lt.s32.totalorder %s38, 1
        %s812 = scalar_select %p811, %s38, 1
        %s813 = smul.addr %s812, 16
        %s814 = smul.addr %s813, 4
        %s815 = scalar_lea.vmem %s16, %s814
        %p816 = pneg %p473
        %p817 = pneg %p470
        %p818 = scmp.lt.s32.totalorder %s38, 1
        %s819 = scalar_select %p818, %s38, 1
        %s820 = scalar_lea.vmem %s17, %s819
        %p821 = pneg %p499
        %p822 = pneg %p496
        %p823 = scmp.lt.s32.totalorder %s38, 1
        %s824 = scalar_select %p823, %s38, 1
        %s825 = smul.addr %s824, 4
        %s826 = smul.addr %s825, 4
        %s827 = scalar_lea.vmem %s18, %s826
        %p828 = pneg %p525
        %p829 = pneg %p522
        %p830 = scmp.lt.s32.totalorder %s38, 1
        %s831 = scalar_select %p830, %s38, 1
        %s832 = scalar_lea.vmem %s19, %s831
        %p833 = pneg %p551
        %p834 = pneg %p548
        %p835 = pneg %p577
        %p836 = pneg %p574
        %s837 = sand.u32 %s564, 1
        %s838 = scalar_lea.sflag [#allocation9], %s837
        %s839 = sand.u32 %s564, 1
        %s840 = smul.addr %s839, 8
        %s841 = scalar_lea.vmem [#allocation8], %s840
        %p842 = scmp.lt.s32.totalorder %s39, 1
        %s843 = scalar_select %p842, %s39, 1
        %s844 = smul.addr %s843, 8
        %s845 = scalar_lea.vmem %s0, %s844
        %p846 = scmp.lt.s32.totalorder %s39, 1
        %s847 = scalar_select %p846, %s39, 1
        %s848 = scalar_lea.vmem %s1, %s847
        %p849 = scmp.lt.s32.totalorder %s39, 1
        %s850 = scalar_select %p849, %s39, 1
        %s851 = scalar_lea.vmem %s2, %s850
        %p852 = scmp.lt.s32.totalorder %s39, 1
        %s853 = scalar_select %p852, %s39, 1
        %s854 = smul.addr %s853, 8
        %s855 = scalar_lea.vmem %s3, %s854
        %p856 = scmp.lt.s32.totalorder %s38, 1
        %s857 = scalar_select %p856, %s38, 1
        %s858 = scalar_lea.vmem %s6, %s857
        %p859 = scmp.lt.s32.totalorder %s38, 1
        %s860 = scalar_select %p859, %s38, 1
        %s861 = scalar_lea.vmem %s7, %s860
        %p862 = scmp.lt.s32.totalorder %s38, 1
        %s863 = scalar_select %p862, %s38, 1
        %s864 = smul.addr %s863, 4
        %s865 = smul.addr %s864, 4
        %s866 = scalar_lea.vmem %s8, %s865
        %p867 = scmp.lt.s32.totalorder %s38, 1
        %s868 = scalar_select %p867, %s38, 1
        %s869 = scalar_lea.vmem %s9, %s868
        %p870 = scmp.lt.s32.totalorder %s38, 1
        %s871 = scalar_select %p870, %s38, 1
        %s872 = smul.addr %s871, 4
        %s873 = smul.addr %s872, 4
        %s874 = scalar_lea.vmem %s10, %s873
        %p875 = scmp.lt.s32.totalorder %s38, 1
        %s876 = scalar_select %p875, %s38, 1
        %s877 = scalar_lea.vmem %s11, %s876
        %p878 = scmp.lt.s32.totalorder %s38, 1
        %s879 = scalar_select %p878, %s38, 1
        %s880 = scalar_lea.vmem %s12, %s879
        %p881 = scmp.lt.s32.totalorder %s38, 1
        %s882 = scalar_select %p881, %s38, 1
        %s883 = scalar_lea.vmem %s13, %s882
        %p884 = scmp.lt.s32.totalorder %s38, 1
        %s885 = scalar_select %p884, %s38, 1
        %s886 = smul.addr %s885, 4
        %s887 = smul.addr %s886, 4
        %s888 = scalar_lea.vmem %s14, %s887
        %p889 = scmp.lt.s32.totalorder %s38, 1
        %s890 = scalar_select %p889, %s38, 1
        %s891 = scalar_lea.vmem %s15, %s890
        %p892 = scmp.lt.s32.totalorder %s38, 1
        %s893 = scalar_select %p892, %s38, 1
        %s894 = smul.addr %s893, 16
        %s895 = smul.addr %s894, 4
        %s896 = scalar_lea.vmem %s16, %s895
        %p897 = scmp.lt.s32.totalorder %s38, 1
        %s898 = scalar_select %p897, %s38, 1
        %s899 = scalar_lea.vmem %s17, %s898
        %p900 = scmp.lt.s32.totalorder %s38, 1
        %s901 = scalar_select %p900, %s38, 1
        %s902 = smul.addr %s901, 4
        %s903 = smul.addr %s902, 4
        %s904 = scalar_lea.vmem %s18, %s903
        %p905 = scmp.lt.s32.totalorder %s38, 1
        %s906 = scalar_select %p905, %s38, 1
        %s907 = scalar_lea.vmem %s19, %s906
        %p909 = scmp.eq.s32.totalorder %s38, 0
        // Predicated region
        $region101: #{tpu_custom_call.1} parent=99 // pred_check
          %p910 = pneg %p909
        $region102: #{tpu_custom_call.1} parent=99 // pred_check_branch
          %912 = sbr.rel (%p910) target = $region104
        $region103: #{tpu_custom_call.1} parent=99 // pred_region
          %v913 = vld [vmem:[%s845] sm:$0xff]
          %v914 = vpack.c.bf16 %v913, %v913
          %v915 = vld [vmem:[%s4] sm:$0xf]
          %v916 = vld [vmem:[%s4 + $0x4] sm:$0xf]
          %v917 = vld [vmem:[%s5] sm:$0x1]
          %v919 = vlaneseq
          %v920 = vshrl.u32 %v919, 7
          %v921 = vsub.s32 0, %v920
          %v922 = vrot.slane %v917, %v921
          %v926 = vunpack.c.l.b16 %v915
          %v927 = vunpack.c.l.b16 %v916
          %v928 = vpack.c.b16 %v927, %v926
          %vm930 = vcmask 130048
          %v932 = vsel %vm930, %v914, 0
          %934 = vmatprep.subr.bf16.mxu0 0
          %935 = vmatpush1.bf16.msra.mxu0 0
          %936 = vmatprep.subr.bf16.mxu0 0
          %937 = vmatpush1.bf16.msra.mxu0 0
          %938 = vmatprep.subr.bf16.mxu0 0
          %939 = vmatpush1.bf16.msra.mxu0 0
          %940 = vmatprep.subr.bf16.mxu0 0
          %941 = vmatpush1.bf16.msra.mxu0 0
          %942 = vmatprep.subr.bf16.mxu0 0
          %943 = vmatpush1.bf16.msra.mxu0 0
          %944 = vmatprep.subr.bf16.mxu0 0
          %945 = vmatpush1.bf16.msra.mxu0 0
          %946 = vmatprep.subr.bf16.mxu0 0
          %947 = vmatpush1.bf16.msra.mxu0 0
          %948 = vmatprep.subr.bf16.mxu0 0
          %949 = vmatpush1.bf16.msra.mxu0 %v928
          %950 = vmatprep.subr.bf16.mxu0 0
          %951 = vmatpush2.bf16.msra.mxu0 0
          %952 = vmatprep.subr.bf16.mxu0 0
          %953 = vmatpush2.bf16.msra.mxu0 0
          %954 = vmatprep.subr.bf16.mxu0 0
          %955 = vmatpush2.bf16.msra.mxu0 0
          %956 = vmatprep.subr.bf16.mxu0 0
          %957 = vmatpush2.bf16.msra.mxu0 0
          %958 = vmatprep.subr.bf16.mxu0 0
          %959 = vmatpush2.bf16.msra.mxu0 0
          %960 = vmatprep.subr.bf16.mxu0 0
          %961 = vmatpush2.bf16.msra.mxu0 0
          %962 = vmatprep.subr.bf16.mxu0 0
          %963 = vmatpush2.bf16.msra.mxu0 0
          %964 = vmatprep.subr.bf16.mxu0 0
          %965 = vmatpush2.bf16.msra.mxu0 0
          %966 = vmatprep.mubr.bf16.mxu0 0
          %967 = vmatmul.mubr.bf16.gmra.mxu0 %v932
          %v968 = vpop.f32.mrf.mxu0
          %v969 = vadd.f32 %v922, %v968
          %v970 = vpop.f32.mrf.mxu0
          %v971 = vpop.f32.mrf.mxu0
          %v972 = vpop.f32.mrf.mxu0
          %973 = vdwg.mxu0
          %s974 = smul.u32 %s39, 8
          %s975 = scalar_lea.vmem [#allocation2], %s974
          %vm976 = vcmask 261120
          %977 = vst.msk [vmem:[%s975] sm:$0xff] %vm976, %v969
          %v978 = vld [vmem:[%s851] sm:$0x1]
          %v979 = vld [vmem:[%s855] sm:$0xff]
          %v980 = vlaneseq
          %v981 = vand.u32 %v980, 127
          %vm982 = vcmp.gt.f32.partialorder %v979, 0.5
          %vm983 = vcmp.gt.f32.partialorder %v978, 0.5
          %v984 = vsel %vm982, 1, 0
          %985 = vset.pattern.permute.xlu0 0
          %986 = vperm.xlu0 %985, %v984
          %v987 = vpop.permute.xlu0 %986
          %vm988 = vcmp.eq.s32.totalorder %v987, 1
          %v989 = vsel %vm983, 1, 0
          %v990 = vlaneseq
          %v991 = vshrl.u32 %v990, 7
          %v992 = vsub.s32 0, %v991
          %v993 = vrot.slane %v989, %v992
          %vm994 = vcmp.eq.s32.totalorder %v993, 1
          %vm995 = vmand %vm988, %vm994
          %vm996 = vcmp.eq.s32.totalorder %v981, 0
          %v997 = vsel %vm996, 1, 0
          %vm998 = vcmp.eq.s32.totalorder %v997, 1
          %vm999 = vmor %vm995, %vm998
          %v1000 = vsel %vm999, 0.0, -1e+30
          %s1001 = scalar_lea.vmem [#allocation3], %s974
          %vm1002 = vcmask 64512
          %1003 = vst.msk [vmem:[%s1001] sm:$0xff] %vm1002, %v1000
        $region104: #{tpu_custom_call.1} parent=99 // pred_fallthru
          _
        %s1004 = smul.u32 %s39, 8
        %s1005 = scalar_lea.vmem [#allocation2], %s1004
        %v1006 = vld [vmem:[%s1005] sm:$0xff]
        %s1007 = scalar_lea.vmem [#allocation3], %s1004
        %v1008 = vld [vmem:[%s1007] sm:$0xff]
        %v1009 = vld [vmem:[%s848] sm:$0x1]
        %v1010 = vxor.u32 %v1009, 2147483648
        %v1011 = vmul.f32 %v1010, 1.442695
        %v1012 = vpow.pop %v1011
        %v1013 = vadd.f32 %v1012, 1.0
        %v1014 = vrcp.pop %v1013
        %v1015 = vmul.f32 1.0, %v1014
        %v1016 = vmul.f32 %v1009, %v1015
        %v1017 = vpack.c.bf16 %v1016, %v1016
        %v1018 = vld [vmem:[%s904] sm:$0xf]
        %v1019 = vld [vmem:[%s904 + $0x4] sm:$0xf]
        %v1020 = vld [vmem:[%s904 + $0x8] sm:$0xf]
        %v1021 = vld [vmem:[%s904 + $0xc] sm:$0xf]
        %v1022 = vld [vmem:[%s907] sm:$0x1]
        %v1027 = vunpack.c.l.b16 %v1018
        %v1028 = vunpack.c.l.b16 %v1019
        %v1029 = vunpack.c.l.b16 %v1020
        %v1030 = vunpack.c.l.b16 %v1021
        %v1031 = vpack.c.b16 %v1028, %v1027
        %v1032 = vpack.c.b16 %v1030, %v1029
        %vm1035 = vcmask 261120
        %v1037 = vsel %vm1035, %v1017, 0
        %1039 = vmatprep.subr.bf16.mxu0 0
        %1040 = vmatpush1.bf16.msra.mxu0 0
        %1041 = vmatprep.subr.bf16.mxu0 0
        %1042 = vmatpush1.bf16.msra.mxu0 0
        %1043 = vmatprep.subr.bf16.mxu0 0
        %1044 = vmatpush1.bf16.msra.mxu0 0
        %1045 = vmatprep.subr.bf16.mxu0 0
        %1046 = vmatpush1.bf16.msra.mxu0 0
        %1047 = vmatprep.subr.bf16.mxu0 0
        %1048 = vmatpush1.bf16.msra.mxu0 0
        %1049 = vmatprep.subr.bf16.mxu0 0
        %1050 = vmatpush1.bf16.msra.mxu0 0
        %1051 = vmatprep.subr.bf16.mxu0 0
        %1052 = vmatpush1.bf16.msra.mxu0 %v1032
        %1053 = vmatprep.subr.bf16.mxu0 0
        %1054 = vmatpush1.bf16.msra.mxu0 %v1031
        %1055 = vmatprep.subr.bf16.mxu0 0
        %1056 = vmatpush2.bf16.msra.mxu0 0
        %1057 = vmatprep.subr.bf16.mxu0 0
        %1058 = vmatpush2.bf16.msra.mxu0 0
        %1059 = vmatprep.subr.bf16.mxu0 0
        %1060 = vmatpush2.bf16.msra.mxu0 0
        %1061 = vmatprep.subr.bf16.mxu0 0
        %1062 = vmatpush2.bf16.msra.mxu0 0
        %1063 = vmatprep.subr.bf16.mxu0 0
        %1064 = vmatpush2.bf16.msra.mxu0 0
        %1065 = vmatprep.subr.bf16.mxu0 0
        %1066 = vmatpush2.bf16.msra.mxu0 0
        %1067 = vmatprep.subr.bf16.mxu0 0
        %1068 = vmatpush2.bf16.msra.mxu0 0
        %1069 = vmatprep.subr.bf16.mxu0 0
        %1070 = vmatpush2.bf16.msra.mxu0 0
        %1071 = vmatprep.mubr.bf16.mxu0 0
        %1072 = vmatmul.mubr.bf16.gmra.mxu0 %v1037
        %v1073 = vpop.f32.mrf.mxu0
        %v1074 = vadd.f32 %v1022, %v1073
        %v1075 = vpop.f32.mrf.mxu0
        %v1076 = vpop.f32.mrf.mxu0
        %v1077 = vpop.f32.mrf.mxu0
        %1078 = vdwg.mxu0
        %v1079 = vld [vmem:[%s858] sm:$0x1]
        %v1080 = vld [vmem:[%s861] sm:$0x1]
        %v1081 = vsel %vm1035, %v1006, 0.0
        %1082 = vadd.xlane.f32.xlu0 %v1081
        %v1083 = vpop.xlane.xlu0 %1082
        %v1084 = vrcp.pop 32.0
        %v1085 = vmul.f32 %v1083, %v1084
        %v1086 = vsub.f32 %v1006, %v1085
        %v1087 = vmul.f32 %v1086, %v1086
        %v1088 = vsel %vm1035, %v1087, 0.0
        %1089 = vadd.xlane.f32.xlu0 %v1088
        %v1090 = vpop.xlane.xlu0 %1089
        %v1091 = vmul.f32 %v1090, %v1084
        %v1092 = vadd.f32 %v1091, 1e-06
        %v1093 = vrsqrt.pop %v1092
        %v1094 = vmul.f32 %v1086, %v1093
        %v1096 = vlaneseq
        %v1097 = vshrl.u32 %v1096, 7
        %v1098 = vsub.s32 0, %v1097
        %v1099 = vrot.slane %v1079, %v1098
        %v1101 = vmul.f32 %v1094, %v1099
        %v1103 = vlaneseq
        %v1104 = vshrl.u32 %v1103, 7
        %v1105 = vsub.s32 0, %v1104
        %v1106 = vrot.slane %v1080, %v1105
        %v1108 = vadd.f32 %v1101, %v1106
        %v1109 = vpack.c.bf16 %v1108, %v1108
        %v1110 = vld [vmem:[%s866] sm:$0xf]
        %v1111 = vld [vmem:[%s866 + $0x4] sm:$0xf]
        %v1112 = vld [vmem:[%s866 + $0x8] sm:$0xf]
        %v1113 = vld [vmem:[%s866 + $0xc] sm:$0xf]
        %v1114 = vld [vmem:[%s869] sm:$0x1]
        %v1116 = vlaneseq
        %v1117 = vshrl.u32 %v1116, 7
        %v1118 = vsub.s32 0, %v1117
        %v1119 = vrot.slane %v1114, %v1118
        %v1125 = vunpack.c.l.b16 %v1110
        %v1126 = vunpack.c.l.b16 %v1111
        %v1127 = vunpack.c.l.b16 %v1112
        %v1128 = vunpack.c.l.b16 %v1113
        %v1129 = vpack.c.b16 %v1126, %v1125
        %v1130 = vpack.c.b16 %v1128, %v1127
        %v1134 = vsel %vm1035, %v1109, 0
        %1136 = vmatprep.subr.bf16.mxu0 0
        %1137 = vmatpush1.bf16.msra.mxu0 0
        %1138 = vmatprep.subr.bf16.mxu0 0
        %1139 = vmatpush1.bf16.msra.mxu0 0
        %1140 = vmatprep.subr.bf16.mxu0 0
        %1141 = vmatpush1.bf16.msra.mxu0 0
        %1142 = vmatprep.subr.bf16.mxu0 0
        %1143 = vmatpush1.bf16.msra.mxu0 0
        %1144 = vmatprep.subr.bf16.mxu0 0
        %1145 = vmatpush1.bf16.msra.mxu0 0
        %1146 = vmatprep.subr.bf16.mxu0 0
        %1147 = vmatpush1.bf16.msra.mxu0 0
        %1148 = vmatprep.subr.bf16.mxu0 0
        %1149 = vmatpush1.bf16.msra.mxu0 %v1130
        %1150 = vmatprep.subr.bf16.mxu0 0
        %1151 = vmatpush1.bf16.msra.mxu0 %v1129
        %1152 = vmatprep.subr.bf16.mxu0 0
        %1153 = vmatpush2.bf16.msra.mxu0 0
        %1154 = vmatprep.subr.bf16.mxu0 0
        %1155 = vmatpush2.bf16.msra.mxu0 0
        %1156 = vmatprep.subr.bf16.mxu0 0
        %1157 = vmatpush2.bf16.msra.mxu0 0
        %1158 = vmatprep.subr.bf16.mxu0 0
        %1159 = vmatpush2.bf16.msra.mxu0 0
        %1160 = vmatprep.subr.bf16.mxu0 0
        %1161 = vmatpush2.bf16.msra.mxu0 0
        %1162 = vmatprep.subr.bf16.mxu0 0
        %1163 = vmatpush2.bf16.msra.mxu0 0
        %1164 = vmatprep.subr.bf16.mxu0 0
        %1165 = vmatpush2.bf16.msra.mxu0 0
        %1166 = vmatprep.subr.bf16.mxu0 0
        %1167 = vmatpush2.bf16.msra.mxu0 0
        %1168 = vmatprep.mubr.bf16.mxu0 0
        %1169 = vmatmul.mubr.bf16.gmra.mxu0 %v1134
        %v1170 = vpop.f32.mrf.mxu0
        %v1171 = vadd.f32 %v1119, %v1170
        %v1172 = vpop.f32.mrf.mxu0
        %v1173 = vpop.f32.mrf.mxu0
        %v1174 = vpop.f32.mrf.mxu0
        %1175 = vdwg.mxu0
        %v1176 = vpack.c.bf16 %v1171, %v1171
        %vm1177 = vcmask 60416
        %1178 = vst.msk [vmem:[#allocation4] sm:$0xf] %vm1177, %v1176
        %v1180 = vunpack.c.l.b16 %v1176
        %v1181 = vpack.c.b16 %v1180, %v1180
        %1182 = vrot.lane.b32.xlu0 %v1181, 120
        %v1183 = vpop.permute.xlu0 %1182
        %s1185 = scalar_lea.vmem [#allocation4], 4
        %1186 = vst.msk [vmem:[%s1185] sm:$0xf] %vm1177, %v1183
        %1187 = vrot.lane.b32.xlu0 %v1181, 112
        %v1188 = vpop.permute.xlu0 %1187
        %s1190 = scalar_lea.vmem [#allocation4], 8
        %1191 = vst.msk [vmem:[%s1190] sm:$0xf] %vm1177, %v1188
        %1192 = vrot.lane.b32.xlu0 %v1181, 104
        %v1193 = vpop.permute.xlu0 %1192
        %s1195 = scalar_lea.vmem [#allocation4], 12
        %1196 = vst.msk [vmem:[%s1195] sm:$0xf] %vm1177, %v1193
        %v1197 = vld [vmem:[%s866] sm:$0xf]
        %v1198 = vld [vmem:[%s866 + $0x4] sm:$0xf]
        %v1199 = vld [vmem:[%s866 + $0x8] sm:$0xf]
        %v1200 = vld [vmem:[%s866 + $0xc] sm:$0xf]
        %v1201 = vld [vmem:[%s869] sm:$0x1]
        %v1203 = vlaneseq
        %v1204 = vshrl.u32 %v1203, 7
        %v1205 = vsub.s32 0, %v1204
        %v1206 = vrot.slane %v1201, %v1205
        %v1211 = vunpack.c.l.b16 %v1197
        %v1212 = vunpack.c.l.b16 %v1198
        %v1213 = vunpack.c.l.b16 %v1199
        %v1214 = vunpack.c.l.b16 %v1200
        %v1215 = vpack.c.b16 %v1212, %v1211
        %v1216 = vpack.c.b16 %v1214, %v1213
        %1217 = vrot.lane.b32.xlu0 %v1215, 96
        %v1218 = vpop.permute.xlu0 %1217
        %1219 = vrot.lane.b32.xlu0 %v1216, 96
        %v1220 = vpop.permute.xlu0 %1219
        %1223 = vrot.lane.b32.xlu0 %v1206, 96
        %v1224 = vpop.permute.xlu0 %1223
        %1226 = vmatprep.subr.bf16.mxu0 0
        %1227 = vmatpush1.bf16.msra.mxu0 0
        %1228 = vmatprep.subr.bf16.mxu0 0
        %1229 = vmatpush1.bf16.msra.mxu0 0
        %1230 = vmatprep.subr.bf16.mxu0 0
        %1231 = vmatpush1.bf16.msra.mxu0 0
        %1232 = vmatprep.subr.bf16.mxu0 0
        %1233 = vmatpush1.bf16.msra.mxu0 0
        %1234 = vmatprep.subr.bf16.mxu0 0
        %1235 = vmatpush1.bf16.msra.mxu0 0
        %1236 = vmatprep.subr.bf16.mxu0 0
        %1237 = vmatpush1.bf16.msra.mxu0 0
        %1238 = vmatprep.subr.bf16.mxu0 0
        %1239 = vmatpush1.bf16.msra.mxu0 %v1220
        %1240 = vmatprep.subr.bf16.mxu0 0
        %1241 = vmatpush1.bf16.msra.mxu0 %v1218
        %1242 = vmatprep.subr.bf16.mxu0 0
        %1243 = vmatpush2.bf16.msra.mxu0 0
        %1244 = vmatprep.subr.bf16.mxu0 0
        %1245 = vmatpush2.bf16.msra.mxu0 0
        %1246 = vmatprep.subr.bf16.mxu0 0
        %1247 = vmatpush2.bf16.msra.mxu0 0
        %1248 = vmatprep.subr.bf16.mxu0 0
        %1249 = vmatpush2.bf16.msra.mxu0 0
        %1250 = vmatprep.subr.bf16.mxu0 0
        %1251 = vmatpush2.bf16.msra.mxu0 0
        %1252 = vmatprep.subr.bf16.mxu0 0
        %1253 = vmatpush2.bf16.msra.mxu0 0
        %1254 = vmatprep.subr.bf16.mxu0 0
        %1255 = vmatpush2.bf16.msra.mxu0 0
        %1256 = vmatprep.subr.bf16.mxu0 0
        %1257 = vmatpush2.bf16.msra.mxu0 0
        %1258 = vmatprep.mubr.bf16.mxu0 0
        %1259 = vmatmul.mubr.bf16.gmra.mxu0 %v1134
        %v1260 = vpop.f32.mrf.mxu0
        %v1261 = vadd.f32 %v1224, %v1260
        %v1262 = vpop.f32.mrf.mxu0
        %v1263 = vpop.f32.mrf.mxu0
        %v1264 = vpop.f32.mrf.mxu0
        %1265 = vdwg.mxu0
        %v1266 = vpack.c.bf16 %v1261, %v1261
        %1267 = vst.msk [vmem:[#allocation5] sm:$0xf] %vm1177, %v1266
        %v1269 = vunpack.c.l.b16 %v1266
        %v1270 = vpack.c.b16 %v1269, %v1269
        %1271 = vrot.lane.b32.xlu0 %v1270, 120
        %v1272 = vpop.permute.xlu0 %1271
        %s1274 = scalar_lea.vmem [#allocation5], 4
        %1275 = vst.msk [vmem:[%s1274] sm:$0xf] %vm1177, %v1272
        %1276 = vrot.lane.b32.xlu0 %v1270, 112
        %v1277 = vpop.permute.xlu0 %1276
        %s1279 = scalar_lea.vmem [#allocation5], 8
        %1280 = vst.msk [vmem:[%s1279] sm:$0xf] %vm1177, %v1277
        %1281 = vrot.lane.b32.xlu0 %v1270, 104
        %v1282 = vpop.permute.xlu0 %1281
        %s1284 = scalar_lea.vmem [#allocation5], 12
        %1285 = vst.msk [vmem:[%s1284] sm:$0xf] %vm1177, %v1282
        %v1286 = vld [vmem:[%s866] sm:$0xf]
        %v1287 = vld [vmem:[%s866 + $0x4] sm:$0xf]
        %v1288 = vld [vmem:[%s866 + $0x8] sm:$0xf]
        %v1289 = vld [vmem:[%s866 + $0xc] sm:$0xf]
        %v1290 = vld [vmem:[%s869] sm:$0x1]
        %v1292 = vlaneseq
        %v1293 = vshrl.u32 %v1292, 7
        %v1294 = vsub.s32 0, %v1293
        %v1295 = vrot.slane %v1290, %v1294
        %v1300 = vunpack.c.l.b16 %v1286
        %v1301 = vunpack.c.l.b16 %v1287
        %v1302 = vunpack.c.l.b16 %v1288
        %v1303 = vunpack.c.l.b16 %v1289
        %v1304 = vpack.c.b16 %v1301, %v1300
        %v1305 = vpack.c.b16 %v1303, %v1302
        %1306 = vrot.lane.b32.xlu0 %v1304, 64
        %v1307 = vpop.permute.xlu0 %1306
        %1308 = vrot.lane.b32.xlu0 %v1305, 64
        %v1309 = vpop.permute.xlu0 %1308
        %1312 = vrot.lane.b32.xlu0 %v1295, 64
        %v1313 = vpop.permute.xlu0 %1312
        %1315 = vmatprep.subr.bf16.mxu0 0
        %1316 = vmatpush1.bf16.msra.mxu0 0
        %1317 = vmatprep.subr.bf16.mxu0 0
        %1318 = vmatpush1.bf16.msra.mxu0 0
        %1319 = vmatprep.subr.bf16.mxu0 0
        %1320 = vmatpush1.bf16.msra.mxu0 0
        %1321 = vmatprep.subr.bf16.mxu0 0
        %1322 = vmatpush1.bf16.msra.mxu0 0
        %1323 = vmatprep.subr.bf16.mxu0 0
        %1324 = vmatpush1.bf16.msra.mxu0 0
        %1325 = vmatprep.subr.bf16.mxu0 0
        %1326 = vmatpush1.bf16.msra.mxu0 0
        %1327 = vmatprep.subr.bf16.mxu0 0
        %1328 = vmatpush1.bf16.msra.mxu0 %v1309
        %1329 = vmatprep.subr.bf16.mxu0 0
        %1330 = vmatpush1.bf16.msra.mxu0 %v1307
        %1331 = vmatprep.subr.bf16.mxu0 0
        %1332 = vmatpush2.bf16.msra.mxu0 0
        %1333 = vmatprep.subr.bf16.mxu0 0
        %1334 = vmatpush2.bf16.msra.mxu0 0
        %1335 = vmatprep.subr.bf16.mxu0 0
        %1336 = vmatpush2.bf16.msra.mxu0 0
        %1337 = vmatprep.subr.bf16.mxu0 0
        %1338 = vmatpush2.bf16.msra.mxu0 0
        %1339 = vmatprep.subr.bf16.mxu0 0
        %1340 = vmatpush2.bf16.msra.mxu0 0
        %1341 = vmatprep.subr.bf16.mxu0 0
        %1342 = vmatpush2.bf16.msra.mxu0 0
        %1343 = vmatprep.subr.bf16.mxu0 0
        %1344 = vmatpush2.bf16.msra.mxu0 0
        %1345 = vmatprep.subr.bf16.mxu0 0
        %1346 = vmatpush2.bf16.msra.mxu0 0
        %1347 = vmatprep.mubr.bf16.mxu0 0
        %1348 = vmatmul.mubr.bf16.gmra.mxu0 %v1134
        %v1349 = vpop.f32.mrf.mxu0
        %v1350 = vadd.f32 %v1313, %v1349
        %v1351 = vpop.f32.mrf.mxu0
        %v1352 = vpop.f32.mrf.mxu0
        %v1353 = vpop.f32.mrf.mxu0
        %1354 = vdwg.mxu0
        %v1355 = vpack.c.bf16 %v1350, %v1350
        %1356 = vst.msk [vmem:[#allocation6] sm:$0xf] %vm1177, %v1355
        %v1358 = vunpack.c.l.b16 %v1355
        %v1359 = vpack.c.b16 %v1358, %v1358
        %1360 = vrot.lane.b32.xlu0 %v1359, 120
        %v1361 = vpop.permute.xlu0 %1360
        %s1363 = scalar_lea.vmem [#allocation6], 4
        %1364 = vst.msk [vmem:[%s1363] sm:$0xf] %vm1177, %v1361
        %1365 = vrot.lane.b32.xlu0 %v1359, 112
        %v1366 = vpop.permute.xlu0 %1365
        %s1368 = scalar_lea.vmem [#allocation6], 8
        %1369 = vst.msk [vmem:[%s1368] sm:$0xf] %vm1177, %v1366
        %1370 = vrot.lane.b32.xlu0 %v1359, 104
        %v1371 = vpop.permute.xlu0 %1370
        %s1373 = scalar_lea.vmem [#allocation6], 12
        %1374 = vst.msk [vmem:[%s1373] sm:$0xf] %vm1177, %v1371
        %v1375 = vld [vmem:[#allocation4] sm:$0xf]
        %v1376 = vld [vmem:[#allocation4 + $0x4] sm:$0xf]
        %v1377 = vld [vmem:[#allocation4 + $0x8] sm:$0xf]
        %v1378 = vld [vmem:[#allocation4 + $0xc] sm:$0xf]
        %v1379 = vld [vmem:[#allocation5] sm:$0xf]
        %v1380 = vld [vmem:[#allocation5 + $0x4] sm:$0xf]
        %v1381 = vld [vmem:[#allocation5 + $0x8] sm:$0xf]
        %v1382 = vld [vmem:[#allocation5 + $0xc] sm:$0xf]
        %vm1383 = vcmask 64512
        %v1385 = vsel %vm1383, %v1375, 0
        %v1388 = vsel %vm1383, %v1379, 0
        %1390 = vmatprep.subr.bf16.mxu0 0
        %1391 = vmatpush1.bf16.xpose.msra.mxu0 0
        %1392 = vmatprep.subr.bf16.mxu0 0
        %1393 = vmatpush1.bf16.xpose.msra.mxu0 0
        %1394 = vmatprep.subr.bf16.mxu0 0
        %1395 = vmatpush1.bf16.xpose.msra.mxu0 0
        %1396 = vmatprep.subr.bf16.mxu0 0
        %1397 = vmatpush1.bf16.xpose.msra.mxu0 0
        %1398 = vmatprep.subr.bf16.mxu0 0
        %1399 = vmatpush1.bf16.xpose.msra.mxu0 0
        %1400 = vmatprep.subr.bf16.mxu0 0
        %1401 = vmatpush1.bf16.xpose.msra.mxu0 0
        %1402 = vmatprep.subr.bf16.mxu0 0
        %1403 = vmatpush1.bf16.xpose.msra.mxu0 0
        %1404 = vmatprep.subr.bf16.mxu0 0
        %1405 = vmatpush1.bf16.xpose.msra.mxu0 %v1388
        %1406 = vmatprep.subr.bf16.mxu0 0
        %1407 = vmatpush2.bf16.xpose.msra.mxu0 0
        %1408 = vmatprep.subr.bf16.mxu0 0
        %1409 = vmatpush2.bf16.xpose.msra.mxu0 0
        %1410 = vmatprep.subr.bf16.mxu0 0
        %1411 = vmatpush2.bf16.xpose.msra.mxu0 0
        %1412 = vmatprep.subr.bf16.mxu0 0
        %1413 = vmatpush2.bf16.xpose.msra.mxu0 0
        %1414 = vmatprep.subr.bf16.mxu0 0
        %1415 = vmatpush2.bf16.xpose.msra.mxu0 0
        %1416 = vmatprep.subr.bf16.mxu0 0
        %1417 = vmatpush2.bf16.xpose.msra.mxu0 0
        %1418 = vmatprep.subr.bf16.mxu0 0
        %1419 = vmatpush2.bf16.xpose.msra.mxu0 0
        %1420 = vmatprep.subr.bf16.mxu0 0
        %1421 = vmatpush2.bf16.xpose.msra.mxu0 0
        %1422 = vmatprep.mubr.bf16.mxu0 0
        %1423 = vmatmul.mubr.bf16.gmra.mxu0 %v1385
        %v1424 = vpop.f32.mrf.mxu0
        %v1425 = vadd.f32 0.0, %v1424
        %v1426 = vpop.f32.mrf.mxu0
        %v1427 = vpop.f32.mrf.mxu0
        %v1428 = vpop.f32.mrf.mxu0
        %1429 = vdwg.mxu0
        %v1431 = vsel %vm1383, %v1376, 0
        %v1434 = vsel %vm1383, %v1380, 0
        %1436 = vmatprep.subr.bf16.mxu0 0
        %1437 = vmatpush1.bf16.xpose.msra.mxu0 0
        %1438 = vmatprep.subr.bf16.mxu0 0
        %1439 = vmatpush1.bf16.xpose.msra.mxu0 0
        %1440 = vmatprep.subr.bf16.mxu0 0
        %1441 = vmatpush1.bf16.xpose.msra.mxu0 0
        %1442 = vmatprep.subr.bf16.mxu0 0
        %1443 = vmatpush1.bf16.xpose.msra.mxu0 0
        %1444 = vmatprep.subr.bf16.mxu0 0
        %1445 = vmatpush1.bf16.xpose.msra.mxu0 0
        %1446 = vmatprep.subr.bf16.mxu0 0
        %1447 = vmatpush1.bf16.xpose.msra.mxu0 0
        %1448 = vmatprep.subr.bf16.mxu0 0
        %1449 = vmatpush1.bf16.xpose.msra.mxu0 0
        %1450 = vmatprep.subr.bf16.mxu0 0
        %1451 = vmatpush1.bf16.xpose.msra.mxu0 %v1434
        %1452 = vmatprep.subr.bf16.mxu0 0
        %1453 = vmatpush2.bf16.xpose.msra.mxu0 0
        %1454 = vmatprep.subr.bf16.mxu0 0
        %1455 = vmatpush2.bf16.xpose.msra.mxu0 0
        %1456 = vmatprep.subr.bf16.mxu0 0
        %1457 = vmatpush2.bf16.xpose.msra.mxu0 0
        %1458 = vmatprep.subr.bf16.mxu0 0
        %1459 = vmatpush2.bf16.xpose.msra.mxu0 0
        %1460 = vmatprep.subr.bf16.mxu0 0
        %1461 = vmatpush2.bf16.xpose.msra.mxu0 0
        %1462 = vmatprep.subr.bf16.mxu0 0
        %1463 = vmatpush2.bf16.xpose.msra.mxu0 0
        %1464 = vmatprep.subr.bf16.mxu0 0
        %1465 = vmatpush2.bf16.xpose.msra.mxu0 0
        %1466 = vmatprep.subr.bf16.mxu0 0
        %1467 = vmatpush2.bf16.xpose.msra.mxu0 0
        %1468 = vmatprep.mubr.bf16.mxu0 0
        %1469 = vmatmul.mubr.bf16.gmra.mxu0 %v1431
        %v1470 = vpop.f32.mrf.mxu0
        %v1471 = vadd.f32 0.0, %v1470
        %v1472 = vpop.f32.mrf.mxu0
        %v1473 = vpop.f32.mrf.mxu0
        %v1474 = vpop.f32.mrf.mxu0
        %1475 = vdwg.mxu0
        %v1477 = vsel %vm1383, %v1377, 0
        %v1480 = vsel %vm1383, %v1381, 0
        %1482 = vmatprep.subr.bf16.mxu0 0
        %1483 = vmatpush1.bf16.xpose.msra.mxu0 0
        %1484 = vmatprep.subr.bf16.mxu0 0
        %1485 = vmatpush1.bf16.xpose.msra.mxu0 0
        %1486 = vmatprep.subr.bf16.mxu0 0
        %1487 = vmatpush1.bf16.xpose.msra.mxu0 0
        %1488 = vmatprep.subr.bf16.mxu0 0
        %1489 = vmatpush1.bf16.xpose.msra.mxu0 0
        %1490 = vmatprep.subr.bf16.mxu0 0
        %1491 = vmatpush1.bf16.xpose.msra.mxu0 0
        %1492 = vmatprep.subr.bf16.mxu0 0
        %1493 = vmatpush1.bf16.xpose.msra.mxu0 0
        %1494 = vmatprep.subr.bf16.mxu0 0
        %1495 = vmatpush1.bf16.xpose.msra.mxu0 0
        %1496 = vmatprep.subr.bf16.mxu0 0
        %1497 = vmatpush1.bf16.xpose.msra.mxu0 %v1480
        %1498 = vmatprep.subr.bf16.mxu0 0
        %1499 = vmatpush2.bf16.xpose.msra.mxu0 0
        %1500 = vmatprep.subr.bf16.mxu0 0
        %1501 = vmatpush2.bf16.xpose.msra.mxu0 0
        %1502 = vmatprep.subr.bf16.mxu0 0
        %1503 = vmatpush2.bf16.xpose.msra.mxu0 0
        %1504 = vmatprep.subr.bf16.mxu0 0
        %1505 = vmatpush2.bf16.xpose.msra.mxu0 0
        %1506 = vmatprep.subr.bf16.mxu0 0
        %1507 = vmatpush2.bf16.xpose.msra.mxu0 0
        %1508 = vmatprep.subr.bf16.mxu0 0
        %1509 = vmatpush2.bf16.xpose.msra.mxu0 0
        %1510 = vmatprep.subr.bf16.mxu0 0
        %1511 = vmatpush2.bf16.xpose.msra.mxu0 0
        %1512 = vmatprep.subr.bf16.mxu0 0
        %1513 = vmatpush2.bf16.xpose.msra.mxu0 0
        %1514 = vmatprep.mubr.bf16.mxu0 0
        %1515 = vmatmul.mubr.bf16.gmra.mxu0 %v1477
        %v1516 = vpop.f32.mrf.mxu0
        %v1517 = vadd.f32 0.0, %v1516
        %v1518 = vpop.f32.mrf.mxu0
        %v1519 = vpop.f32.mrf.mxu0
        %v1520 = vpop.f32.mrf.mxu0
        %1521 = vdwg.mxu0
        %v1523 = vsel %vm1383, %v1378, 0
        %v1526 = vsel %vm1383, %v1382, 0
        %1528 = vmatprep.subr.bf16.mxu0 0
        %1529 = vmatpush1.bf16.xpose.msra.mxu0 0
        %1530 = vmatprep.subr.bf16.mxu0 0
        %1531 = vmatpush1.bf16.xpose.msra.mxu0 0
        %1532 = vmatprep.subr.bf16.mxu0 0
        %1533 = vmatpush1.bf16.xpose.msra.mxu0 0
        %1534 = vmatprep.subr.bf16.mxu0 0
        %1535 = vmatpush1.bf16.xpose.msra.mxu0 0
        %1536 = vmatprep.subr.bf16.mxu0 0
        %1537 = vmatpush1.bf16.xpose.msra.mxu0 0
        %1538 = vmatprep.subr.bf16.mxu0 0
        %1539 = vmatpush1.bf16.xpose.msra.mxu0 0
        %1540 = vmatprep.subr.bf16.mxu0 0
        %1541 = vmatpush1.bf16.xpose.msra.mxu0 0
        %1542 = vmatprep.subr.bf16.mxu0 0
        %1543 = vmatpush1.bf16.xpose.msra.mxu0 %v1526
        %1544 = vmatprep.subr.bf16.mxu0 0
        %1545 = vmatpush2.bf16.xpose.msra.mxu0 0
        %1546 = vmatprep.subr.bf16.mxu0 0
        %1547 = vmatpush2.bf16.xpose.msra.mxu0 0
        %1548 = vmatprep.subr.bf16.mxu0 0
        %1549 = vmatpush2.bf16.xpose.msra.mxu0 0
        %1550 = vmatprep.subr.bf16.mxu0 0
        %1551 = vmatpush2.bf16.xpose.msra.mxu0 0
        %1552 = vmatprep.subr.bf16.mxu0 0
        %1553 = vmatpush2.bf16.xpose.msra.mxu0 0
        %1554 = vmatprep.subr.bf16.mxu0 0
        %1555 = vmatpush2.bf16.xpose.msra.mxu0 0
        %1556 = vmatprep.subr.bf16.mxu0 0
        %1557 = vmatpush2.bf16.xpose.msra.mxu0 0
        %1558 = vmatprep.subr.bf16.mxu0 0
        %1559 = vmatpush2.bf16.xpose.msra.mxu0 0
        %1560 = vmatprep.mubr.bf16.mxu0 0
        %1561 = vmatmul.mubr.bf16.gmra.mxu0 %v1523
        %v1562 = vpop.f32.mrf.mxu0
        %v1563 = vadd.f32 0.0, %v1562
        %v1564 = vpop.f32.mrf.mxu0
        %v1565 = vpop.f32.mrf.mxu0
        %v1566 = vpop.f32.mrf.mxu0
        %1567 = vdwg.mxu0
        %v1568 = vmul.f32 %v1425, 0.35355338
        %v1569 = vmul.f32 %v1471, 0.35355338
        %v1570 = vmul.f32 %v1517, 0.35355338
        %v1571 = vmul.f32 %v1563, 0.35355338
        %v1572 = vadd.f32 %v1568, %v1008
        %v1573 = vadd.f32 %v1569, %v1008
        %v1574 = vadd.f32 %v1570, %v1008
        %v1575 = vadd.f32 %v1571, %v1008
        %v1576 = vsel %vm1383, %v1572, -inf
        %1577 = vmax.xlane.f32.xlu0 %v1576
        %v1578 = vpop.xlane.xlu0 %1577
        %v1579 = vsel %vm1383, %v1573, -inf
        %1580 = vmax.xlane.f32.xlu0 %v1579
        %v1581 = vpop.xlane.xlu0 %1580
        %v1582 = vsel %vm1383, %v1574, -inf
        %1583 = vmax.xlane.f32.xlu0 %v1582
        %v1584 = vpop.xlane.xlu0 %1583
        %v1585 = vsel %vm1383, %v1575, -inf
        %1586 = vmax.xlane.f32.xlu0 %v1585
        %v1587 = vpop.xlane.xlu0 %1586
        %v1588 = vsub.f32 %v1572, %v1578
        %v1589 = vsub.f32 %v1573, %v1581
        %v1590 = vsub.f32 %v1574, %v1584
        %v1591 = vsub.f32 %v1575, %v1587
        %v1592 = vmul.f32 %v1588, 1.442695
        %v1593 = vpow.pop %v1592
        %v1594 = vmul.f32 %v1589, 1.442695
        %v1595 = vpow.pop %v1594
        %v1596 = vmul.f32 %v1590, 1.442695
        %v1597 = vpow.pop %v1596
        %v1598 = vmul.f32 %v1591, 1.442695
        %v1599 = vpow.pop %v1598
        %v1600 = vsel %vm1383, %v1593, 0.0
        %1601 = vadd.xlane.f32.xlu0 %v1600
        %v1602 = vpop.xlane.xlu0 %1601
        %v1603 = vsel %vm1383, %v1595, 0.0
        %1604 = vadd.xlane.f32.xlu0 %v1603
        %v1605 = vpop.xlane.xlu0 %1604
        %v1606 = vsel %vm1383, %v1597, 0.0
        %1607 = vadd.xlane.f32.xlu0 %v1606
        %v1608 = vpop.xlane.xlu0 %1607
        %v1609 = vsel %vm1383, %v1599, 0.0
        %1610 = vadd.xlane.f32.xlu0 %v1609
        %v1611 = vpop.xlane.xlu0 %1610
        %v1612 = vrcp.pop %v1602
        %v1613 = vrcp.pop %v1605
        %v1614 = vrcp.pop %v1608
        %v1615 = vrcp.pop %v1611
        %v1616 = vmul.f32 %v1593, %v1612
        %v1617 = vmul.f32 %v1595, %v1613
        %v1618 = vmul.f32 %v1597, %v1614
        %v1619 = vmul.f32 %v1599, %v1615
        %v1620 = vpack.c.bf16 %v1616, %v1616
        %v1621 = vpack.c.bf16 %v1617, %v1617
        %v1622 = vpack.c.bf16 %v1618, %v1618
        %v1623 = vpack.c.bf16 %v1619, %v1619
        %v1624 = vld [vmem:[#allocation6] sm:$0xf]
        %v1625 = vld [vmem:[#allocation6 + $0x4] sm:$0xf]
        %v1626 = vld [vmem:[#allocation6 + $0x8] sm:$0xf]
        %v1627 = vld [vmem:[#allocation6 + $0xc] sm:$0xf]
        %v1629 = vsel %vm1383, %v1620, 0
        %vm1631 = vcmask 1043456
        %v1633 = vsel %vm1631, %v1624, 0
        %1635 = vmatprep.subr.bf16.mxu0 0
        %1636 = vmatpush1.bf16.msra.mxu0 0
        %1637 = vmatprep.subr.bf16.mxu0 0
        %1638 = vmatpush1.bf16.msra.mxu0 0
        %1639 = vmatprep.subr.bf16.mxu0 0
        %1640 = vmatpush1.bf16.msra.mxu0 0
        %1641 = vmatprep.subr.bf16.mxu0 0
        %1642 = vmatpush1.bf16.msra.mxu0 0
        %1643 = vmatprep.subr.bf16.mxu0 0
        %1644 = vmatpush1.bf16.msra.mxu0 0
        %1645 = vmatprep.subr.bf16.mxu0 0
        %1646 = vmatpush1.bf16.msra.mxu0 0
        %1647 = vmatprep.subr.bf16.mxu0 0
        %1648 = vmatpush1.bf16.msra.mxu0 0
        %1649 = vmatprep.subr.bf16.mxu0 0
        %1650 = vmatpush1.bf16.msra.mxu0 %v1633
        %1651 = vmatprep.subr.bf16.mxu0 0
        %1652 = vmatpush2.bf16.msra.mxu0 0
        %1653 = vmatprep.subr.bf16.mxu0 0
        %1654 = vmatpush2.bf16.msra.mxu0 0
        %1655 = vmatprep.subr.bf16.mxu0 0
        %1656 = vmatpush2.bf16.msra.mxu0 0
        %1657 = vmatprep.subr.bf16.mxu0 0
        %1658 = vmatpush2.bf16.msra.mxu0 0
        %1659 = vmatprep.subr.bf16.mxu0 0
        %1660 = vmatpush2.bf16.msra.mxu0 0
        %1661 = vmatprep.subr.bf16.mxu0 0
        %1662 = vmatpush2.bf16.msra.mxu0 0
        %1663 = vmatprep.subr.bf16.mxu0 0
        %1664 = vmatpush2.bf16.msra.mxu0 0
        %1665 = vmatprep.subr.bf16.mxu0 0
        %1666 = vmatpush2.bf16.msra.mxu0 0
        %1667 = vmatprep.mubr.bf16.mxu0 0
        %1668 = vmatmul.mubr.bf16.gmra.mxu0 %v1629
        %v1669 = vpop.f32.mrf.mxu0
        %v1670 = vadd.f32 0.0, %v1669
        %v1671 = vpop.f32.mrf.mxu0
        %v1672 = vpop.f32.mrf.mxu0
        %v1673 = vpop.f32.mrf.mxu0
        %1674 = vdwg.mxu0
        %v1676 = vsel %vm1383, %v1621, 0
        %v1679 = vsel %vm1631, %v1625, 0
        %1681 = vmatprep.subr.bf16.mxu0 0
        %1682 = vmatpush1.bf16.msra.mxu0 0
        %1683 = vmatprep.subr.bf16.mxu0 0
        %1684 = vmatpush1.bf16.msra.mxu0 0
        %1685 = vmatprep.subr.bf16.mxu0 0
        %1686 = vmatpush1.bf16.msra.mxu0 0
        %1687 = vmatprep.subr.bf16.mxu0 0
        %1688 = vmatpush1.bf16.msra.mxu0 0
        %1689 = vmatprep.subr.bf16.mxu0 0
        %1690 = vmatpush1.bf16.msra.mxu0 0
        %1691 = vmatprep.subr.bf16.mxu0 0
        %1692 = vmatpush1.bf16.msra.mxu0 0
        %1693 = vmatprep.subr.bf16.mxu0 0
        %1694 = vmatpush1.bf16.msra.mxu0 0
        %1695 = vmatprep.subr.bf16.mxu0 0
        %1696 = vmatpush1.bf16.msra.mxu0 %v1679
        %1697 = vmatprep.subr.bf16.mxu0 0
        %1698 = vmatpush2.bf16.msra.mxu0 0
        %1699 = vmatprep.subr.bf16.mxu0 0
        %1700 = vmatpush2.bf16.msra.mxu0 0
        %1701 = vmatprep.subr.bf16.mxu0 0
        %1702 = vmatpush2.bf16.msra.mxu0 0
        %1703 = vmatprep.subr.bf16.mxu0 0
        %1704 = vmatpush2.bf16.msra.mxu0 0
        %1705 = vmatprep.subr.bf16.mxu0 0
        %1706 = vmatpush2.bf16.msra.mxu0 0
        %1707 = vmatprep.subr.bf16.mxu0 0
        %1708 = vmatpush2.bf16.msra.mxu0 0
        %1709 = vmatprep.subr.bf16.mxu0 0
        %1710 = vmatpush2.bf16.msra.mxu0 0
        %1711 = vmatprep.subr.bf16.mxu0 0
        %1712 = vmatpush2.bf16.msra.mxu0 0
        %1713 = vmatprep.mubr.bf16.mxu0 0
        %1714 = vmatmul.mubr.bf16.gmra.mxu0 %v1676
        %v1715 = vpop.f32.mrf.mxu0
        %v1716 = vadd.f32 0.0, %v1715
        %v1717 = vpop.f32.mrf.mxu0
        %v1718 = vpop.f32.mrf.mxu0
        %v1719 = vpop.f32.mrf.mxu0
        %1720 = vdwg.mxu0
        %v1722 = vsel %vm1383, %v1622, 0
        %v1725 = vsel %vm1631, %v1626, 0
        %1727 = vmatprep.subr.bf16.mxu0 0
        %1728 = vmatpush1.bf16.msra.mxu0 0
        %1729 = vmatprep.subr.bf16.mxu0 0
        %1730 = vmatpush1.bf16.msra.mxu0 0
        %1731 = vmatprep.subr.bf16.mxu0 0
        %1732 = vmatpush1.bf16.msra.mxu0 0
        %1733 = vmatprep.subr.bf16.mxu0 0
        %1734 = vmatpush1.bf16.msra.mxu0 0
        %1735 = vmatprep.subr.bf16.mxu0 0
        %1736 = vmatpush1.bf16.msra.mxu0 0
        %1737 = vmatprep.subr.bf16.mxu0 0
        %1738 = vmatpush1.bf16.msra.mxu0 0
        %1739 = vmatprep.subr.bf16.mxu0 0
        %1740 = vmatpush1.bf16.msra.mxu0 0
        %1741 = vmatprep.subr.bf16.mxu0 0
        %1742 = vmatpush1.bf16.msra.mxu0 %v1725
        %1743 = vmatprep.subr.bf16.mxu0 0
        %1744 = vmatpush2.bf16.msra.mxu0 0
        %1745 = vmatprep.subr.bf16.mxu0 0
        %1746 = vmatpush2.bf16.msra.mxu0 0
        %1747 = vmatprep.subr.bf16.mxu0 0
        %1748 = vmatpush2.bf16.msra.mxu0 0
        %1749 = vmatprep.subr.bf16.mxu0 0
        %1750 = vmatpush2.bf16.msra.mxu0 0
        %1751 = vmatprep.subr.bf16.mxu0 0
        %1752 = vmatpush2.bf16.msra.mxu0 0
        %1753 = vmatprep.subr.bf16.mxu0 0
        %1754 = vmatpush2.bf16.msra.mxu0 0
        %1755 = vmatprep.subr.bf16.mxu0 0
        %1756 = vmatpush2.bf16.msra.mxu0 0
        %1757 = vmatprep.subr.bf16.mxu0 0
        %1758 = vmatpush2.bf16.msra.mxu0 0
        %1759 = vmatprep.mubr.bf16.mxu0 0
        %1760 = vmatmul.mubr.bf16.gmra.mxu0 %v1722
        %v1761 = vpop.f32.mrf.mxu0
        %v1762 = vadd.f32 0.0, %v1761
        %v1763 = vpop.f32.mrf.mxu0
        %v1764 = vpop.f32.mrf.mxu0
        %v1765 = vpop.f32.mrf.mxu0
        %1766 = vdwg.mxu0
        %v1768 = vsel %vm1383, %v1623, 0
        %v1771 = vsel %vm1631, %v1627, 0
        %1773 = vmatprep.subr.bf16.mxu0 0
        %1774 = vmatpush1.bf16.msra.mxu0 0
        %1775 = vmatprep.subr.bf16.mxu0 0
        %1776 = vmatpush1.bf16.msra.mxu0 0
        %1777 = vmatprep.subr.bf16.mxu0 0
        %1778 = vmatpush1.bf16.msra.mxu0 0
        %1779 = vmatprep.subr.bf16.mxu0 0
        %1780 = vmatpush1.bf16.msra.mxu0 0
        %1781 = vmatprep.subr.bf16.mxu0 0
        %1782 = vmatpush1.bf16.msra.mxu0 0
        %1783 = vmatprep.subr.bf16.mxu0 0
        %1784 = vmatpush1.bf16.msra.mxu0 0
        %1785 = vmatprep.subr.bf16.mxu0 0
        %1786 = vmatpush1.bf16.msra.mxu0 0
        %1787 = vmatprep.subr.bf16.mxu0 0
        %1788 = vmatpush1.bf16.msra.mxu0 %v1771
        %1789 = vmatprep.subr.bf16.mxu0 0
        %1790 = vmatpush2.bf16.msra.mxu0 0
        %1791 = vmatprep.subr.bf16.mxu0 0
        %1792 = vmatpush2.bf16.msra.mxu0 0
        %1793 = vmatprep.subr.bf16.mxu0 0
        %1794 = vmatpush2.bf16.msra.mxu0 0
        %1795 = vmatprep.subr.bf16.mxu0 0
        %1796 = vmatpush2.bf16.msra.mxu0 0
        %1797 = vmatprep.subr.bf16.mxu0 0
        %1798 = vmatpush2.bf16.msra.mxu0 0
        %1799 = vmatprep.subr.bf16.mxu0 0
        %1800 = vmatpush2.bf16.msra.mxu0 0
        %1801 = vmatprep.subr.bf16.mxu0 0
        %1802 = vmatpush2.bf16.msra.mxu0 0
        %1803 = vmatprep.subr.bf16.mxu0 0
        %1804 = vmatpush2.bf16.msra.mxu0 0
        %1805 = vmatprep.mubr.bf16.mxu0 0
        %1806 = vmatmul.mubr.bf16.gmra.mxu0 %v1768
        %v1807 = vpop.f32.mrf.mxu0
        %v1808 = vadd.f32 0.0, %v1807
        %v1809 = vpop.f32.mrf.mxu0
        %v1810 = vpop.f32.mrf.mxu0
        %v1811 = vpop.f32.mrf.mxu0
        %1812 = vdwg.mxu0
        %v1813 = vpack.c.bf16 %v1670, %v1670
        %1814 = vst.msk [vmem:[#allocation7] sm:$0xf] %vm1177, %v1813
        %v1815 = vpack.c.bf16 %v1716, %v1716
        %v1817 = vunpack.c.l.b16 %v1815
        %v1818 = vpack.c.b16 %v1817, %v1817
        %1819 = vrot.lane.b32.xlu0 %v1818, 8
        %v1820 = vpop.permute.xlu0 %1819
        %vm1822 = vcmask 126016
        %1823 = vst.msk [vmem:[#allocation7] sm:$0xf] %vm1822, %v1820
        %v1824 = vpack.c.bf16 %v1762, %v1762
        %v1826 = vunpack.c.l.b16 %v1824
        %v1827 = vpack.c.b16 %v1826, %v1826
        %1828 = vrot.lane.b32.xlu0 %v1827, 16
        %v1829 = vpop.permute.xlu0 %1828
        %vm1831 = vcmask 191616
        %1832 = vst.msk [vmem:[#allocation7] sm:$0xf] %vm1831, %v1829
        %v1833 = vpack.c.bf16 %v1808, %v1808
        %v1835 = vunpack.c.l.b16 %v1833
        %v1836 = vpack.c.b16 %v1835, %v1835
        %1837 = vrot.lane.b32.xlu0 %v1836, 24
        %v1838 = vpop.permute.xlu0 %1837
        %vm1840 = vcmask 257216
        %1841 = vst.msk [vmem:[#allocation7] sm:$0xf] %vm1840, %v1838
        %v1842 = vld [vmem:[#allocation7] sm:$0xf]
        %v1843 = vld [vmem:[%s874] sm:$0xf]
        %v1844 = vld [vmem:[%s874 + $0x4] sm:$0xf]
        %v1845 = vld [vmem:[%s874 + $0x8] sm:$0xf]
        %v1846 = vld [vmem:[%s874 + $0xc] sm:$0xf]
        %v1847 = vld [vmem:[%s877] sm:$0x1]
        %v1849 = vlaneseq
        %v1850 = vshrl.u32 %v1849, 7
        %v1851 = vsub.s32 0, %v1850
        %v1852 = vrot.slane %v1847, %v1851
        %v1858 = vunpack.c.l.b16 %v1843
        %v1859 = vunpack.c.l.b16 %v1844
        %v1860 = vunpack.c.l.b16 %v1845
        %v1861 = vunpack.c.l.b16 %v1846
        %v1862 = vpack.c.b16 %v1859, %v1858
        %v1863 = vpack.c.b16 %v1861, %v1860
        %v1867 = vsel %vm1035, %v1842, 0
        %1869 = vmatprep.subr.bf16.mxu0 0
        %1870 = vmatpush1.bf16.msra.mxu0 0
        %1871 = vmatprep.subr.bf16.mxu0 0
        %1872 = vmatpush1.bf16.msra.mxu0 0
        %1873 = vmatprep.subr.bf16.mxu0 0
        %1874 = vmatpush1.bf16.msra.mxu0 0
        %1875 = vmatprep.subr.bf16.mxu0 0
        %1876 = vmatpush1.bf16.msra.mxu0 0
        %1877 = vmatprep.subr.bf16.mxu0 0
        %1878 = vmatpush1.bf16.msra.mxu0 0
        %1879 = vmatprep.subr.bf16.mxu0 0
        %1880 = vmatpush1.bf16.msra.mxu0 0
        %1881 = vmatprep.subr.bf16.mxu0 0
        %1882 = vmatpush1.bf16.msra.mxu0 %v1863
        %1883 = vmatprep.subr.bf16.mxu0 0
        %1884 = vmatpush1.bf16.msra.mxu0 %v1862
        %1885 = vmatprep.subr.bf16.mxu0 0
        %1886 = vmatpush2.bf16.msra.mxu0 0
        %1887 = vmatprep.subr.bf16.mxu0 0
        %1888 = vmatpush2.bf16.msra.mxu0 0
        %1889 = vmatprep.subr.bf16.mxu0 0
        %1890 = vmatpush2.bf16.msra.mxu0 0
        %1891 = vmatprep.subr.bf16.mxu0 0
        %1892 = vmatpush2.bf16.msra.mxu0 0
        %1893 = vmatprep.subr.bf16.mxu0 0
        %1894 = vmatpush2.bf16.msra.mxu0 0
        %1895 = vmatprep.subr.bf16.mxu0 0
        %1896 = vmatpush2.bf16.msra.mxu0 0
        %1897 = vmatprep.subr.bf16.mxu0 0
        %1898 = vmatpush2.bf16.msra.mxu0 0
        %1899 = vmatprep.subr.bf16.mxu0 0
        %1900 = vmatpush2.bf16.msra.mxu0 0
        %1901 = vmatprep.mubr.bf16.mxu0 0
        %1902 = vmatmul.mubr.bf16.gmra.mxu0 %v1867
        %v1903 = vpop.f32.mrf.mxu0
        %v1904 = vadd.f32 %v1852, %v1903
        %v1905 = vpop.f32.mrf.mxu0
        %v1906 = vpop.f32.mrf.mxu0
        %v1907 = vpop.f32.mrf.mxu0
        %1908 = vdwg.mxu0
        %v1909 = vlaneseq
        %v1910 = vshrl.u32 %v1909, 7
        %v1911 = vsub.s32 0, %v1910
        %v1912 = vrot.slane %v1074, %v1911
        %v1913 = vmul.f32 %v1904, %v1912
        %v1914 = vadd.f32 %v1006, %v1913
        %v1915 = vld [vmem:[%s880] sm:$0x1]
        %v1916 = vld [vmem:[%s883] sm:$0x1]
        %v1917 = vsel %vm1035, %v1914, 0.0
        %1918 = vadd.xlane.f32.xlu0 %v1917
        %v1919 = vpop.xlane.xlu0 %1918
        %v1920 = vmul.f32 %v1919, %v1084
        %v1921 = vsub.f32 %v1914, %v1920
        %v1922 = vmul.f32 %v1921, %v1921
        %v1923 = vsel %vm1035, %v1922, 0.0
        %1924 = vadd.xlane.f32.xlu0 %v1923
        %v1925 = vpop.xlane.xlu0 %1924
        %v1926 = vmul.f32 %v1925, %v1084
        %v1927 = vadd.f32 %v1926, 1e-06
        %v1928 = vrsqrt.pop %v1927
        %v1929 = vmul.f32 %v1921, %v1928
        %v1931 = vlaneseq
        %v1932 = vshrl.u32 %v1931, 7
        %v1933 = vsub.s32 0, %v1932
        %v1934 = vrot.slane %v1915, %v1933
        %v1936 = vmul.f32 %v1929, %v1934
        %v1938 = vlaneseq
        %v1939 = vshrl.u32 %v1938, 7
        %v1940 = vsub.s32 0, %v1939
        %v1941 = vrot.slane %v1916, %v1940
        %v1943 = vadd.f32 %v1936, %v1941
        %v1944 = vpack.c.bf16 %v1943, %v1943
        %v1945 = vld [vmem:[%s888] sm:$0xf]
        %v1946 = vld [vmem:[%s888 + $0x4] sm:$0xf]
        %v1947 = vld [vmem:[%s888 + $0x8] sm:$0xf]
        %v1948 = vld [vmem:[%s888 + $0xc] sm:$0xf]
        %v1949 = vld [vmem:[%s891] sm:$0x1]
        %v1951 = vlaneseq
        %v1952 = vshrl.u32 %v1951, 7
        %v1953 = vsub.s32 0, %v1952
        %v1954 = vrot.slane %v1949, %v1953
        %v1960 = vunpack.c.l.b16 %v1945
        %v1961 = vunpack.c.l.b16 %v1946
        %v1962 = vunpack.c.l.b16 %v1947
        %v1963 = vunpack.c.l.b16 %v1948
        %v1964 = vpack.c.b16 %v1961, %v1960
        %v1965 = vpack.c.b16 %v1963, %v1962
        %v1969 = vsel %vm1035, %v1944, 0
        %1971 = vmatprep.subr.bf16.mxu0 0
        %1972 = vmatpush1.bf16.msra.mxu0 0
        %1973 = vmatprep.subr.bf16.mxu0 0
        %1974 = vmatpush1.bf16.msra.mxu0 0
        %1975 = vmatprep.subr.bf16.mxu0 0
        %1976 = vmatpush1.bf16.msra.mxu0 0
        %1977 = vmatprep.subr.bf16.mxu0 0
        %1978 = vmatpush1.bf16.msra.mxu0 0
        %1979 = vmatprep.subr.bf16.mxu0 0
        %1980 = vmatpush1.bf16.msra.mxu0 0
        %1981 = vmatprep.subr.bf16.mxu0 0
        %1982 = vmatpush1.bf16.msra.mxu0 0
        %1983 = vmatprep.subr.bf16.mxu0 0
        %1984 = vmatpush1.bf16.msra.mxu0 %v1965
        %1985 = vmatprep.subr.bf16.mxu0 0
        %1986 = vmatpush1.bf16.msra.mxu0 %v1964
        %1987 = vmatprep.subr.bf16.mxu0 0
        %1988 = vmatpush2.bf16.msra.mxu0 0
        %1989 = vmatprep.subr.bf16.mxu0 0
        %1990 = vmatpush2.bf16.msra.mxu0 0
        %1991 = vmatprep.subr.bf16.mxu0 0
        %1992 = vmatpush2.bf16.msra.mxu0 0
        %1993 = vmatprep.subr.bf16.mxu0 0
        %1994 = vmatpush2.bf16.msra.mxu0 0
        %1995 = vmatprep.subr.bf16.mxu0 0
        %1996 = vmatpush2.bf16.msra.mxu0 0
        %1997 = vmatprep.subr.bf16.mxu0 0
        %1998 = vmatpush2.bf16.msra.mxu0 0
        %1999 = vmatprep.subr.bf16.mxu0 0
        %2000 = vmatpush2.bf16.msra.mxu0 0
        %2001 = vmatprep.subr.bf16.mxu0 0
        %2002 = vmatpush2.bf16.msra.mxu0 0
        %2003 = vmatprep.mubr.bf16.mxu0 0
        %2004 = vmatmul.mubr.bf16.gmra.mxu0 %v1969
        %v2005 = vpop.f32.mrf.mxu0
        %v2006 = vadd.f32 %v1954, %v2005
        %v2007 = vpop.f32.mrf.mxu0
        %v2008 = vpop.f32.mrf.mxu0
        %v2009 = vpop.f32.mrf.mxu0
        %2010 = vdwg.mxu0
        %v2011 = vxor.u32 %v2006, 2147483648
        %v2012 = vmul.f32 %v2011, 1.442695
        %v2013 = vpow.pop %v2012
        %v2014 = vadd.f32 %v2013, 1.0
        %v2015 = vrcp.pop %v2014
        %v2016 = vmul.f32 1.0, %v2015
        %v2017 = vmul.f32 %v2006, %v2016
        %v2018 = vpack.c.bf16 %v2017, %v2017
        %v2019 = vld [vmem:[%s896] sm:$0xf]
        %v2020 = vld [vmem:[%s896 + $0x4] sm:$0xf]
        %v2021 = vld [vmem:[%s896 + $0x8] sm:$0xf]
        %v2022 = vld [vmem:[%s896 + $0xc] sm:$0xf]
        %v2023 = vld [vmem:[%s896 + $0x10] sm:$0xf]
        %v2024 = vld [vmem:[%s896 + $0x14] sm:$0xf]
        %v2025 = vld [vmem:[%s896 + $0x18] sm:$0xf]
        %v2026 = vld [vmem:[%s896 + $0x1c] sm:$0xf]
        %v2027 = vld [vmem:[%s896 + $0x20] sm:$0xf]
        %v2028 = vld [vmem:[%s896 + $0x24] sm:$0xf]
        %v2029 = vld [vmem:[%s896 + $0x28] sm:$0xf]
        %v2030 = vld [vmem:[%s896 + $0x2c] sm:$0xf]
        %v2031 = vld [vmem:[%s896 + $0x30] sm:$0xf]
        %v2032 = vld [vmem:[%s896 + $0x34] sm:$0xf]
        %v2033 = vld [vmem:[%s896 + $0x38] sm:$0xf]
        %v2034 = vld [vmem:[%s896 + $0x3c] sm:$0xf]
        %v2035 = vld [vmem:[%s899] sm:$0x1]
        %v2037 = vlaneseq
        %v2038 = vshrl.u32 %v2037, 7
        %v2039 = vsub.s32 0, %v2038
        %v2040 = vrot.slane %v2035, %v2039
        %v2058 = vunpack.c.l.b16 %v2019
        %v2059 = vunpack.c.l.b16 %v2020
        %v2060 = vunpack.c.l.b16 %v2021
        %v2061 = vunpack.c.l.b16 %v2022
        %v2062 = vunpack.c.l.b16 %v2023
        %v2063 = vunpack.c.l.b16 %v2024
        %v2064 = vunpack.c.l.b16 %v2025
        %v2065 = vunpack.c.l.b16 %v2026
        %v2066 = vunpack.c.l.b16 %v2027
        %v2067 = vunpack.c.l.b16 %v2028
        %v2068 = vunpack.c.l.b16 %v2029
        %v2069 = vunpack.c.l.b16 %v2030
        %v2070 = vunpack.c.l.b16 %v2031
        %v2071 = vunpack.c.l.b16 %v2032
        %v2072 = vunpack.c.l.b16 %v2033
        %v2073 = vunpack.c.l.b16 %v2034
        %v2074 = vpack.c.b16 %v2059, %v2058
        %v2075 = vpack.c.b16 %v2061, %v2060
        %v2076 = vpack.c.b16 %v2063, %v2062
        %v2077 = vpack.c.b16 %v2065, %v2064
        %v2078 = vpack.c.b16 %v2067, %v2066
        %v2079 = vpack.c.b16 %v2069, %v2068
        %v2080 = vpack.c.b16 %v2071, %v2070
        %v2081 = vpack.c.b16 %v2073, %v2072
        %2090 = vmatprep.subr.bf16.mxu0 0
        %2091 = vmatpush1.bf16.msra.mxu0 %v2081
        %2092 = vmatprep.subr.bf16.mxu0 0
        %2093 = vmatpush1.bf16.msra.mxu0 %v2080
        %2094 = vmatprep.subr.bf16.mxu0 0
        %2095 = vmatpush1.bf16.msra.mxu0 %v2079
        %2096 = vmatprep.subr.bf16.mxu0 0
        %2097 = vmatpush1.bf16.msra.mxu0 %v2078
        %2098 = vmatprep.subr.bf16.mxu0 0
        %2099 = vmatpush1.bf16.msra.mxu0 %v2077
        %2100 = vmatprep.subr.bf16.mxu0 0
        %2101 = vmatpush1.bf16.msra.mxu0 %v2076
        %2102 = vmatprep.subr.bf16.mxu0 0
        %2103 = vmatpush1.bf16.msra.mxu0 %v2075
        %2104 = vmatprep.subr.bf16.mxu0 0
        %2105 = vmatpush1.bf16.msra.mxu0 %v2074
        %2106 = vmatprep.subr.bf16.mxu0 0
        %2107 = vmatpush2.bf16.msra.mxu0 0
        %2108 = vmatprep.subr.bf16.mxu0 0
        %2109 = vmatpush2.bf16.msra.mxu0 0
        %2110 = vmatprep.subr.bf16.mxu0 0
        %2111 = vmatpush2.bf16.msra.mxu0 0
        %2112 = vmatprep.subr.bf16.mxu0 0
        %2113 = vmatpush2.bf16.msra.mxu0 0
        %2114 = vmatprep.subr.bf16.mxu0 0
        %2115 = vmatpush2.bf16.msra.mxu0 0
        %2116 = vmatprep.subr.bf16.mxu0 0
        %2117 = vmatpush2.bf16.msra.mxu0 0
        %2118 = vmatprep.subr.bf16.mxu0 0
        %2119 = vmatpush2.bf16.msra.mxu0 0
        %2120 = vmatprep.subr.bf16.mxu0 0
        %2121 = vmatpush2.bf16.msra.mxu0 0
        %2122 = vmatprep.mubr.bf16.mxu0 0
        %2123 = vmatmul.mubr.bf16.gmra.mxu0 %v2018
        %v2124 = vpop.f32.mrf.mxu0
        %v2125 = vadd.f32 %v2040, %v2124
        %v2126 = vpop.f32.mrf.mxu0
        %v2127 = vpop.f32.mrf.mxu0
        %v2128 = vpop.f32.mrf.mxu0
        %2129 = vdwg.mxu0
        %2131 = vrot.lane.b32.xlu0 %v1912, 96
        %v2132 = vpop.permute.xlu0 %2131
        %v2134 = vmul.f32 %v2125, %v2132
        %v2135 = vadd.f32 %v1914, %v2134
        %2136 = vst.msk [vmem:[%s1005] sm:$0xff] %vm1035, %v2135
        %2137 = vst.msk [vmem:[%s841] sm:$0xff] %vm1035, %v2135
        %s2138 = sand.u32 %s564, 1
        %s2139 = scalar_lea.sflag [#allocation9], %s2138
        %s2140 = sand.u32 %s564, 1
        %s2141 = smul.addr %s2140, 8
        %s2142 = scalar_lea.vmem [#allocation8], %s2141
        // Predicated region
        $region105: #{tpu_custom_call.1} parent=99 // pred_check
          %p2143 = pneg %p574
        $region106: #{tpu_custom_call.1} parent=99 // pred_check_branch
          %2145 = sbr.rel (%p2143) target = $region108
        $region107: #{tpu_custom_call.1} parent=99 // pred_region
          %s2147 = ssub.s32 128, 128
          %2148 = vsyncadd %s2139, %s2147
          %s2149 = smul.addr %s39, 128
          %s2150 = scalar_lea.hbm %s20, %s2149
          %s2152 = sshll.u32 %s2142, 4
          %s2153 = int_to_ptr.vmem [resolvable:$true] %s2152
          %2155 = dma.vmem_to_hbm [thread:$0]  %s2153, 128, %s2150, %s2139
        $region108: #{tpu_custom_call.1} parent=99 // pred_fallthru
          _
      $region100: #{tpu_custom_call.1} parent=5 // pred_fallthru
        _
      %p2156 = scmp.le.s32.totalorder 2, %s29
      // Predicated region
      $region109: #{tpu_custom_call.1} parent=5 // pred_check
        %p2157 = pneg %p2156
      $region110: #{tpu_custom_call.1} parent=5 // pred_check_branch
        %2159 = sbr.rel (%p2157) target = $region112
      $region111: #{tpu_custom_call.1} parent=5 // pred_region
        %s2160 = ssub.s32 %s29, 2
        // Predicated region
        $region113: #{tpu_custom_call.1} parent=111 // pred_check
          %p2161 = pneg %p580
        $region114: #{tpu_custom_call.1} parent=111 // pred_check_branch
          %2163 = sbr.rel (%p2161) target = $region116
        $region115: #{tpu_custom_call.1} parent=111 // pred_region
          %s2164 = sand.u32 %s565, 1
          %s2165 = scalar_lea.sflag [#allocation9], %s2164
          %s2166 = sand.u32 %s565, 1
          %s2167 = smul.addr %s2166, 8
          %s2168 = scalar_lea.vmem [#allocation8], %s2167
          %2169 = dma.done %s2165, 128
        $region116: #{tpu_custom_call.1} parent=111 // pred_fallthru
          _
      $region112: #{tpu_custom_call.1} parent=5 // pred_fallthru
        _
    $region6: #{tpu_custom_call.1} parent=1 // loop_footer
      %s33 = sadd.s32 1, %s29
    $region7: #{tpu_custom_call.1} parent=1 // loop_footer_branch
      %28 = sbr.rel target = $region3
    $region8: #{tpu_custom_call.1} parent=1 // loop_exit
      _
    %2170 = vsyncpa [#allocation9], 1
    %s2171 = scalar_lea.sflag [#allocation9], 1
    %2172 = vsyncpa %s2171, 1

</llo_original>
